<compile_context>
chip_gen: v5e
topology: v5e:2x2
jax: 0.10.0
libtpu: 0.0.40
codegen_flags: <defaults>
</compile_context>

<pallas_src>
import functools

import jax
import jax.numpy as jnp
from jax import lax
from jax.experimental import pallas as pl
from jax.experimental.pallas import tpu as pltpu


def _round_up(x, m):
    return ((x + m - 1) // m) * m


def bottleneck_kernel(xc_ref, xt_ref, xb_ref,
                      w1_ref, b1_ref, w2_ref, b2_ref, w3_ref, b3_ref,
                      out_ref, stack_ref, *, dilation, width, guard, zero_rows):
    d = dilation
    W = width
    G = guard                        # guard rows (== d*W) so all writes/reads stay in-bounds
    Z = zero_rows
    L = xc_ref.shape[1]              # TH * W flat positions in the output tile
    dW = xt_ref.shape[1]             # d * W flat positions in one halo band
    Cp = b1_ref.shape[1]             # padded mid channels (multiple of 128)

    i = pl.program_id(1)
    n_tiles = pl.num_programs(1)

    w1 = w1_ref[...]
    b1 = b1_ref[...]
    b2 = b2_ref[...]
    w3 = w3_ref[...]
    b3 = b3_ref[...]

    def conv1(x_piece):              # (rows, Cin) -> f32 (rows, Cp)
        y = jnp.dot(x_piece, w1, preferred_element_type=jnp.float32) + b1
        return jnp.maximum(y, 0.0)

    # Zero the (only) guard rows that the shifted tap loads can touch.  They are
    # always discarded by the column mask below, but keep them deterministic.
    zg = jnp.zeros((Z, 3 * Cp), stack_ref.dtype)
    stack_ref[pl.ds(G - Z, Z), :] = zg
    stack_ref[pl.ds(G + L, Z), :] = zg

    # ---- conv1 (1x1 + ReLU) written straight into the ky-stacked im2col buffer.
    # Column block ky of stack_ref holds h1 at spatial-row offset (ky-1)*d, so
    # the 3x3 dilated conv reduces to three matmuls with K = 3*Cp.
    xc = xc_ref[0]                                        # (L, Cin), also the residual
    h1c = conv1(xc).astype(stack_ref.dtype)               # (L, Cp)
    stack_ref[pl.ds(G, L), pl.ds(Cp, Cp)] = h1c           # ky = 1  (dy = 0)
    stack_ref[pl.ds(G + dW, L), pl.ds(0, Cp)] = h1c       # ky = 0  (dy = -d)
    stack_ref[pl.ds(G - dW, L), pl.ds(2 * Cp, Cp)] = h1c  # ky = 2  (dy = +d)

    # d halo rows above / below the tile; zero == conv2's zero padding at edges.
    top = jnp.where(i > 0, conv1(xt_ref[0]), 0.0).astype(stack_ref.dtype)
    stack_ref[pl.ds(G, dW), pl.ds(0, Cp)] = top
    bot = jnp.where(i < n_tiles - 1, conv1(xb_ref[0]), 0.0).astype(stack_ref.dtype)
    stack_ref[pl.ds(G + L - dW, dW), pl.ds(2 * Cp, Cp)] = bot

    # ---- conv2 (3x3 dilated + ReLU): 3 fused matmuls, each K = 3*Cp.
    col = lax.broadcasted_iota(jnp.int32, (L, 1), 0) % W  # hoisted column index
    acc = None
    for kx in range(3):
        s = (kx - 1) * d                                  # column shift
        tap = stack_ref[pl.ds(G + s, L), :]               # (L, 3*Cp) sliced from the ref
        if s != 0:
            valid = jnp.logical_and(col + s >= 0, col + s < W)
            tap = jnp.where(valid, tap, jnp.zeros((), tap.dtype))
        part = jnp.dot(tap, w2_ref[kx], preferred_element_type=jnp.float32)
        acc = part if acc is None else acc + part
    h2 = jnp.maximum(acc + b2, 0.0)                       # (L, Cp), f32

    # ---- conv3 (1x1 + ReLU) + residual
    h3 = jnp.dot(h2.astype(w3.dtype), w3, preferred_element_type=jnp.float32) + b3
    h3 = jnp.maximum(h3, 0.0)                             # (L, Cin)
    out_ref[0] = (h3 + xc.astype(jnp.float32)).astype(out_ref.dtype)


def _vmem_plan():
    """(vmem_limit_bytes, working-set budget) derived from the actual chip."""
    try:
        cap = int(pltpu.get_tpu_info().vmem_capacity_bytes)
    except Exception:
        cap = 64 * 1024 * 1024          # conservative: v7x has 64 MiB per TensorCore
    vmem_limit = min(cap // 2, 64 * 1024 * 1024)
    budget = min(vmem_limit // 2, 24 * 1024 * 1024)
    return vmem_limit, budget


def _pick_tile_h(N, H, W, Cin, Cp, d, act_bytes, out_bytes, budget_bytes):
    """Largest row-tile TH (multiple of d, divides H, 8-aligned flat rows) in budget."""
    cands = [t for t in range(d, H + 1, d) if H % t == 0 and (t * W) % 8 == 0]
    if not cands:
        return H

    def need(t):
        L, dW = t * W, d * W
        stack = (L + 2 * dW) * 3 * Cp * act_bytes           # im2col scratch
        io = 2 * (L + 2 * dW) * Cin * act_bytes             # double-buffered input blocks
        io += 2 * L * Cin * out_bytes                       # double-buffered output block
        tmp = L * (3 * Cp + 2 * Cin) * 4                    # f32 intermediates
        return stack + io + tmp

    fitting = [t for t in cands if need(t) <= budget_bytes] or [cands[0]]
    best = max(fitting)
    # keep >= 2 grid steps so both v7x TensorCores get work
    if N * (H // best) < 2:
        halves = [t for t in fitting if H // t >= 2]
        if halves:
            best = max(halves)
    return best


def bottleneck_pallas(x_nchw, params, dilation=1, tile_h=None,
                      compute_dtype=jnp.bfloat16):
    """params = (w1, b1, w2, b2, w3, b3) in PyTorch conv layout (O, I, kh, kw)."""
    w1, b1, w2, b2, w3, b3 = params
    N, Cin, H, W = x_nchw.shape
    Cmid = w1.shape[0]
    d = int(dilation)
    out_dtype = x_nchw.dtype
    cdt = jnp.dtype(compute_dtype)
    act_bytes = cdt.itemsize
    out_bytes = jnp.dtype(out_dtype).itemsize

    if (d * W) % 8 != 0:
        raise ValueError(f"dilation*W = {d * W} must be a multiple of 8")
    if H % d != 0:
        raise ValueError(f"dilation={d} must divide H={H}")

    Cp = _round_up(Cmid, 128)                  # lane-dense mid channels
    vmem_limit, budget = _vmem_plan()

    if tile_h is None:
        tile_h = _pick_tile_h(N, H, W, Cin, Cp, d, act_bytes, out_bytes, budget)
    TH = int(tile_h)
    if H % TH != 0:
        raise ValueError(f"tile_h={TH} must divide H={H}")
    if TH % d != 0:
        raise ValueError(f"tile_h={TH} must be a multiple of dilation={d}")
    n_tiles = H // TH
    thd = TH // d
    hd = H // d
    L = TH * W
    dW = d * W
    G = dW                                     # guard rows: full-length h1 writes stay in-bounds
    Z = min(G, _round_up(d, 8))                # readable guard rows, zeroed each step

    # TODO(synk): accept/return NHWC to avoid these two full-tensor layout transposes.
    x = jnp.transpose(x_nchw, (0, 2, 3, 1)).reshape(N, H * W, Cin).astype(cdt)

    # torch OIHW -> matmul layouts; mid channels zero-padded to Cp, biases f32.
    w1m = jnp.zeros((Cin, Cp), cdt).at[:, :Cmid].set(
        jnp.transpose(w1[:, :, 0, 0], (1, 0)).astype(cdt))
    w3m = jnp.zeros((Cp, Cin), cdt).at[:Cmid, :].set(
        jnp.transpose(w3[:, :, 0, 0], (1, 0)).astype(cdt))
    w2t = jnp.transpose(w2, (2, 3, 1, 0))                            # (ky, kx, cin, cout)
    w2p = jnp.zeros((3, 3, Cp, Cp), w2.dtype).at[:, :, :Cmid, :Cmid].set(w2t)
    w2s = jnp.transpose(w2p, (1, 0, 2, 3)).reshape(3, 3 * Cp, Cp).astype(cdt)
    b1m = jnp.zeros((1, Cp), jnp.float32).at[0, :Cmid].set(b1.astype(jnp.float32))
    b2m = jnp.zeros((1, Cp), jnp.float32).at[0, :Cmid].set(b2.astype(jnp.float32))
    b3m = b3.reshape(1, Cin).astype(jnp.float32)

    kernel = functools.partial(bottleneck_kernel, dilation=d, width=W,
                               guard=G, zero_rows=Z)

    flops = 2 * N * H * W * (Cin * Cmid + 9 * Cmid * Cmid + Cmid * Cin)
    bytes_accessed = (x.size * act_bytes + N * H * W * Cin * out_bytes
                      + (w1m.size + w2s.size + w3m.size) * act_bytes)
    cost = pl.CostEstimate(flops=flops, transcendentals=0,
                           bytes_accessed=bytes_accessed)

    out_flat = pl.pallas_call(
        kernel,
        out_shape=jax.ShapeDtypeStruct((N, H * W, Cin), out_dtype),
        grid=(N, n_tiles),
        in_specs=[
            # center rows of the tile (also the residual)
            pl.BlockSpec((1, L, Cin), lambda n, i: (n, i, 0)),
            # d rows just above the tile (clamped at the top edge, zeroed in-kernel)
            pl.BlockSpec((1, dW, Cin),
                         lambda n, i: (n, jnp.maximum(i * thd - 1, 0), 0)),
            # d rows just below the tile (clamped at the bottom edge, zeroed in-kernel)
            pl.BlockSpec((1, dW, Cin),
                         lambda n, i: (n, jnp.minimum((i + 1) * thd, hd - 1), 0)),
            # weights / biases: constant index maps -> fetched once, resident
            pl.BlockSpec((Cin, Cp), lambda n, i: (0, 0)),
            pl.BlockSpec((1, Cp), lambda n, i: (0, 0)),
            pl.BlockSpec((3, 3 * Cp, Cp), lambda n, i: (0, 0, 0)),
            pl.BlockSpec((1, Cp), lambda n, i: (0, 0)),
            pl.BlockSpec((Cp, Cin), lambda n, i: (0, 0)),
            pl.BlockSpec((1, Cin), lambda n, i: (0, 0)),
        ],
        out_specs=pl.BlockSpec((1, L, Cin), lambda n, i: (n, i, 0)),
        scratch_shapes=[pltpu.VMEM((L + 2 * G, 3 * Cp), cdt)],
        compiler_params=pltpu.CompilerParams(
            dimension_semantics=("parallel", "parallel"),
            vmem_limit_bytes=vmem_limit),
        cost_estimate=cost,
    )(x, x, x, w1m, b1m, w2s, b2m, w3m, b3m)

    out = out_flat.reshape(N, H, W, Cin)
    return jnp.transpose(out, (0, 3, 1, 2))                # NHWC -> NCHW


def bottleneck_ref(x_nchw, params, dilation=1, compute_dtype=jnp.bfloat16):
    """Pure-JAX reference mirroring the PyTorch forward (NCHW), with the same
    bf16-input / f32-accumulation numerics as the kernel."""
    w1, b1, w2, b2, w3, b3 = params
    cdt = jnp.dtype(compute_dtype)

    def conv_relu(h, w, b, pad, dil):
        y = lax.conv_general_dilated(
            h.astype(cdt), w.astype(cdt), window_strides=(1, 1),
            padding=((pad, pad), (pad, pad)), rhs_dilation=(dil, dil),
            dimension_numbers=("NCHW", "OIHW", "NCHW"),
            preferred_element_type=jnp.float32)
        return jnp.maximum(y + b.reshape(1, -1, 1, 1).astype(jnp.float32), 0.0)

    xr = x_nchw.astype(cdt)
    h = conv_relu(xr, w1, b1, 0, 1)
    h = conv_relu(h, w2, b2, dilation, dilation)
    h = conv_relu(h, w3, b3, 0, 1)
    return (h + xr.astype(jnp.float32)).astype(x_nchw.dtype)


def init_params(key, in_channels, mid_channels):
    ks = jax.random.split(key, 6)
    scale = 0.1
    w1 = scale * jax.random.normal(ks[0], (mid_channels, in_channels, 1, 1), jnp.float32)
    b1 = scale * jax.random.normal(ks[1], (mid_channels,), jnp.float32)
    w2 = scale * jax.random.normal(ks[2], (mid_channels, mid_channels, 3, 3), jnp.float32)
    b2 = scale * jax.random.normal(ks[3], (mid_channels,), jnp.float32)
    w3 = scale * jax.random.normal(ks[4], (in_channels, mid_channels, 1, 1), jnp.float32)
    b3 = scale * jax.random.normal(ks[5], (in_channels,), jnp.float32)
    return (w1, b1, w2, b2, w3, b3)


if __name__ == "__main__":
    # Small shapes consistent with the module (in_channels=256/mid=64 scaled down).
    N, Cin, Cmid, H, W = 2, 32, 16, 16, 16

    key = jax.random.PRNGKey(0)
    kx_, kp = jax.random.split(key)
    x = jax.random.normal(kx_, (N, Cin, H, W), jnp.float32)   # NCHW like PyTorch
    params = init_params(kp, Cin, Cmid)

    # tile_h=8 forces multiple row tiles per image so the halo/seam logic is exercised.
    for dilation in (1, 2):
        out = bottleneck_pallas(x, params, dilation=dilation, tile_h=8)
        out = jax.block_until_ready(out)
        ref = bottleneck_ref(x, params, dilation=dilation)
        assert out.shape == x.shape and out.dtype == x.dtype
        err = float(jnp.max(jnp.abs(out - ref)))
        assert jnp.allclose(out, ref, atol=2e-2, rtol=2e-2), err

    # auto tile-size path (VMEM-budget-derived TH, single tile here)
    out = bottleneck_pallas(x, params, dilation=2, tile_h=None)
    out = jax.block_until_ready(out)
    ref = bottleneck_ref(x, params, dilation=2)
    err = float(jnp.max(jnp.abs(out - ref)))
    assert jnp.allclose(out, ref, atol=2e-2, rtol=2e-2), err

    print("KERNEL_OK")
</pallas_src>

<mosaic_0001>
module attributes {stable_mosaic.version = 11 : i64} {
  func.func @bottleneck_kernel(%arg0: i32, %arg1: i32, %arg2: memref<1x128x32xbf16, #tpu.memory_space<vmem>>, %arg3: memref<1x16x32xbf16, #tpu.memory_space<vmem>>, %arg4: memref<1x16x32xbf16, #tpu.memory_space<vmem>>, %arg5: memref<32x128xbf16, #tpu.memory_space<vmem>>, %arg6: memref<1x128xf32, #tpu.memory_space<vmem>>, %arg7: memref<3x384x128xbf16, #tpu.memory_space<vmem>>, %arg8: memref<1x128xf32, #tpu.memory_space<vmem>>, %arg9: memref<128x32xbf16, #tpu.memory_space<vmem>>, %arg10: memref<1x32xf32, #tpu.memory_space<vmem>>, %arg11: memref<1x128x32xf32, #tpu.memory_space<vmem>>, %arg12: memref<160x384xbf16, #tpu.memory_space<vmem>>) attributes {dimension_semantics = [#tpu.dimension_semantics<parallel>, #tpu.dimension_semantics<parallel>], iteration_bounds = array<i64: 2, 2>, scalar_prefetch = 0 : i64, scratch_operands = 1 : i64, tpu.core_type = #tpu.core_type<tc>, window_params = [{transform_indices = @transform_0, window_bounds = array<i64: 1, 128, 32>}, {transform_indices = @transform_1, window_bounds = array<i64: 1, 16, 32>}, {transform_indices = @transform_2, window_bounds = array<i64: 1, 16, 32>}, {pipeline_mode = #tpu.pipeline_mode<synchronous>, transform_indices = @transform_3, window_bounds = array<i64: 32, 128>}, {pipeline_mode = #tpu.pipeline_mode<synchronous>, transform_indices = @transform_4, window_bounds = array<i64: 1, 128>}, {pipeline_mode = #tpu.pipeline_mode<synchronous>, transform_indices = @transform_5, window_bounds = array<i64: 3, 384, 128>}, {pipeline_mode = #tpu.pipeline_mode<synchronous>, transform_indices = @transform_6, window_bounds = array<i64: 1, 128>}, {pipeline_mode = #tpu.pipeline_mode<synchronous>, transform_indices = @transform_7, window_bounds = array<i64: 128, 32>}, {pipeline_mode = #tpu.pipeline_mode<synchronous>, transform_indices = @transform_8, window_bounds = array<i64: 1, 32>}, {transform_indices = @transform_9, window_bounds = array<i64: 1, 128, 32>}]} {
    %c0 = arith.constant 0 : index
    %c0_0 = arith.constant 0 : index
    %0 = vector.load %arg5[%c0, %c0_0] : memref<32x128xbf16, #tpu.memory_space<vmem>>, vector<32x128xbf16>
    %c0_1 = arith.constant 0 : index
    %c0_2 = arith.constant 0 : index
    %1 = vector.load %arg6[%c0_1, %c0_2] : memref<1x128xf32, #tpu.memory_space<vmem>>, vector<1x128xf32>
    %c0_3 = arith.constant 0 : index
    %c0_4 = arith.constant 0 : index
    %2 = vector.load %arg8[%c0_3, %c0_4] : memref<1x128xf32, #tpu.memory_space<vmem>>, vector<1x128xf32>
    %c0_5 = arith.constant 0 : index
    %c0_6 = arith.constant 0 : index
    %3 = vector.load %arg9[%c0_5, %c0_6] : memref<128x32xbf16, #tpu.memory_space<vmem>>, vector<128x32xbf16>
    %c0_7 = arith.constant 0 : index
    %c0_8 = arith.constant 0 : index
    %4 = vector.load %arg10[%c0_7, %c0_8] : memref<1x32xf32, #tpu.memory_space<vmem>>, vector<1x32xf32>
    %cst = arith.constant 0.000000e+00 : bf16
    %5 = vector.broadcast %cst : bf16 to vector<8x384xbf16>
    %c8 = arith.constant 8 : index
    %c0_9 = arith.constant 0 : index
    %6 = vector.load %arg12[%c8, %c0_9] : memref<160x384xbf16, #tpu.memory_space<vmem>>, vector<8x384xbf16>
    tpu.vector_store %arg12[%c8, %c0_9], %5 {strides = array<i32>} : memref<160x384xbf16, #tpu.memory_space<vmem>>, vector<8x384xbf16>,
    %c144 = arith.constant 144 : index
    %c0_10 = arith.constant 0 : index
    %7 = vector.load %arg12[%c144, %c0_10] : memref<160x384xbf16, #tpu.memory_space<vmem>>, vector<8x384xbf16>
    tpu.vector_store %arg12[%c144, %c0_10], %5 {strides = array<i32>} : memref<160x384xbf16, #tpu.memory_space<vmem>>, vector<8x384xbf16>,
    %c0_11 = arith.constant 0 : index
    %c0_12 = arith.constant 0 : index
    %c0_13 = arith.constant 0 : index
    %8 = vector.load %arg2[%c0_11, %c0_12, %c0_13] : memref<1x128x32xbf16, #tpu.memory_space<vmem>>, vector<1x128x32xbf16>
    %9 = vector.shape_cast %8 : vector<1x128x32xbf16> to vector<128x32xbf16>
    %cst_14 = arith.constant dense<0.000000e+00> : vector<128x128xf32>
    %10 = tpu.matmul %9, %0, %cst_14 {dimension_numbers = #tpu.dot_dimension_numbers<[1], [0], [0], [1], [0, 0, 1, 1], [], []>} : vector<128x32xbf16>, vector<32x128xbf16>, vector<128x128xf32> -> vector<128x128xf32>
    %11 = vector.broadcast %1 : vector<1x128xf32> to vector<128x128xf32>
    %12 = arith.addf %10, %11 : vector<128x128xf32>
    %cst_15 = arith.constant 0.000000e+00 : f32
    %13 = vector.broadcast %cst_15 : f32 to vector<128x128xf32>
    %14 = arith.maximumf %12, %13 : vector<128x128xf32>
    %15 = arith.truncf %14 : vector<128x128xf32> to vector<128x128xbf16>
    %c16 = arith.constant 16 : index
    %c128 = arith.constant 128 : index
    %16 = vector.load %arg12[%c16, %c128] : memref<160x384xbf16, #tpu.memory_space<vmem>>, vector<128x128xbf16>
    tpu.vector_store %arg12[%c16, %c128], %15 {strides = array<i32>} : memref<160x384xbf16, #tpu.memory_space<vmem>>, vector<128x128xbf16>,
    %c32 = arith.constant 32 : index
    %c0_16 = arith.constant 0 : index
    %17 = vector.load %arg12[%c32, %c0_16] : memref<160x384xbf16, #tpu.memory_space<vmem>>, vector<128x128xbf16>
    tpu.vector_store %arg12[%c32, %c0_16], %15 {strides = array<i32>} : memref<160x384xbf16, #tpu.memory_space<vmem>>, vector<128x128xbf16>,
    %c0_17 = arith.constant 0 : index
    %c256 = arith.constant 256 : index
    %18 = vector.load %arg12[%c0_17, %c256] : memref<160x384xbf16, #tpu.memory_space<vmem>>, vector<128x128xbf16>
    tpu.vector_store %arg12[%c0_17, %c256], %15 {strides = array<i32>} : memref<160x384xbf16, #tpu.memory_space<vmem>>, vector<128x128xbf16>,
    %c0_i32 = arith.constant 0 : i32
    %19 = arith.cmpi sgt, %arg1, %c0_i32 : i32
    %c0_18 = arith.constant 0 : index
    %c0_19 = arith.constant 0 : index
    %c0_20 = arith.constant 0 : index
    %20 = vector.load %arg3[%c0_18, %c0_19, %c0_20] : memref<1x16x32xbf16, #tpu.memory_space<vmem>>, vector<1x16x32xbf16>
    %21 = vector.shape_cast %20 : vector<1x16x32xbf16> to vector<16x32xbf16>
    %cst_21 = arith.constant dense<0.000000e+00> : vector<16x128xf32>
    %22 = tpu.matmul %21, %0, %cst_21 {dimension_numbers = #tpu.dot_dimension_numbers<[1], [0], [0], [1], [0, 0, 1, 1], [], []>} : vector<16x32xbf16>, vector<32x128xbf16>, vector<16x128xf32> -> vector<16x128xf32>
    %23 = vector.broadcast %1 : vector<1x128xf32> to vector<16x128xf32>
    %24 = arith.addf %22, %23 : vector<16x128xf32>
    %cst_22 = arith.constant 0.000000e+00 : f32
    %25 = vector.broadcast %cst_22 : f32 to vector<16x128xf32>
    %26 = arith.maximumf %24, %25 : vector<16x128xf32>
    %cst_23 = arith.constant 0.000000e+00 : f32
    %27 = vector.broadcast %cst_23 : f32 to vector<16x128xf32>
    %28 = arith.select %19, %26, %27 : vector<16x128xf32>
    %29 = arith.truncf %28 : vector<16x128xf32> to vector<16x128xbf16>
    %c16_24 = arith.constant 16 : index
    %c0_25 = arith.constant 0 : index
    %30 = vector.load %arg12[%c16_24, %c0_25] : memref<160x384xbf16, #tpu.memory_space<vmem>>, vector<16x128xbf16>
    tpu.vector_store %arg12[%c16_24, %c0_25], %29 {strides = array<i32>} : memref<160x384xbf16, #tpu.memory_space<vmem>>, vector<16x128xbf16>,
    %c1_i32 = arith.constant 1 : i32
    %31 = arith.cmpi slt, %arg1, %c1_i32 : i32
    %c0_26 = arith.constant 0 : index
    %c0_27 = arith.constant 0 : index
    %c0_28 = arith.constant 0 : index
    %32 = vector.load %arg4[%c0_26, %c0_27, %c0_28] : memref<1x16x32xbf16, #tpu.memory_space<vmem>>, vector<1x16x32xbf16>
    %33 = vector.shape_cast %32 : vector<1x16x32xbf16> to vector<16x32xbf16>
    %cst_29 = arith.constant dense<0.000000e+00> : vector<16x128xf32>
    %34 = tpu.matmul %33, %0, %cst_29 {dimension_numbers = #tpu.dot_dimension_numbers<[1], [0], [0], [1], [0, 0, 1, 1], [], []>} : vector<16x32xbf16>, vector<32x128xbf16>, vector<16x128xf32> -> vector<16x128xf32>
    %35 = vector.broadcast %1 : vector<1x128xf32> to vector<16x128xf32>
    %36 = arith.addf %34, %35 : vector<16x128xf32>
    %cst_30 = arith.constant 0.000000e+00 : f32
    %37 = vector.broadcast %cst_30 : f32 to vector<16x128xf32>
    %38 = arith.maximumf %36, %37 : vector<16x128xf32>
    %cst_31 = arith.constant 0.000000e+00 : f32
    %39 = vector.broadcast %cst_31 : f32 to vector<16x128xf32>
    %40 = arith.select %31, %38, %39 : vector<16x128xf32>
    %41 = arith.truncf %40 : vector<16x128xf32> to vector<16x128xbf16>
    %c128_32 = arith.constant 128 : index
    %c256_33 = arith.constant 256 : index
    %42 = vector.load %arg12[%c128_32, %c256_33] : memref<160x384xbf16, #tpu.memory_space<vmem>>, vector<16x128xbf16>
    tpu.vector_store %arg12[%c128_32, %c256_33], %41 {strides = array<i32>} : memref<160x384xbf16, #tpu.memory_space<vmem>>, vector<16x128xbf16>,
    %43 = tpu.iota {dimensions = array<i32: 0>} : vector<128x1xi32>
    %c16_i32 = arith.constant 16 : i32
    %c0_i32_34 = arith.constant 0 : i32
    %44 = arith.cmpi eq, %c16_i32, %c0_i32_34 : i32
    %c1_i32_35 = arith.constant 1 : i32
    %45 = arith.select %44, %c1_i32_35, %c16_i32 : i32
    %46 = vector.broadcast %45 : i32 to vector<128x1xi32>
    %47 = arith.remsi %43, %46 : vector<128x1xi32>
    %c0_i32_36 = arith.constant 0 : i32
    %48 = vector.broadcast %c0_i32_36 : i32 to vector<128x1xi32>
    %49 = arith.cmpi ne, %47, %48 : vector<128x1xi32>
    %c0_i32_37 = arith.constant 0 : i32
    %50 = vector.broadcast %c0_i32_37 : i32 to vector<128x1xi32>
    %51 = arith.cmpi slt, %47, %50 : vector<128x1xi32>
    %c0_i32_38 = arith.constant 0 : i32
    %52 = arith.cmpi slt, %45, %c0_i32_38 : i32
    %53 = vector.broadcast %52 : i1 to vector<128x1xi1>
    %54 = vector.broadcast %53 : vector<128x1xi1> to vector<128x1xi1>
    %55 = arith.xori %51, %54 : vector<128x1xi1>
    %56 = arith.andi %55, %49 : vector<128x1xi1>
    %57 = vector.broadcast %45 : i32 to vector<128x1xi32>
    %58 = arith.addi %47, %57 : vector<128x1xi32>
    %59 = arith.select %56, %58, %47 : vector<128x1xi1>, vector<128x1xi32>
    %c15 = arith.constant 15 : index
    %c0_39 = arith.constant 0 : index
    %60 = vector.load %arg12[%c15, %c0_39] : memref<160x384xbf16, #tpu.memory_space<vmem>>, vector<128x384xbf16>
    %c-1_i32 = arith.constant -1 : i32
    %61 = vector.broadcast %c-1_i32 : i32 to vector<128x1xi32>
    %62 = arith.addi %59, %61 : vector<128x1xi32>
    %c0_i32_40 = arith.constant 0 : i32
    %63 = vector.broadcast %c0_i32_40 : i32 to vector<128x1xi32>
    %64 = arith.cmpi sge, %62, %63 : vector<128x1xi32>
    %c-1_i32_41 = arith.constant -1 : i32
    %65 = vector.broadcast %c-1_i32_41 : i32 to vector<128x1xi32>
    %66 = arith.addi %59, %65 : vector<128x1xi32>
    %c16_i32_42 = arith.constant 16 : i32
    %67 = vector.broadcast %c16_i32_42 : i32 to vector<128x1xi32>
    %68 = arith.cmpi slt, %66, %67 : vector<128x1xi32>
    %69 = arith.andi %64, %68 : vector<128x1xi1>
    %cst_43 = arith.constant 0.000000e+00 : bf16
    %70 = vector.shape_cast %69 : vector<128x1xi1> to vector<128x1xi1>
    %71 = vector.broadcast %70 : vector<128x1xi1> to vector<128x384xi1>
    %72 = vector.broadcast %cst_43 : bf16 to vector<128x384xbf16>
    %73 = arith.select %71, %60, %72 : vector<128x384xi1>, vector<128x384xbf16>
    %c0_44 = arith.constant 0 : index
    %c0_45 = arith.constant 0 : index
    %c0_46 = arith.constant 0 : index
    %74 = vector.load %arg7[%c0_44, %c0_45, %c0_46] : memref<3x384x128xbf16, #tpu.memory_space<vmem>>, vector<1x384x128xbf16>
    %75 = vector.shape_cast %74 : vector<1x384x128xbf16> to vector<384x128xbf16>
    %cst_47 = arith.constant dense<0.000000e+00> : vector<128x128xf32>
    %76 = tpu.matmul %73, %75, %cst_47 {dimension_numbers = #tpu.dot_dimension_numbers<[1], [0], [0], [1], [0, 0, 1, 1], [], []>} : vector<128x384xbf16>, vector<384x128xbf16>, vector<128x128xf32> -> vector<128x128xf32>
    %c16_48 = arith.constant 16 : index
    %c0_49 = arith.constant 0 : index
    %77 = vector.load %arg12[%c16_48, %c0_49] : memref<160x384xbf16, #tpu.memory_space<vmem>>, vector<128x384xbf16>
    %c1 = arith.constant 1 : index
    %c0_50 = arith.constant 0 : index
    %c0_51 = arith.constant 0 : index
    %78 = vector.load %arg7[%c1, %c0_50, %c0_51] : memref<3x384x128xbf16, #tpu.memory_space<vmem>>, vector<1x384x128xbf16>
    %79 = vector.shape_cast %78 : vector<1x384x128xbf16> to vector<384x128xbf16>
    %cst_52 = arith.constant dense<0.000000e+00> : vector<128x128xf32>
    %80 = tpu.matmul %77, %79, %cst_52 {dimension_numbers = #tpu.dot_dimension_numbers<[1], [0], [0], [1], [0, 0, 1, 1], [], []>} : vector<128x384xbf16>, vector<384x128xbf16>, vector<128x128xf32> -> vector<128x128xf32>
    %81 = arith.addf %76, %80 : vector<128x128xf32>
    %c17 = arith.constant 17 : index
    %c0_53 = arith.constant 0 : index
    %82 = vector.load %arg12[%c17, %c0_53] : memref<160x384xbf16, #tpu.memory_space<vmem>>, vector<128x384xbf16>
    %c1_i32_54 = arith.constant 1 : i32
    %83 = vector.broadcast %c1_i32_54 : i32 to vector<128x1xi32>
    %84 = arith.addi %59, %83 : vector<128x1xi32>
    %c0_i32_55 = arith.constant 0 : i32
    %85 = vector.broadcast %c0_i32_55 : i32 to vector<128x1xi32>
    %86 = arith.cmpi sge, %84, %85 : vector<128x1xi32>
    %c1_i32_56 = arith.constant 1 : i32
    %87 = vector.broadcast %c1_i32_56 : i32 to vector<128x1xi32>
    %88 = arith.addi %59, %87 : vector<128x1xi32>
    %c16_i32_57 = arith.constant 16 : i32
    %89 = vector.broadcast %c16_i32_57 : i32 to vector<128x1xi32>
    %90 = arith.cmpi slt, %88, %89 : vector<128x1xi32>
    %91 = arith.andi %86, %90 : vector<128x1xi1>
    %cst_58 = arith.constant 0.000000e+00 : bf16
    %92 = vector.shape_cast %91 : vector<128x1xi1> to vector<128x1xi1>
    %93 = vector.broadcast %92 : vector<128x1xi1> to vector<128x384xi1>
    %94 = vector.broadcast %cst_58 : bf16 to vector<128x384xbf16>
    %95 = arith.select %93, %82, %94 : vector<128x384xi1>, vector<128x384xbf16>
    %c2 = arith.constant 2 : index
    %c0_59 = arith.constant 0 : index
    %c0_60 = arith.constant 0 : index
    %96 = vector.load %arg7[%c2, %c0_59, %c0_60] : memref<3x384x128xbf16, #tpu.memory_space<vmem>>, vector<1x384x128xbf16>
    %97 = vector.shape_cast %96 : vector<1x384x128xbf16> to vector<384x128xbf16>
    %cst_61 = arith.constant dense<0.000000e+00> : vector<128x128xf32>
    %98 = tpu.matmul %95, %97, %cst_61 {dimension_numbers = #tpu.dot_dimension_numbers<[1], [0], [0], [1], [0, 0, 1, 1], [], []>} : vector<128x384xbf16>, vector<384x128xbf16>, vector<128x128xf32> -> vector<128x128xf32>
    %99 = arith.addf %81, %98 : vector<128x128xf32>
    %100 = vector.broadcast %2 : vector<1x128xf32> to vector<128x128xf32>
    %101 = arith.addf %99, %100 : vector<128x128xf32>
    %cst_62 = arith.constant 0.000000e+00 : f32
    %102 = vector.broadcast %cst_62 : f32 to vector<128x128xf32>
    %103 = arith.maximumf %101, %102 : vector<128x128xf32>
    %104 = arith.truncf %103 : vector<128x128xf32> to vector<128x128xbf16>
    %cst_63 = arith.constant dense<0.000000e+00> : vector<128x32xf32>
    %105 = tpu.matmul %104, %3, %cst_63 {dimension_numbers = #tpu.dot_dimension_numbers<[1], [0], [0], [1], [0, 0, 1, 1], [], []>} : vector<128x128xbf16>, vector<128x32xbf16>, vector<128x32xf32> -> vector<128x32xf32>
    %106 = vector.broadcast %4 : vector<1x32xf32> to vector<128x32xf32>
    %107 = arith.addf %105, %106 : vector<128x32xf32>
    %cst_64 = arith.constant 0.000000e+00 : f32
    %108 = vector.broadcast %cst_64 : f32 to vector<128x32xf32>
    %109 = arith.maximumf %107, %108 : vector<128x32xf32>
    %110 = arith.extf %9 : vector<128x32xbf16> to vector<128x32xf32>
    %111 = arith.addf %109, %110 : vector<128x32xf32>
    %c0_65 = arith.constant 0 : index
    %c0_66 = arith.constant 0 : index
    %c0_67 = arith.constant 0 : index
    %112 = vector.load %arg11[%c0_65, %c0_66, %c0_67] : memref<1x128x32xf32, #tpu.memory_space<vmem>>, vector<1x128x32xf32>
    %113 = vector.shape_cast %112 : vector<1x128x32xf32> to vector<128x32xf32>
    %114 = vector.shape_cast %111 : vector<128x32xf32> to vector<1x128x32xf32>
    tpu.vector_store %arg11[%c0_65, %c0_66, %c0_67], %114 {strides = array<i32>} : memref<1x128x32xf32, #tpu.memory_space<vmem>>, vector<1x128x32xf32>,
    return
  }
  func.func @transform_0(%arg0: i32, %arg1: i32) -> (i32, i32, i32) {
    %c0_i32 = arith.constant 0 : i32
    %c0_i32_0 = arith.constant 0 : i32
    return %arg0, %arg1, %c0_i32 : i32, i32, i32
  }
  func.func @transform_1(%arg0: i32, %arg1: i32) -> (i32, i32, i32) {
    %c8_i32 = arith.constant 8 : i32
    %0 = arith.muli %arg1, %c8_i32 : i32
    %c1_i32 = arith.constant 1 : i32
    %1 = arith.subi %0, %c1_i32 : i32
    %c0_i32 = arith.constant 0 : i32
    %2 = arith.maxsi %1, %c0_i32 : i32
    %c0_i32_0 = arith.constant 0 : i32
    %c0_i32_1 = arith.constant 0 : i32
    return %arg0, %2, %c0_i32_0 : i32, i32, i32
  }
  func.func @transform_2(%arg0: i32, %arg1: i32) -> (i32, i32, i32) {
    %c1_i32 = arith.constant 1 : i32
    %0 = arith.addi %arg1, %c1_i32 : i32
    %c8_i32 = arith.constant 8 : i32
    %1 = arith.muli %0, %c8_i32 : i32
    %c15_i32 = arith.constant 15 : i32
    %2 = arith.minsi %1, %c15_i32 : i32
    %c0_i32 = arith.constant 0 : i32
    %c0_i32_0 = arith.constant 0 : i32
    return %arg0, %2, %c0_i32 : i32, i32, i32
  }
  func.func @transform_3(%arg0: i32, %arg1: i32) -> (i32, i32) {
    %c0_i32 = arith.constant 0 : i32
    %c0_i32_0 = arith.constant 0 : i32
    %c0_i32_1 = arith.constant 0 : i32
    return %c0_i32, %c0_i32_0 : i32, i32
  }
  func.func @transform_4(%arg0: i32, %arg1: i32) -> (i32, i32) {
    %c0_i32 = arith.constant 0 : i32
    %c0_i32_0 = arith.constant 0 : i32
    %c0_i32_1 = arith.constant 0 : i32
    return %c0_i32, %c0_i32_0 : i32, i32
  }
  func.func @transform_5(%arg0: i32, %arg1: i32) -> (i32, i32, i32) {
    %c0_i32 = arith.constant 0 : i32
    %c0_i32_0 = arith.constant 0 : i32
    %c0_i32_1 = arith.constant 0 : i32
    %c0_i32_2 = arith.constant 0 : i32
    return %c0_i32, %c0_i32_0, %c0_i32_1 : i32, i32, i32
  }
  func.func @transform_6(%arg0: i32, %arg1: i32) -> (i32, i32) {
    %c0_i32 = arith.constant 0 : i32
    %c0_i32_0 = arith.constant 0 : i32
    %c0_i32_1 = arith.constant 0 : i32
    return %c0_i32, %c0_i32_0 : i32, i32
  }
  func.func @transform_7(%arg0: i32, %arg1: i32) -> (i32, i32) {
    %c0_i32 = arith.constant 0 : i32
    %c0_i32_0 = arith.constant 0 : i32
    %c0_i32_1 = arith.constant 0 : i32
    return %c0_i32, %c0_i32_0 : i32, i32
  }
  func.func @transform_8(%arg0: i32, %arg1: i32) -> (i32, i32) {
    %c0_i32 = arith.constant 0 : i32
    %c0_i32_0 = arith.constant 0 : i32
    %c0_i32_1 = arith.constant 0 : i32
    return %c0_i32, %c0_i32_0 : i32, i32
  }
  func.func @transform_9(%arg0: i32, %arg1: i32) -> (i32, i32, i32) {
    %c0_i32 = arith.constant 0 : i32
    %c0_i32_0 = arith.constant 0 : i32
    return %arg0, %arg1, %c0_i32 : i32, i32, i32
  }
}

</mosaic_0001>

<llo_original>
// kernel: tpu_custom_call.1
$region0: #{tpu_custom_call.1}
  #allocation0 [shape = 'u32[]', space=smem, size = 0x4, offset = 0x4, fixed_abs, tag = 'smem constant byte address 0x4 - core index']
  #allocation1 [shape = 'u32[72,128]{1,0:T(1,128)}', space=vmem, size = 0x9000, scoped, tag = 'internal scratch']
  #allocation2 [shape = 'bf16[160,384]{1,0:T(8,128)(2,1)}', space=vmem, size = 0x1e000, scoped, tag = 'scratch operand']
  %s0 = inlined_call_operand.vmem [shape: bf16[2,256,32], index: 0, kind: input, shape index: {}]
  %s1 = inlined_call_operand.vmem [shape: bf16[2,256,32], index: 1, kind: input, shape index: {}]
  %s2 = inlined_call_operand.vmem [shape: bf16[2,256,32], index: 2, kind: input, shape index: {}]
  %s3 = inlined_call_operand.vmem [shape: bf16[32,128], index: 3, kind: input, shape index: {}]
  %s4 = inlined_call_operand.vmem [shape: f32[1,128], index: 4, kind: input, shape index: {}]
  %s5 = inlined_call_operand.vmem [shape: bf16[3,384,128], index: 5, kind: input, shape index: {}]
  %s6 = inlined_call_operand.vmem [shape: f32[1,128], index: 6, kind: input, shape index: {}]
  %s7 = inlined_call_operand.vmem [shape: bf16[128,32], index: 7, kind: input, shape index: {}]
  %s8 = inlined_call_operand.vmem [shape: f32[1,32], index: 8, kind: input, shape index: {}]
  %s9 = inlined_call_operand.vmem [shape: f32[2,256,32], index: 9, kind: output, shape index: {}]
  %s10 = sld [smem:[#allocation0]]
  $region69: #{tpu_custom_call.1} parent=0
    _
  %s12 = ssub.s32 1, %s10
  %s13 = scalar_select 0, %s12, %s10
  loop: start=0, step=1, limit=6
  $region2: #{tpu_custom_call.1} parent=0 // loop_pre_header
    _
  $region3: #{tpu_custom_call.1} parent=0 // loop_header
    %s15 = sphi 0, %s19
    %p16 = scmp.ge.s32.totalorder %s15, 6
    %s22 = sphi 0, %s34
    %s23 = sphi 0, %s30
    %s24 = sphi 0, %s22
    %s25 = sphi 0, %s23
    %s26 = sphi 0, %s24
    %s27 = sphi 0, %s25
    %s39 = sphi 0, %s41
    %s42 = sphi 0, %s39
    %s43 = sphi 0, %s42
    %s59 = sphi 0, %s43
    %s75 = sphi 0, %s77
    %s78 = sphi 0, %s75
    %s79 = sphi 0, %s78
    %s95 = sphi 0, %s79
    %s111 = sphi 0, %s113
    %s114 = sphi 0, %s111
    %s115 = sphi 0, %s114
    %s131 = sphi 0, %s115
    %s135 = sphi 0, %s135
    %s137 = sphi 0, %s135
    %s138 = sphi 0, %s137
    %s152 = sphi 0, %s138
    %s156 = sphi 0, %s156
    %s158 = sphi 0, %s156
    %s159 = sphi 0, %s158
    %s173 = sphi 0, %s159
    %s177 = sphi 0, %s177
    %s179 = sphi 0, %s177
    %s180 = sphi 0, %s179
    %s194 = sphi 0, %s180
    %s198 = sphi 0, %s198
    %s200 = sphi 0, %s198
    %s201 = sphi 0, %s200
    %s215 = sphi 0, %s201
    %s219 = sphi 0, %s219
    %s221 = sphi 0, %s219
    %s222 = sphi 0, %s221
    %s236 = sphi 0, %s222
    %s240 = sphi 0, %s240
    %s242 = sphi 0, %s240
    %s243 = sphi 0, %s242
    %s257 = sphi 0, %s243
    %s265 = sphi 0, %s267
    %s268 = sphi 0, %s265
    %s269 = sphi 0, %s268
    %s285 = sphi 0, %s269
  $region4: #{tpu_custom_call.1} parent=0 // loop_header_branch
    %18 = sbr.rel (%p16) target = $region8
  $region5: #{tpu_custom_call.1} parent=0 // loop_body
    %s20 = ssub.s32 %s15, 1
    %s21 = ssub.s32 %s15, 2
    %s28 = sadd.s32 1, %s23
    %p29 = scmp.ge.s32.totalorder %s28, 2
    %s30 = scalar_select %p29, 0, %s28
    %s31 = sadd.s32 1, %s22
    %s32 = scalar_select %p29, %s31, %s22
    %p33 = scmp.ge.s32.totalorder %s32, 2
    %s34 = scalar_select %p33, 0, %s32
    %s35 = ssub.s32 %s22, %s34
    %s36 = ssub.s32 %s23, %s30
    %s37 = sor.u32 %s35, %s36
    %p38 = scmp.eq.s32.totalorder %s37, 0
    %s40 = sadd.s32 %s39, 1
    %s41 = scalar_select %p38, %s39, %s40
    %p44 = pneg %p38
    %p45 = scmp.eq.s32.totalorder %s15, 3
    %p46 = por %p44, %p45
    %p47 = scmp.ne.s32.totalorder %s39, %s42
    %p48 = scmp.eq.s32.totalorder %s15, 0
    %p49 = por %p47, %p48
    %p50 = scmp.ne.s32.totalorder %s39, %s42
    %p51 = scmp.eq.s32.totalorder %s20, 3
    %p52 = por %p50, %p51
    %p53 = scmp.ne.s32.totalorder %s42, %s43
    %p54 = scmp.eq.s32.totalorder %s20, 0
    %p55 = por %p53, %p54
    %p56 = scmp.ne.s32.totalorder %s42, %s43
    %p57 = scmp.eq.s32.totalorder %s21, 3
    %p58 = por %p56, %p57
    %p60 = scmp.ne.s32.totalorder %s43, %s59
    %p61 = scmp.eq.s32.totalorder %s21, 0
    %p62 = por %p60, %p61
    %s63 = smul.u32 %s23, 8
    %s64 = ssub.s32 %s63, 1
    %p65 = scmp.gt.s32.totalorder %s64, 0
    %s66 = scalar_select %p65, %s64, 0
    %s67 = smul.u32 %s30, 8
    %s68 = ssub.s32 %s67, 1
    %p69 = scmp.gt.s32.totalorder %s68, 0
    %s70 = scalar_select %p69, %s68, 0
    %s71 = ssub.s32 %s22, %s34
    %s72 = ssub.s32 %s66, %s70
    %s73 = sor.u32 %s71, %s72
    %p74 = scmp.eq.s32.totalorder %s73, 0
    %s76 = sadd.s32 %s75, 1
    %s77 = scalar_select %p74, %s75, %s76
    %p80 = pneg %p74
    %p81 = scmp.eq.s32.totalorder %s15, 3
    %p82 = por %p80, %p81
    %p83 = scmp.ne.s32.totalorder %s75, %s78
    %p84 = scmp.eq.s32.totalorder %s15, 0
    %p85 = por %p83, %p84
    %p86 = scmp.ne.s32.totalorder %s75, %s78
    %p87 = scmp.eq.s32.totalorder %s20, 3
    %p88 = por %p86, %p87
    %p89 = scmp.ne.s32.totalorder %s78, %s79
    %p90 = scmp.eq.s32.totalorder %s20, 0
    %p91 = por %p89, %p90
    %p92 = scmp.ne.s32.totalorder %s78, %s79
    %p93 = scmp.eq.s32.totalorder %s21, 3
    %p94 = por %p92, %p93
    %p96 = scmp.ne.s32.totalorder %s79, %s95
    %p97 = scmp.eq.s32.totalorder %s21, 0
    %p98 = por %p96, %p97
    %s99 = sadd.s32 %s23, 1
    %s100 = smul.u32 %s99, 8
    %p101 = scmp.lt.s32.totalorder %s100, 15
    %s102 = scalar_select %p101, %s100, 15
    %s103 = sadd.s32 %s30, 1
    %s104 = smul.u32 %s103, 8
    %p105 = scmp.lt.s32.totalorder %s104, 15
    %s106 = scalar_select %p105, %s104, 15
    %s107 = ssub.s32 %s22, %s34
    %s108 = ssub.s32 %s102, %s106
    %s109 = sor.u32 %s107, %s108
    %p110 = scmp.eq.s32.totalorder %s109, 0
    %s112 = sadd.s32 %s111, 1
    %s113 = scalar_select %p110, %s111, %s112
    %p116 = pneg %p110
    %p117 = scmp.eq.s32.totalorder %s15, 3
    %p118 = por %p116, %p117
    %p119 = scmp.ne.s32.totalorder %s111, %s114
    %p120 = scmp.eq.s32.totalorder %s15, 0
    %p121 = por %p119, %p120
    %p122 = scmp.ne.s32.totalorder %s111, %s114
    %p123 = scmp.eq.s32.totalorder %s20, 3
    %p124 = por %p122, %p123
    %p125 = scmp.ne.s32.totalorder %s114, %s115
    %p126 = scmp.eq.s32.totalorder %s20, 0
    %p127 = por %p125, %p126
    %p128 = scmp.ne.s32.totalorder %s114, %s115
    %p129 = scmp.eq.s32.totalorder %s21, 3
    %p130 = por %p128, %p129
    %p132 = scmp.ne.s32.totalorder %s115, %s131
    %p133 = scmp.eq.s32.totalorder %s21, 0
    %p134 = por %p132, %p133
    %s136 = sadd.s32 %s135, 1
    %p139 = scmp.eq.s32.totalorder %s15, 3
    %p140 = scmp.ne.s32.totalorder %s135, %s137
    %p141 = scmp.eq.s32.totalorder %s15, 0
    %p142 = por %p140, %p141
    %p143 = scmp.ne.s32.totalorder %s135, %s137
    %p144 = scmp.eq.s32.totalorder %s20, 3
    %p145 = por %p143, %p144
    %p146 = scmp.ne.s32.totalorder %s137, %s138
    %p147 = scmp.eq.s32.totalorder %s20, 0
    %p148 = por %p146, %p147
    %p149 = scmp.ne.s32.totalorder %s137, %s138
    %p150 = scmp.eq.s32.totalorder %s21, 3
    %p151 = por %p149, %p150
    %p153 = scmp.ne.s32.totalorder %s138, %s152
    %p154 = scmp.eq.s32.totalorder %s21, 0
    %p155 = por %p153, %p154
    %s157 = sadd.s32 %s156, 1
    %p160 = scmp.eq.s32.totalorder %s15, 3
    %p161 = scmp.ne.s32.totalorder %s156, %s158
    %p162 = scmp.eq.s32.totalorder %s15, 0
    %p163 = por %p161, %p162
    %p164 = scmp.ne.s32.totalorder %s156, %s158
    %p165 = scmp.eq.s32.totalorder %s20, 3
    %p166 = por %p164, %p165
    %p167 = scmp.ne.s32.totalorder %s158, %s159
    %p168 = scmp.eq.s32.totalorder %s20, 0
    %p169 = por %p167, %p168
    %p170 = scmp.ne.s32.totalorder %s158, %s159
    %p171 = scmp.eq.s32.totalorder %s21, 3
    %p172 = por %p170, %p171
    %p174 = scmp.ne.s32.totalorder %s159, %s173
    %p175 = scmp.eq.s32.totalorder %s21, 0
    %p176 = por %p174, %p175
    %s178 = sadd.s32 %s177, 1
    %p181 = scmp.eq.s32.totalorder %s15, 3
    %p182 = scmp.ne.s32.totalorder %s177, %s179
    %p183 = scmp.eq.s32.totalorder %s15, 0
    %p184 = por %p182, %p183
    %p185 = scmp.ne.s32.totalorder %s177, %s179
    %p186 = scmp.eq.s32.totalorder %s20, 3
    %p187 = por %p185, %p186
    %p188 = scmp.ne.s32.totalorder %s179, %s180
    %p189 = scmp.eq.s32.totalorder %s20, 0
    %p190 = por %p188, %p189
    %p191 = scmp.ne.s32.totalorder %s179, %s180
    %p192 = scmp.eq.s32.totalorder %s21, 3
    %p193 = por %p191, %p192
    %p195 = scmp.ne.s32.totalorder %s180, %s194
    %p196 = scmp.eq.s32.totalorder %s21, 0
    %p197 = por %p195, %p196
    %s199 = sadd.s32 %s198, 1
    %p202 = scmp.eq.s32.totalorder %s15, 3
    %p203 = scmp.ne.s32.totalorder %s198, %s200
    %p204 = scmp.eq.s32.totalorder %s15, 0
    %p205 = por %p203, %p204
    %p206 = scmp.ne.s32.totalorder %s198, %s200
    %p207 = scmp.eq.s32.totalorder %s20, 3
    %p208 = por %p206, %p207
    %p209 = scmp.ne.s32.totalorder %s200, %s201
    %p210 = scmp.eq.s32.totalorder %s20, 0
    %p211 = por %p209, %p210
    %p212 = scmp.ne.s32.totalorder %s200, %s201
    %p213 = scmp.eq.s32.totalorder %s21, 3
    %p214 = por %p212, %p213
    %p216 = scmp.ne.s32.totalorder %s201, %s215
    %p217 = scmp.eq.s32.totalorder %s21, 0
    %p218 = por %p216, %p217
    %s220 = sadd.s32 %s219, 1
    %p223 = scmp.eq.s32.totalorder %s15, 3
    %p224 = scmp.ne.s32.totalorder %s219, %s221
    %p225 = scmp.eq.s32.totalorder %s15, 0
    %p226 = por %p224, %p225
    %p227 = scmp.ne.s32.totalorder %s219, %s221
    %p228 = scmp.eq.s32.totalorder %s20, 3
    %p229 = por %p227, %p228
    %p230 = scmp.ne.s32.totalorder %s221, %s222
    %p231 = scmp.eq.s32.totalorder %s20, 0
    %p232 = por %p230, %p231
    %p233 = scmp.ne.s32.totalorder %s221, %s222
    %p234 = scmp.eq.s32.totalorder %s21, 3
    %p235 = por %p233, %p234
    %p237 = scmp.ne.s32.totalorder %s222, %s236
    %p238 = scmp.eq.s32.totalorder %s21, 0
    %p239 = por %p237, %p238
    %s241 = sadd.s32 %s240, 1
    %p244 = scmp.eq.s32.totalorder %s15, 3
    %p245 = scmp.ne.s32.totalorder %s240, %s242
    %p246 = scmp.eq.s32.totalorder %s15, 0
    %p247 = por %p245, %p246
    %p248 = scmp.ne.s32.totalorder %s240, %s242
    %p249 = scmp.eq.s32.totalorder %s20, 3
    %p250 = por %p248, %p249
    %p251 = scmp.ne.s32.totalorder %s242, %s243
    %p252 = scmp.eq.s32.totalorder %s20, 0
    %p253 = por %p251, %p252
    %p254 = scmp.ne.s32.totalorder %s242, %s243
    %p255 = scmp.eq.s32.totalorder %s21, 3
    %p256 = por %p254, %p255
    %p258 = scmp.ne.s32.totalorder %s243, %s257
    %p259 = scmp.eq.s32.totalorder %s21, 0
    %p260 = por %p258, %p259
    %s261 = ssub.s32 %s22, %s34
    %s262 = ssub.s32 %s23, %s30
    %s263 = sor.u32 %s261, %s262
    %p264 = scmp.eq.s32.totalorder %s263, 0
    %s266 = sadd.s32 %s265, 1
    %s267 = scalar_select %p264, %s265, %s266
    %p270 = pneg %p264
    %p271 = scmp.eq.s32.totalorder %s15, 3
    %p272 = por %p270, %p271
    %p273 = scmp.ne.s32.totalorder %s265, %s268
    %p274 = scmp.eq.s32.totalorder %s15, 0
    %p275 = por %p273, %p274
    %p276 = scmp.ne.s32.totalorder %s265, %s268
    %p277 = scmp.eq.s32.totalorder %s20, 3
    %p278 = por %p276, %p277
    %p279 = scmp.ne.s32.totalorder %s268, %s269
    %p280 = scmp.eq.s32.totalorder %s20, 0
    %p281 = por %p279, %p280
    %p282 = scmp.ne.s32.totalorder %s268, %s269
    %p283 = scmp.eq.s32.totalorder %s21, 3
    %p284 = por %p282, %p283
    %p286 = scmp.ne.s32.totalorder %s269, %s285
    %p287 = scmp.eq.s32.totalorder %s21, 0
    %p288 = por %p286, %p287
    %p289 = scmp.le.s32.totalorder 1, %s15
    %p290 = scmp.lt.s32.totalorder %s15, 5
    %p291 = pnand %p289, %p290
    %p292 = pneg %p291
    // Predicated region
    $region9: #{tpu_custom_call.1} parent=5 // pred_check
      _
    $region10: #{tpu_custom_call.1} parent=5 // pred_check_branch
      %294 = sbr.rel (%p291) target = $region12
    $region11: #{tpu_custom_call.1} parent=5 // pred_region
      %s295 = ssub.s32 %s15, 1
      // Predicated region
      $region13: #{tpu_custom_call.1} parent=11 // pred_check
        %p296 = pneg %p148
      $region14: #{tpu_custom_call.1} parent=11 // pred_check_branch
        %298 = sbr.rel (%p296) target = $region16
      $region15: #{tpu_custom_call.1} parent=11 // pred_region
        _
      $region16: #{tpu_custom_call.1} parent=11 // pred_fallthru
        _
      // Predicated region
      $region17: #{tpu_custom_call.1} parent=11 // pred_check
        %p299 = pneg %p169
      $region18: #{tpu_custom_call.1} parent=11 // pred_check_branch
        %301 = sbr.rel (%p299) target = $region20
      $region19: #{tpu_custom_call.1} parent=11 // pred_region
        _
      $region20: #{tpu_custom_call.1} parent=11 // pred_fallthru
        _
      // Predicated region
      $region21: #{tpu_custom_call.1} parent=11 // pred_check
        %p302 = pneg %p190
      $region22: #{tpu_custom_call.1} parent=11 // pred_check_branch
        %304 = sbr.rel (%p302) target = $region24
      $region23: #{tpu_custom_call.1} parent=11 // pred_region
        _
      $region24: #{tpu_custom_call.1} parent=11 // pred_fallthru
        _
      // Predicated region
      $region25: #{tpu_custom_call.1} parent=11 // pred_check
        %p305 = pneg %p211
      $region26: #{tpu_custom_call.1} parent=11 // pred_check_branch
        %307 = sbr.rel (%p305) target = $region28
      $region27: #{tpu_custom_call.1} parent=11 // pred_region
        _
      $region28: #{tpu_custom_call.1} parent=11 // pred_fallthru
        _
      // Predicated region
      $region29: #{tpu_custom_call.1} parent=11 // pred_check
        %p308 = pneg %p232
      $region30: #{tpu_custom_call.1} parent=11 // pred_check_branch
        %310 = sbr.rel (%p308) target = $region32
      $region31: #{tpu_custom_call.1} parent=11 // pred_region
        _
      $region32: #{tpu_custom_call.1} parent=11 // pred_fallthru
        _
      // Predicated region
      $region33: #{tpu_custom_call.1} parent=11 // pred_check
        %p311 = pneg %p253
      $region34: #{tpu_custom_call.1} parent=11 // pred_check_branch
        %313 = sbr.rel (%p311) target = $region36
      $region35: #{tpu_custom_call.1} parent=11 // pred_region
        _
      $region36: #{tpu_custom_call.1} parent=11 // pred_fallthru
        _
    $region12: #{tpu_custom_call.1} parent=5 // pred_fallthru
      _
    %p314 = scmp.lt.s32.totalorder %s15, 4
    // Predicated region
    $region37: #{tpu_custom_call.1} parent=5 // pred_check
      %p315 = pneg %p314
    $region38: #{tpu_custom_call.1} parent=5 // pred_check_branch
      %317 = sbr.rel (%p315) target = $region40
    $region39: #{tpu_custom_call.1} parent=5 // pred_region
      // Predicated region
      $region41: #{tpu_custom_call.1} parent=39 // pred_check
        %p318 = pneg %p49
      $region42: #{tpu_custom_call.1} parent=39 // pred_check_branch
        %320 = sbr.rel (%p318) target = $region44
      $region43: #{tpu_custom_call.1} parent=39 // pred_region
        %s321 = smul.u32 16, %s23
        %p322 = scmp.lt.s32.totalorder %s22, 1
        %s323 = scalar_select %p322, %s22, 1
        %p324 = scmp.lt.s32.totalorder %s321, 31
        %s325 = scalar_select %p324, %s321, 31
        %s326 = smul.addr %s323, 32
        %s327 = sadd.s32 %s325, %s326
        %s328 = smul.addr %s327, 4
        %s329 = scalar_lea.vmem %s0, %s328
        %s330 = smul.u32 16, %s23
      $region44: #{tpu_custom_call.1} parent=39 // pred_fallthru
        _
      // Predicated region
      $region45: #{tpu_custom_call.1} parent=39 // pred_check
        %p331 = pneg %p85
      $region46: #{tpu_custom_call.1} parent=39 // pred_check_branch
        %333 = sbr.rel (%p331) target = $region48
      $region47: #{tpu_custom_call.1} parent=39 // pred_region
        %s334 = smul.u32 %s23, 8
        %s335 = ssub.s32 %s334, 1
        %p336 = scmp.gt.s32.totalorder %s335, 0
        %s337 = scalar_select %p336, %s335, 0
        %s338 = smul.u32 2, %s337
        %p339 = scmp.lt.s32.totalorder %s22, 1
        %s340 = scalar_select %p339, %s22, 1
        %p341 = scmp.lt.s32.totalorder %s338, 31
        %s342 = scalar_select %p341, %s338, 31
        %s343 = smul.addr %s340, 32
        %s344 = sadd.s32 %s342, %s343
        %s345 = smul.addr %s344, 4
        %s346 = scalar_lea.vmem %s1, %s345
        %s347 = smul.u32 %s23, 8
        %s348 = ssub.s32 %s347, 1
        %p349 = scmp.gt.s32.totalorder %s348, 0
        %s350 = scalar_select %p349, %s348, 0
        %s351 = smul.u32 2, %s350
      $region48: #{tpu_custom_call.1} parent=39 // pred_fallthru
        _
      // Predicated region
      $region49: #{tpu_custom_call.1} parent=39 // pred_check
        %p352 = pneg %p121
      $region50: #{tpu_custom_call.1} parent=39 // pred_check_branch
        %354 = sbr.rel (%p352) target = $region52
      $region51: #{tpu_custom_call.1} parent=39 // pred_region
        %s355 = sadd.s32 %s23, 1
        %s356 = smul.u32 %s355, 8
        %p357 = scmp.lt.s32.totalorder %s356, 15
        %s358 = scalar_select %p357, %s356, 15
        %s359 = smul.u32 2, %s358
        %p360 = scmp.lt.s32.totalorder %s22, 1
        %s361 = scalar_select %p360, %s22, 1
        %p362 = scmp.lt.s32.totalorder %s359, 31
        %s363 = scalar_select %p362, %s359, 31
        %s364 = smul.addr %s361, 32
        %s365 = sadd.s32 %s363, %s364
        %s366 = smul.addr %s365, 4
        %s367 = scalar_lea.vmem %s2, %s366
        %s368 = sadd.s32 %s23, 1
        %s369 = smul.u32 %s368, 8
        %p370 = scmp.lt.s32.totalorder %s369, 15
        %s371 = scalar_select %p370, %s369, 15
        %s372 = smul.u32 2, %s371
      $region52: #{tpu_custom_call.1} parent=39 // pred_fallthru
        _
    $region40: #{tpu_custom_call.1} parent=5 // pred_fallthru
      _
    %p373 = scmp.le.s32.totalorder 1, %s15
    %p374 = scmp.lt.s32.totalorder %s15, 5
    %p375 = pnand %p373, %p374
    %p376 = pneg %p375
    // Predicated region
    $region53: #{tpu_custom_call.1} parent=5 // pred_check
      _
    $region54: #{tpu_custom_call.1} parent=5 // pred_check_branch
      %378 = sbr.rel (%p375) target = $region56
    $region55: #{tpu_custom_call.1} parent=5 // pred_region
      %s379 = ssub.s32 %s15, 1
      %s380 = smul.u32 16, %s25
      %p381 = scmp.lt.s32.totalorder %s24, 1
      %s382 = scalar_select %p381, %s24, 1
      %p383 = scmp.lt.s32.totalorder %s380, 31
      %s384 = scalar_select %p383, %s380, 31
      %s385 = smul.addr %s382, 32
      %s386 = sadd.s32 %s384, %s385
      %s387 = smul.addr %s386, 4
      %s388 = scalar_lea.vmem %s0, %s387
      %p389 = pneg %p55
      %p390 = pneg %p52
      %s391 = smul.u32 %s25, 8
      %s392 = ssub.s32 %s391, 1
      %p393 = scmp.gt.s32.totalorder %s392, 0
      %s394 = scalar_select %p393, %s392, 0
      %s395 = smul.u32 2, %s394
      %p396 = scmp.lt.s32.totalorder %s24, 1
      %s397 = scalar_select %p396, %s24, 1
      %p398 = scmp.lt.s32.totalorder %s395, 31
      %s399 = scalar_select %p398, %s395, 31
      %s400 = smul.addr %s397, 32
      %s401 = sadd.s32 %s399, %s400
      %s402 = smul.addr %s401, 4
      %s403 = scalar_lea.vmem %s1, %s402
      %p404 = pneg %p91
      %p405 = pneg %p88
      %s406 = sadd.s32 %s25, 1
      %s407 = smul.u32 %s406, 8
      %p408 = scmp.lt.s32.totalorder %s407, 15
      %s409 = scalar_select %p408, %s407, 15
      %s410 = smul.u32 2, %s409
      %p411 = scmp.lt.s32.totalorder %s24, 1
      %s412 = scalar_select %p411, %s24, 1
      %p413 = scmp.lt.s32.totalorder %s410, 31
      %s414 = scalar_select %p413, %s410, 31
      %s415 = smul.addr %s412, 32
      %s416 = sadd.s32 %s414, %s415
      %s417 = smul.addr %s416, 4
      %s418 = scalar_lea.vmem %s2, %s417
      %p419 = pneg %p127
      %p420 = pneg %p124
      %p421 = pneg %p148
      %p422 = pneg %p145
      %p423 = pneg %p169
      %p424 = pneg %p166
      %p425 = pneg %p190
      %p426 = pneg %p187
      %p427 = pneg %p211
      %p428 = pneg %p208
      %p429 = pneg %p232
      %p430 = pneg %p229
      %p431 = pneg %p253
      %p432 = pneg %p250
      %p433 = pneg %p281
      %p434 = pneg %p278
      %s435 = smul.u32 16, %s25
      %p436 = scmp.lt.s32.totalorder %s24, 1
      %s437 = scalar_select %p436, %s24, 1
      %p438 = scmp.lt.s32.totalorder %s435, 31
      %s439 = scalar_select %p438, %s435, 31
      %s440 = smul.addr %s437, 32
      %s441 = sadd.s32 %s439, %s440
      %s442 = smul.addr %s441, 8
      %s443 = scalar_lea.vmem %s9, %s442
      %s444 = smul.u32 16, %s25
      %p445 = scmp.lt.s32.totalorder %s24, 1
      %s446 = scalar_select %p445, %s24, 1
      %p447 = scmp.lt.s32.totalorder %s444, 31
      %s448 = scalar_select %p447, %s444, 31
      %s449 = smul.addr %s446, 32
      %s450 = sadd.s32 %s448, %s449
      %s451 = smul.addr %s450, 4
      %s452 = scalar_lea.vmem %s0, %s451
      %s453 = smul.u32 16, %s25
      %s454 = smul.u32 %s25, 8
      %s455 = ssub.s32 %s454, 1
      %p456 = scmp.gt.s32.totalorder %s455, 0
      %s457 = scalar_select %p456, %s455, 0
      %s458 = smul.u32 2, %s457
      %p459 = scmp.lt.s32.totalorder %s24, 1
      %s460 = scalar_select %p459, %s24, 1
      %p461 = scmp.lt.s32.totalorder %s458, 31
      %s462 = scalar_select %p461, %s458, 31
      %s463 = smul.addr %s460, 32
      %s464 = sadd.s32 %s462, %s463
      %s465 = smul.addr %s464, 4
      %s466 = scalar_lea.vmem %s1, %s465
      %s467 = smul.u32 %s25, 8
      %s468 = ssub.s32 %s467, 1
      %p469 = scmp.gt.s32.totalorder %s468, 0
      %s470 = scalar_select %p469, %s468, 0
      %s471 = smul.u32 2, %s470
      %s472 = sadd.s32 %s25, 1
      %s473 = smul.u32 %s472, 8
      %p474 = scmp.lt.s32.totalorder %s473, 15
      %s475 = scalar_select %p474, %s473, 15
      %s476 = smul.u32 2, %s475
      %p477 = scmp.lt.s32.totalorder %s24, 1
      %s478 = scalar_select %p477, %s24, 1
      %p479 = scmp.lt.s32.totalorder %s476, 31
      %s480 = scalar_select %p479, %s476, 31
      %s481 = smul.addr %s478, 32
      %s482 = sadd.s32 %s480, %s481
      %s483 = smul.addr %s482, 4
      %s484 = scalar_lea.vmem %s2, %s483
      %s485 = sadd.s32 %s25, 1
      %s486 = smul.u32 %s485, 8
      %p487 = scmp.lt.s32.totalorder %s486, 15
      %s488 = scalar_select %p487, %s486, 15
      %s489 = smul.u32 2, %s488
      %s490 = smul.u32 16, %s25
      %p491 = scmp.lt.s32.totalorder %s24, 1
      %s492 = scalar_select %p491, %s24, 1
      %p493 = scmp.lt.s32.totalorder %s490, 31
      %s494 = scalar_select %p493, %s490, 31
      %s495 = smul.addr %s492, 32
      %s496 = sadd.s32 %s494, %s495
      %s497 = smul.addr %s496, 8
      %s498 = scalar_lea.vmem %s9, %s497
      %s499 = smul.u32 16, %s25
      %v503 = vld [vmem:[%s3] sm:$0xf]
      %v504 = vld [vmem:[%s3 + $0x4] sm:$0xf]
      %v505 = vld [vmem:[%s3 + $0x8] sm:$0xf]
      %v506 = vld [vmem:[%s3 + $0xc] sm:$0xf]
      %v507 = vld [vmem:[%s4] sm:$0x1]
      %v508 = vld [vmem:[%s6] sm:$0x1]
      %v509 = vld [vmem:[%s7] sm:$0xf]
      %v510 = vld [vmem:[%s7 + $0x4] sm:$0xf]
      %v511 = vld [vmem:[%s7 + $0x8] sm:$0xf]
      %v512 = vld [vmem:[%s7 + $0xc] sm:$0xf]
      %v513 = vld [vmem:[%s7 + $0x10] sm:$0xf]
      %v514 = vld [vmem:[%s7 + $0x14] sm:$0xf]
      %v515 = vld [vmem:[%s7 + $0x18] sm:$0xf]
      %v516 = vld [vmem:[%s7 + $0x1c] sm:$0xf]
      %v517 = vld [vmem:[%s7 + $0x20] sm:$0xf]
      %v518 = vld [vmem:[%s7 + $0x24] sm:$0xf]
      %v519 = vld [vmem:[%s7 + $0x28] sm:$0xf]
      %v520 = vld [vmem:[%s7 + $0x2c] sm:$0xf]
      %v521 = vld [vmem:[%s7 + $0x30] sm:$0xf]
      %v522 = vld [vmem:[%s7 + $0x34] sm:$0xf]
      %v523 = vld [vmem:[%s7 + $0x38] sm:$0xf]
      %v524 = vld [vmem:[%s7 + $0x3c] sm:$0xf]
      %v525 = vld [vmem:[%s8] sm:$0x1]
      %526 = vst [vmem:[#allocation2 + $0xc] sm:$0xff] 0
      %527 = vst [vmem:[#allocation2 + $0x14] sm:$0xf] 0
      %528 = vst [vmem:[#allocation2 + $0xd8] sm:$0xff] 0
      %529 = vst [vmem:[#allocation2 + $0xe0] sm:$0xf] 0
      %v530 = vld [vmem:[%s452] sm:$0xf]
      %v531 = vld [vmem:[%s452 + $0x4] sm:$0xf]
      %v532 = vld [vmem:[%s452 + $0x8] sm:$0xf]
      %v533 = vld [vmem:[%s452 + $0xc] sm:$0xf]
      %v534 = vld [vmem:[%s452 + $0x10] sm:$0xf]
      %v535 = vld [vmem:[%s452 + $0x14] sm:$0xf]
      %v536 = vld [vmem:[%s452 + $0x18] sm:$0xf]
      %v537 = vld [vmem:[%s452 + $0x1c] sm:$0xf]
      %v538 = vld [vmem:[%s452 + $0x20] sm:$0xf]
      %v539 = vld [vmem:[%s452 + $0x24] sm:$0xf]
      %v540 = vld [vmem:[%s452 + $0x28] sm:$0xf]
      %v541 = vld [vmem:[%s452 + $0x2c] sm:$0xf]
      %v542 = vld [vmem:[%s452 + $0x30] sm:$0xf]
      %v543 = vld [vmem:[%s452 + $0x34] sm:$0xf]
      %v544 = vld [vmem:[%s452 + $0x38] sm:$0xf]
      %v545 = vld [vmem:[%s452 + $0x3c] sm:$0xf]
      %v547 = vperm.slane %v507, 0
      %v565 = vunpack.c.l.b16 %v530
      %v566 = vunpack.c.l.b16 %v531
      %v567 = vunpack.c.l.b16 %v532
      %v568 = vunpack.c.l.b16 %v533
      %v569 = vunpack.c.l.b16 %v534
      %v570 = vunpack.c.l.b16 %v535
      %v571 = vunpack.c.l.b16 %v536
      %v572 = vunpack.c.l.b16 %v537
      %v573 = vunpack.c.l.b16 %v538
      %v574 = vunpack.c.l.b16 %v539
      %v575 = vunpack.c.l.b16 %v540
      %v576 = vunpack.c.l.b16 %v541
      %v577 = vunpack.c.l.b16 %v542
      %v578 = vunpack.c.l.b16 %v543
      %v579 = vunpack.c.l.b16 %v544
      %v580 = vunpack.c.l.b16 %v545
      %v581 = vpack.c.b16 %v566, %v565
      %v582 = vpack.c.b16 %v568, %v567
      %v583 = vpack.c.b16 %v570, %v569
      %v584 = vpack.c.b16 %v572, %v571
      %v585 = vpack.c.b16 %v574, %v573
      %v586 = vpack.c.b16 %v576, %v575
      %v587 = vpack.c.b16 %v578, %v577
      %v588 = vpack.c.b16 %v580, %v579
      %v593 = vunpack.c.l.b16 %v503
      %v594 = vunpack.c.l.b16 %v504
      %v595 = vunpack.c.l.b16 %v505
      %v596 = vunpack.c.l.b16 %v506
      %v597 = vpack.c.b16 %v594, %v593
      %v598 = vpack.c.b16 %v596, %v595
      %vm601 = vcmask 261120
      %v603 = vsel %vm601, %v581, 0
      %v606 = vsel %vm601, %v582, 0
      %v609 = vsel %vm601, %v583, 0
      %v612 = vsel %vm601, %v584, 0
      %v615 = vsel %vm601, %v585, 0
      %v618 = vsel %vm601, %v586, 0
      %v621 = vsel %vm601, %v587, 0
      %v624 = vsel %vm601, %v588, 0
      %626 = vmatpush.bf16.msra.mxu0 0
      %627 = vmatpush.bf16.msra.mxu0 0
      %628 = vmatpush.bf16.msra.mxu0 0
      %629 = vmatpush.bf16.msra.mxu0 0
      %630 = vmatpush.bf16.msra.mxu0 0
      %631 = vmatpush.bf16.msra.mxu0 0
      %632 = vmatpush.bf16.msra.mxu0 %v598
      %633 = vmatpush.bf16.msra.mxu0 %v597
      %634 = vmatmul.bf16.gmra.mxu0 %v603
      %v635 = vpop.f32.mrf.mxu0
      %v636 = vadd.f32 %v547, %v635
      %v637 = vpop.f32.mrf.mxu0
      %v638 = vadd.f32 %v547, %v637
      %639 = vmatmul.bf16.gmra.mxu0 %v606
      %v640 = vpop.f32.mrf.mxu0
      %v641 = vadd.f32 %v547, %v640
      %v642 = vpop.f32.mrf.mxu0
      %v643 = vadd.f32 %v547, %v642
      %644 = vmatmul.bf16.gmra.mxu0 %v609
      %v645 = vpop.f32.mrf.mxu0
      %v646 = vadd.f32 %v547, %v645
      %v647 = vpop.f32.mrf.mxu0
      %v648 = vadd.f32 %v547, %v647
      %649 = vmatmul.bf16.gmra.mxu0 %v612
      %v650 = vpop.f32.mrf.mxu0
      %v651 = vadd.f32 %v547, %v650
      %v652 = vpop.f32.mrf.mxu0
      %v653 = vadd.f32 %v547, %v652
      %654 = vmatmul.bf16.gmra.mxu0 %v615
      %v655 = vpop.f32.mrf.mxu0
      %v656 = vadd.f32 %v547, %v655
      %v657 = vpop.f32.mrf.mxu0
      %v658 = vadd.f32 %v547, %v657
      %659 = vmatmul.bf16.gmra.mxu0 %v618
      %v660 = vpop.f32.mrf.mxu0
      %v661 = vadd.f32 %v547, %v660
      %v662 = vpop.f32.mrf.mxu0
      %v663 = vadd.f32 %v547, %v662
      %664 = vmatmul.bf16.gmra.mxu0 %v621
      %v665 = vpop.f32.mrf.mxu0
      %v666 = vadd.f32 %v547, %v665
      %v667 = vpop.f32.mrf.mxu0
      %v668 = vadd.f32 %v547, %v667
      %669 = vmatmul.bf16.gmra.mxu0 %v624
      %v670 = vpop.f32.mrf.mxu0
      %v671 = vadd.f32 %v547, %v670
      %v672 = vpop.f32.mrf.mxu0
      %v673 = vadd.f32 %v547, %v672
      %674 = vdwg.mxu0
      %v675 = vmax.f32 %v636, 0.0
      %v676 = vmax.f32 %v638, 0.0
      %v677 = vmax.f32 %v641, 0.0
      %v678 = vmax.f32 %v643, 0.0
      %v679 = vmax.f32 %v646, 0.0
      %v680 = vmax.f32 %v648, 0.0
      %v681 = vmax.f32 %v651, 0.0
      %v682 = vmax.f32 %v653, 0.0
      %v683 = vmax.f32 %v656, 0.0
      %v684 = vmax.f32 %v658, 0.0
      %v685 = vmax.f32 %v661, 0.0
      %v686 = vmax.f32 %v663, 0.0
      %v687 = vmax.f32 %v666, 0.0
      %v688 = vmax.f32 %v668, 0.0
      %v689 = vmax.f32 %v671, 0.0
      %v690 = vmax.f32 %v673, 0.0
      %v691 = vpack.c.bf16 %v675, %v675
      %v692 = vpack.c.bf16 %v676, %v676
      %v693 = vpack.c.bf16 %v677, %v677
      %v694 = vpack.c.bf16 %v678, %v678
      %v695 = vpack.c.bf16 %v679, %v679
      %v696 = vpack.c.bf16 %v680, %v680
      %v697 = vpack.c.bf16 %v681, %v681
      %v698 = vpack.c.bf16 %v682, %v682
      %v699 = vpack.c.bf16 %v683, %v683
      %v700 = vpack.c.bf16 %v684, %v684
      %v701 = vpack.c.bf16 %v685, %v685
      %v702 = vpack.c.bf16 %v686, %v686
      %v703 = vpack.c.bf16 %v687, %v687
      %v704 = vpack.c.bf16 %v688, %v688
      %v705 = vpack.c.bf16 %v689, %v689
      %v706 = vpack.c.bf16 %v690, %v690
      %707 = vst [vmem:[#allocation2 + $0x1c] sm:$0xf] %v691
      %708 = vst [vmem:[#allocation2 + $0x28] sm:$0xf] %v692
      %709 = vst [vmem:[#allocation2 + $0x34] sm:$0xf] %v693
      %710 = vst [vmem:[#allocation2 + $0x40] sm:$0xf] %v694
      %711 = vst [vmem:[#allocation2 + $0x4c] sm:$0xf] %v695
      %712 = vst [vmem:[#allocation2 + $0x58] sm:$0xf] %v696
      %713 = vst [vmem:[#allocation2 + $0x64] sm:$0xf] %v697
      %714 = vst [vmem:[#allocation2 + $0x70] sm:$0xf] %v698
      %715 = vst [vmem:[#allocation2 + $0x7c] sm:$0xf] %v699
      %716 = vst [vmem:[#allocation2 + $0x88] sm:$0xf] %v700
      %717 = vst [vmem:[#allocation2 + $0x94] sm:$0xf] %v701
      %718 = vst [vmem:[#allocation2 + $0xa0] sm:$0xf] %v702
      %719 = vst [vmem:[#allocation2 + $0xac] sm:$0xf] %v703
      %720 = vst [vmem:[#allocation2 + $0xb8] sm:$0xf] %v704
      %721 = vst [vmem:[#allocation2 + $0xc4] sm:$0xf] %v705
      %722 = vst [vmem:[#allocation2 + $0xd0] sm:$0xf] %v706
      %723 = vst [vmem:[#allocation2 + $0x30] sm:$0xf] %v691
      %724 = vst [vmem:[#allocation2 + $0x3c] sm:$0xf] %v692
      %725 = vst [vmem:[#allocation2 + $0x48] sm:$0xf] %v693
      %726 = vst [vmem:[#allocation2 + $0x54] sm:$0xf] %v694
      %727 = vst [vmem:[#allocation2 + $0x60] sm:$0xf] %v695
      %728 = vst [vmem:[#allocation2 + $0x6c] sm:$0xf] %v696
      %729 = vst [vmem:[#allocation2 + $0x78] sm:$0xf] %v697
      %730 = vst [vmem:[#allocation2 + $0x84] sm:$0xf] %v698
      %731 = vst [vmem:[#allocation2 + $0x90] sm:$0xf] %v699
      %732 = vst [vmem:[#allocation2 + $0x9c] sm:$0xf] %v700
      %733 = vst [vmem:[#allocation2 + $0xa8] sm:$0xf] %v701
      %734 = vst [vmem:[#allocation2 + $0xb4] sm:$0xf] %v702
      %735 = vst [vmem:[#allocation2 + $0xc0] sm:$0xf] %v703
      %736 = vst [vmem:[#allocation2 + $0xcc] sm:$0xf] %v704
      %737 = vst [vmem:[#allocation2 + $0xd8] sm:$0xf] %v705
      %738 = vst [vmem:[#allocation2 + $0xe4] sm:$0xf] %v706
      %739 = vst [vmem:[#allocation2 + $0x8] sm:$0xf] %v691
      %740 = vst [vmem:[#allocation2 + $0x14] sm:$0xf] %v692
      %741 = vst [vmem:[#allocation2 + $0x20] sm:$0xf] %v693
      %742 = vst [vmem:[#allocation2 + $0x2c] sm:$0xf] %v694
      %743 = vst [vmem:[#allocation2 + $0x38] sm:$0xf] %v695
      %744 = vst [vmem:[#allocation2 + $0x44] sm:$0xf] %v696
      %745 = vst [vmem:[#allocation2 + $0x50] sm:$0xf] %v697
      %746 = vst [vmem:[#allocation2 + $0x5c] sm:$0xf] %v698
      %747 = vst [vmem:[#allocation2 + $0x68] sm:$0xf] %v699
      %748 = vst [vmem:[#allocation2 + $0x74] sm:$0xf] %v700
      %749 = vst [vmem:[#allocation2 + $0x80] sm:$0xf] %v701
      %750 = vst [vmem:[#allocation2 + $0x8c] sm:$0xf] %v702
      %751 = vst [vmem:[#allocation2 + $0x98] sm:$0xf] %v703
      %752 = vst [vmem:[#allocation2 + $0xa4] sm:$0xf] %v704
      %753 = vst [vmem:[#allocation2 + $0xb0] sm:$0xf] %v705
      %754 = vst [vmem:[#allocation2 + $0xbc] sm:$0xf] %v706
      %p755 = scmp.gt.s32.totalorder %s25, 0
      %v756 = vld [vmem:[%s466] sm:$0xf]
      %v757 = vld [vmem:[%s466 + $0x4] sm:$0xf]
      %v760 = vunpack.c.l.b16 %v756
      %v761 = vunpack.c.l.b16 %v757
      %v762 = vpack.c.b16 %v761, %v760
      %v764 = vsel %vm601, %v762, 0
      %766 = vmatpush.bf16.msra.mxu0 0
      %767 = vmatpush.bf16.msra.mxu0 0
      %768 = vmatpush.bf16.msra.mxu0 0
      %769 = vmatpush.bf16.msra.mxu0 0
      %770 = vmatpush.bf16.msra.mxu0 0
      %771 = vmatpush.bf16.msra.mxu0 0
      %772 = vmatpush.bf16.msra.mxu0 %v598
      %773 = vmatpush.bf16.msra.mxu0 %v597
      %774 = vmatmul.bf16.gmra.mxu0 %v764
      %v775 = vpop.f32.mrf.mxu0
      %v776 = vadd.f32 %v547, %v775
      %v777 = vpop.f32.mrf.mxu0
      %v778 = vadd.f32 %v547, %v777
      %779 = vdwg.mxu0
      %v780 = vmax.f32 %v776, 0.0
      %v781 = vmax.f32 %v778, 0.0
      %s782 = scalar_select %p755, 1, 0
      %v783 = vstv %s782
      %vm784 = vcmp.eq.s32.totalorder %v783, 1
      %v785 = vsel %vm784, %v780, 0.0
      %v786 = vsel %vm784, %v781, 0.0
      %v787 = vpack.c.bf16 %v785, %v785
      %v788 = vpack.c.bf16 %v786, %v786
      %789 = vst [vmem:[#allocation2 + $0x18] sm:$0xf] %v787
      %790 = vst [vmem:[#allocation2 + $0x24] sm:$0xf] %v788
      %p791 = scmp.lt.s32.totalorder %s25, 1
      %v792 = vld [vmem:[%s484] sm:$0xf]
      %v793 = vld [vmem:[%s484 + $0x4] sm:$0xf]
      %v796 = vunpack.c.l.b16 %v792
      %v797 = vunpack.c.l.b16 %v793
      %v798 = vpack.c.b16 %v797, %v796
      %v800 = vsel %vm601, %v798, 0
      %802 = vmatpush.bf16.msra.mxu0 0
      %803 = vmatpush.bf16.msra.mxu0 0
      %804 = vmatpush.bf16.msra.mxu0 0
      %805 = vmatpush.bf16.msra.mxu0 0
      %806 = vmatpush.bf16.msra.mxu0 0
      %807 = vmatpush.bf16.msra.mxu0 0
      %808 = vmatpush.bf16.msra.mxu0 %v598
      %809 = vmatpush.bf16.msra.mxu0 %v597
      %810 = vmatmul.bf16.gmra.mxu0 %v800
      %v811 = vpop.f32.mrf.mxu0
      %v812 = vadd.f32 %v547, %v811
      %v813 = vpop.f32.mrf.mxu0
      %v814 = vadd.f32 %v547, %v813
      %815 = vdwg.mxu0
      %v816 = vmax.f32 %v812, 0.0
      %v817 = vmax.f32 %v814, 0.0
      %s818 = scalar_select %p791, 1, 0
      %v819 = vstv %s818
      %vm820 = vcmp.eq.s32.totalorder %v819, 1
      %v821 = vsel %vm820, %v816, 0.0
      %v822 = vsel %vm820, %v817, 0.0
      %v823 = vpack.c.bf16 %v821, %v821
      %v824 = vpack.c.bf16 %v822, %v822
      %825 = vst [vmem:[#allocation2 + $0xc8] sm:$0xf] %v823
      %826 = vst [vmem:[#allocation2 + $0xd4] sm:$0xf] %v824
      %v827 = vlaneseq
      %v828 = vshrl.u32 %v827, 7
      %v829 = vadd.s32 %v828, 8
      %v830 = vadd.s32 %v828, 16
      %v831 = vadd.s32 %v828, 24
      %v832 = vadd.s32 %v828, 32
      %v833 = vadd.s32 %v828, 40
      %v834 = vadd.s32 %v828, 48
      %v835 = vadd.s32 %v828, 56
      %v836 = vadd.s32 %v828, 64
      %v837 = vadd.s32 %v828, 72
      %v838 = vadd.s32 %v828, 80
      %v839 = vadd.s32 %v828, 88
      %v840 = vadd.s32 %v828, 96
      %v841 = vadd.s32 %v828, 104
      %v842 = vadd.s32 %v828, 112
      %v843 = vadd.s32 %v828, 120
      %vm844 = vcmp.lt.s32.totalorder %v828, 0
      %v845 = vsub.s32 0, %v828
      %v846 = vsel %vm844, %v845, %v828
      %v847 = vshrl.u32 %v846, 4
      %v848 = vand.u32 %v846, 15
      %v849 = vsub.s32 0, %v848
      %v850 = vsel %vm844, %v849, %v848
      %vm851 = vcmp.lt.s32.totalorder %v829, 0
      %v852 = vsub.s32 0, %v829
      %v853 = vsel %vm851, %v852, %v829
      %v854 = vshrl.u32 %v853, 4
      %v855 = vand.u32 %v853, 15
      %v856 = vsub.s32 0, %v855
      %v857 = vsel %vm851, %v856, %v855
      %vm858 = vcmp.lt.s32.totalorder %v830, 0
      %v859 = vsub.s32 0, %v830
      %v860 = vsel %vm858, %v859, %v830
      %v861 = vshrl.u32 %v860, 4
      %v862 = vand.u32 %v860, 15
      %v863 = vsub.s32 0, %v862
      %v864 = vsel %vm858, %v863, %v862
      %vm865 = vcmp.lt.s32.totalorder %v831, 0
      %v866 = vsub.s32 0, %v831
      %v867 = vsel %vm865, %v866, %v831
      %v868 = vshrl.u32 %v867, 4
      %v869 = vand.u32 %v867, 15
      %v870 = vsub.s32 0, %v869
      %v871 = vsel %vm865, %v870, %v869
      %vm872 = vcmp.lt.s32.totalorder %v832, 0
      %v873 = vsub.s32 0, %v832
      %v874 = vsel %vm872, %v873, %v832
      %v875 = vshrl.u32 %v874, 4
      %v876 = vand.u32 %v874, 15
      %v877 = vsub.s32 0, %v876
      %v878 = vsel %vm872, %v877, %v876
      %vm879 = vcmp.lt.s32.totalorder %v833, 0
      %v880 = vsub.s32 0, %v833
      %v881 = vsel %vm879, %v880, %v833
      %v882 = vshrl.u32 %v881, 4
      %v883 = vand.u32 %v881, 15
      %v884 = vsub.s32 0, %v883
      %v885 = vsel %vm879, %v884, %v883
      %vm886 = vcmp.lt.s32.totalorder %v834, 0
      %v887 = vsub.s32 0, %v834
      %v888 = vsel %vm886, %v887, %v834
      %v889 = vshrl.u32 %v888, 4
      %v890 = vand.u32 %v888, 15
      %v891 = vsub.s32 0, %v890
      %v892 = vsel %vm886, %v891, %v890
      %vm893 = vcmp.lt.s32.totalorder %v835, 0
      %v894 = vsub.s32 0, %v835
      %v895 = vsel %vm893, %v894, %v835
      %v896 = vshrl.u32 %v895, 4
      %v897 = vand.u32 %v895, 15
      %v898 = vsub.s32 0, %v897
      %v899 = vsel %vm893, %v898, %v897
      %vm900 = vcmp.lt.s32.totalorder %v836, 0
      %v901 = vsub.s32 0, %v836
      %v902 = vsel %vm900, %v901, %v836
      %v903 = vshrl.u32 %v902, 4
      %v904 = vand.u32 %v902, 15
      %v905 = vsub.s32 0, %v904
      %v906 = vsel %vm900, %v905, %v904
      %vm907 = vcmp.lt.s32.totalorder %v837, 0
      %v908 = vsub.s32 0, %v837
      %v909 = vsel %vm907, %v908, %v837
      %v910 = vshrl.u32 %v909, 4
      %v911 = vand.u32 %v909, 15
      %v912 = vsub.s32 0, %v911
      %v913 = vsel %vm907, %v912, %v911
      %vm914 = vcmp.lt.s32.totalorder %v838, 0
      %v915 = vsub.s32 0, %v838
      %v916 = vsel %vm914, %v915, %v838
      %v917 = vshrl.u32 %v916, 4
      %v918 = vand.u32 %v916, 15
      %v919 = vsub.s32 0, %v918
      %v920 = vsel %vm914, %v919, %v918
      %vm921 = vcmp.lt.s32.totalorder %v839, 0
      %v922 = vsub.s32 0, %v839
      %v923 = vsel %vm921, %v922, %v839
      %v924 = vshrl.u32 %v923, 4
      %v925 = vand.u32 %v923, 15
      %v926 = vsub.s32 0, %v925
      %v927 = vsel %vm921, %v926, %v925
      %vm928 = vcmp.lt.s32.totalorder %v840, 0
      %v929 = vsub.s32 0, %v840
      %v930 = vsel %vm928, %v929, %v840
      %v931 = vshrl.u32 %v930, 4
      %v932 = vand.u32 %v930, 15
      %v933 = vsub.s32 0, %v932
      %v934 = vsel %vm928, %v933, %v932
      %vm935 = vcmp.lt.s32.totalorder %v841, 0
      %v936 = vsub.s32 0, %v841
      %v937 = vsel %vm935, %v936, %v841
      %v938 = vshrl.u32 %v937, 4
      %v939 = vand.u32 %v937, 15
      %v940 = vsub.s32 0, %v939
      %v941 = vsel %vm935, %v940, %v939
      %vm942 = vcmp.lt.s32.totalorder %v842, 0
      %v943 = vsub.s32 0, %v842
      %v944 = vsel %vm942, %v943, %v842
      %v945 = vshrl.u32 %v944, 4
      %v946 = vand.u32 %v944, 15
      %v947 = vsub.s32 0, %v946
      %v948 = vsel %vm942, %v947, %v946
      %vm949 = vcmp.lt.s32.totalorder %v843, 0
      %v950 = vsub.s32 0, %v843
      %v951 = vsel %vm949, %v950, %v843
      %v952 = vshrl.u32 %v951, 4
      %v953 = vand.u32 %v951, 15
      %v954 = vsub.s32 0, %v953
      %v955 = vsel %vm949, %v954, %v953
      %vm956 = vcmp.ne.s32.totalorder %v850, 0
      %vm957 = vcmp.ne.s32.totalorder %v857, 0
      %vm958 = vcmp.ne.s32.totalorder %v864, 0
      %vm959 = vcmp.ne.s32.totalorder %v871, 0
      %vm960 = vcmp.ne.s32.totalorder %v878, 0
      %vm961 = vcmp.ne.s32.totalorder %v885, 0
      %vm962 = vcmp.ne.s32.totalorder %v892, 0
      %vm963 = vcmp.ne.s32.totalorder %v899, 0
      %vm964 = vcmp.ne.s32.totalorder %v906, 0
      %vm965 = vcmp.ne.s32.totalorder %v913, 0
      %vm966 = vcmp.ne.s32.totalorder %v920, 0
      %vm967 = vcmp.ne.s32.totalorder %v927, 0
      %vm968 = vcmp.ne.s32.totalorder %v934, 0
      %vm969 = vcmp.ne.s32.totalorder %v941, 0
      %vm970 = vcmp.ne.s32.totalorder %v948, 0
      %vm971 = vcmp.ne.s32.totalorder %v955, 0
      %vm972 = vcmp.lt.s32.totalorder %v850, 0
      %vm973 = vcmp.lt.s32.totalorder %v857, 0
      %vm974 = vcmp.lt.s32.totalorder %v864, 0
      %vm975 = vcmp.lt.s32.totalorder %v871, 0
      %vm976 = vcmp.lt.s32.totalorder %v878, 0
      %vm977 = vcmp.lt.s32.totalorder %v885, 0
      %vm978 = vcmp.lt.s32.totalorder %v892, 0
      %vm979 = vcmp.lt.s32.totalorder %v899, 0
      %vm980 = vcmp.lt.s32.totalorder %v906, 0
      %vm981 = vcmp.lt.s32.totalorder %v913, 0
      %vm982 = vcmp.lt.s32.totalorder %v920, 0
      %vm983 = vcmp.lt.s32.totalorder %v927, 0
      %vm984 = vcmp.lt.s32.totalorder %v934, 0
      %vm985 = vcmp.lt.s32.totalorder %v941, 0
      %vm986 = vcmp.lt.s32.totalorder %v948, 0
      %vm987 = vcmp.lt.s32.totalorder %v955, 0
      %vm988 = vmand %vm972, %vm956
      %vm989 = vmand %vm973, %vm957
      %vm990 = vmand %vm974, %vm958
      %vm991 = vmand %vm975, %vm959
      %vm992 = vmand %vm976, %vm960
      %vm993 = vmand %vm977, %vm961
      %vm994 = vmand %vm978, %vm962
      %vm995 = vmand %vm979, %vm963
      %vm996 = vmand %vm980, %vm964
      %vm997 = vmand %vm981, %vm965
      %vm998 = vmand %vm982, %vm966
      %vm999 = vmand %vm983, %vm967
      %vm1000 = vmand %vm984, %vm968
      %vm1001 = vmand %vm985, %vm969
      %vm1002 = vmand %vm986, %vm970
      %vm1003 = vmand %vm987, %vm971
      %v1004 = vadd.s32 %v850, 16
      %v1005 = vadd.s32 %v857, 16
      %v1006 = vadd.s32 %v864, 16
      %v1007 = vadd.s32 %v871, 16
      %v1008 = vadd.s32 %v878, 16
      %v1009 = vadd.s32 %v885, 16
      %v1010 = vadd.s32 %v892, 16
      %v1011 = vadd.s32 %v899, 16
      %v1012 = vadd.s32 %v906, 16
      %v1013 = vadd.s32 %v913, 16
      %v1014 = vadd.s32 %v920, 16
      %v1015 = vadd.s32 %v927, 16
      %v1016 = vadd.s32 %v934, 16
      %v1017 = vadd.s32 %v941, 16
      %v1018 = vadd.s32 %v948, 16
      %v1019 = vadd.s32 %v955, 16
      %v1020 = vsel %vm988, %v1004, %v850
      %v1021 = vsel %vm989, %v1005, %v857
      %v1022 = vsel %vm990, %v1006, %v864
      %v1023 = vsel %vm991, %v1007, %v871
      %v1024 = vsel %vm992, %v1008, %v878
      %v1025 = vsel %vm993, %v1009, %v885
      %v1026 = vsel %vm994, %v1010, %v892
      %v1027 = vsel %vm995, %v1011, %v899
      %v1028 = vsel %vm996, %v1012, %v906
      %v1029 = vsel %vm997, %v1013, %v913
      %v1030 = vsel %vm998, %v1014, %v920
      %v1031 = vsel %vm999, %v1015, %v927
      %v1032 = vsel %vm1000, %v1016, %v934
      %v1033 = vsel %vm1001, %v1017, %v941
      %v1034 = vsel %vm1002, %v1018, %v948
      %v1035 = vsel %vm1003, %v1019, %v955
      %v1036 = vld [vmem:[#allocation2 + $0xc] sm:$0x88]
      %v1037 = vld [vmem:[#allocation2 + $0x14] sm:$0x8]
      %v1038 = vld [vmem:[#allocation2 + $0x18] sm:$0xff]
      %v1039 = vld [vmem:[#allocation2 + $0x20] sm:$0xf]
      %v1040 = vld [vmem:[#allocation2 + $0x24] sm:$0xff]
      %v1041 = vld [vmem:[#allocation2 + $0x2c] sm:$0xf]
      %v1042 = vld [vmem:[#allocation2 + $0x30] sm:$0xff]
      %v1043 = vld [vmem:[#allocation2 + $0x38] sm:$0xf]
      %v1044 = vld [vmem:[#allocation2 + $0x3c] sm:$0xff]
      %v1045 = vld [vmem:[#allocation2 + $0x44] sm:$0xf]
      %v1046 = vld [vmem:[#allocation2 + $0x48] sm:$0xff]
      %v1047 = vld [vmem:[#allocation2 + $0x50] sm:$0xf]
      %v1048 = vld [vmem:[#allocation2 + $0x54] sm:$0xff]
      %v1049 = vld [vmem:[#allocation2 + $0x5c] sm:$0xf]
      %v1050 = vld [vmem:[#allocation2 + $0x60] sm:$0xff]
      %v1051 = vld [vmem:[#allocation2 + $0x68] sm:$0xf]
      %v1052 = vld [vmem:[#allocation2 + $0x6c] sm:$0xff]
      %v1053 = vld [vmem:[#allocation2 + $0x74] sm:$0xf]
      %v1054 = vld [vmem:[#allocation2 + $0x78] sm:$0xff]
      %v1055 = vld [vmem:[#allocation2 + $0x80] sm:$0xf]
      %v1056 = vld [vmem:[#allocation2 + $0x84] sm:$0xff]
      %v1057 = vld [vmem:[#allocation2 + $0x8c] sm:$0xf]
      %v1058 = vld [vmem:[#allocation2 + $0x90] sm:$0xff]
      %v1059 = vld [vmem:[#allocation2 + $0x98] sm:$0xf]
      %v1060 = vld [vmem:[#allocation2 + $0x9c] sm:$0xff]
      %v1061 = vld [vmem:[#allocation2 + $0xa4] sm:$0xf]
      %v1062 = vld [vmem:[#allocation2 + $0xa8] sm:$0xff]
      %v1063 = vld [vmem:[#allocation2 + $0xb0] sm:$0xf]
      %v1064 = vld [vmem:[#allocation2 + $0xb4] sm:$0xff]
      %v1065 = vld [vmem:[#allocation2 + $0xbc] sm:$0xf]
      %v1066 = vld [vmem:[#allocation2 + $0xc0] sm:$0xff]
      %v1067 = vld [vmem:[#allocation2 + $0xc8] sm:$0xf]
      %v1068 = vld [vmem:[#allocation2 + $0xcc] sm:$0xff]
      %v1069 = vld [vmem:[#allocation2 + $0xd4] sm:$0xf]
      %v1070 = vadd.s32 %v1020, 4294967295
      %v1071 = vadd.s32 %v1021, 4294967295
      %v1072 = vadd.s32 %v1022, 4294967295
      %v1073 = vadd.s32 %v1023, 4294967295
      %v1074 = vadd.s32 %v1024, 4294967295
      %v1075 = vadd.s32 %v1025, 4294967295
      %v1076 = vadd.s32 %v1026, 4294967295
      %v1077 = vadd.s32 %v1027, 4294967295
      %v1078 = vadd.s32 %v1028, 4294967295
      %v1079 = vadd.s32 %v1029, 4294967295
      %v1080 = vadd.s32 %v1030, 4294967295
      %v1081 = vadd.s32 %v1031, 4294967295
      %v1082 = vadd.s32 %v1032, 4294967295
      %v1083 = vadd.s32 %v1033, 4294967295
      %v1084 = vadd.s32 %v1034, 4294967295
      %v1085 = vadd.s32 %v1035, 4294967295
      %vm1086 = vcmp.ge.s32.totalorder %v1070, 0
      %vm1087 = vcmp.ge.s32.totalorder %v1071, 0
      %vm1088 = vcmp.ge.s32.totalorder %v1072, 0
      %vm1089 = vcmp.ge.s32.totalorder %v1073, 0
      %vm1090 = vcmp.ge.s32.totalorder %v1074, 0
      %vm1091 = vcmp.ge.s32.totalorder %v1075, 0
      %vm1092 = vcmp.ge.s32.totalorder %v1076, 0
      %vm1093 = vcmp.ge.s32.totalorder %v1077, 0
      %vm1094 = vcmp.ge.s32.totalorder %v1078, 0
      %vm1095 = vcmp.ge.s32.totalorder %v1079, 0
      %vm1096 = vcmp.ge.s32.totalorder %v1080, 0
      %vm1097 = vcmp.ge.s32.totalorder %v1081, 0
      %vm1098 = vcmp.ge.s32.totalorder %v1082, 0
      %vm1099 = vcmp.ge.s32.totalorder %v1083, 0
      %vm1100 = vcmp.ge.s32.totalorder %v1084, 0
      %vm1101 = vcmp.ge.s32.totalorder %v1085, 0
      %vm1102 = vcmp.lt.s32.totalorder %v1070, 16
      %vm1103 = vcmp.lt.s32.totalorder %v1071, 16
      %vm1104 = vcmp.lt.s32.totalorder %v1072, 16
      %vm1105 = vcmp.lt.s32.totalorder %v1073, 16
      %vm1106 = vcmp.lt.s32.totalorder %v1074, 16
      %vm1107 = vcmp.lt.s32.totalorder %v1075, 16
      %vm1108 = vcmp.lt.s32.totalorder %v1076, 16
      %vm1109 = vcmp.lt.s32.totalorder %v1077, 16
      %vm1110 = vcmp.lt.s32.totalorder %v1078, 16
      %vm1111 = vcmp.lt.s32.totalorder %v1079, 16
      %vm1112 = vcmp.lt.s32.totalorder %v1080, 16
      %vm1113 = vcmp.lt.s32.totalorder %v1081, 16
      %vm1114 = vcmp.lt.s32.totalorder %v1082, 16
      %vm1115 = vcmp.lt.s32.totalorder %v1083, 16
      %vm1116 = vcmp.lt.s32.totalorder %v1084, 16
      %vm1117 = vcmp.lt.s32.totalorder %v1085, 16
      %vm1118 = vmand %vm1086, %vm1102
      %vm1119 = vmand %vm1087, %vm1103
      %vm1120 = vmand %vm1088, %vm1104
      %vm1121 = vmand %vm1089, %vm1105
      %vm1122 = vmand %vm1090, %vm1106
      %vm1123 = vmand %vm1091, %vm1107
      %vm1124 = vmand %vm1092, %vm1108
      %vm1125 = vmand %vm1093, %vm1109
      %vm1126 = vmand %vm1094, %vm1110
      %vm1127 = vmand %vm1095, %vm1111
      %vm1128 = vmand %vm1096, %vm1112
      %vm1129 = vmand %vm1097, %vm1113
      %vm1130 = vmand %vm1098, %vm1114
      %vm1131 = vmand %vm1099, %vm1115
      %vm1132 = vmand %vm1100, %vm1116
      %vm1133 = vmand %vm1101, %vm1117
      %v1134 = vsel %vm1118, 1, 0
      %v1135 = vsel %vm1119, 1, 0
      %v1136 = vsel %vm1120, 1, 0
      %v1137 = vsel %vm1121, 1, 0
      %v1138 = vsel %vm1122, 1, 0
      %v1139 = vsel %vm1123, 1, 0
      %v1140 = vsel %vm1124, 1, 0
      %v1141 = vsel %vm1125, 1, 0
      %v1142 = vsel %vm1126, 1, 0
      %v1143 = vsel %vm1127, 1, 0
      %v1144 = vsel %vm1128, 1, 0
      %v1145 = vsel %vm1129, 1, 0
      %v1146 = vsel %vm1130, 1, 0
      %v1147 = vsel %vm1131, 1, 0
      %v1148 = vsel %vm1132, 1, 0
      %v1149 = vsel %vm1133, 1, 0
      %vm1150 = vcmp.eq.s32.totalorder %v1134, 1
      %vm1151 = vcmp.eq.s32.totalorder %v1135, 1
      %vm1152 = vcmp.eq.s32.totalorder %v1136, 1
      %vm1153 = vcmp.eq.s32.totalorder %v1137, 1
      %vm1154 = vcmp.eq.s32.totalorder %v1138, 1
      %vm1155 = vcmp.eq.s32.totalorder %v1139, 1
      %vm1156 = vcmp.eq.s32.totalorder %v1140, 1
      %vm1157 = vcmp.eq.s32.totalorder %v1141, 1
      %vm1158 = vcmp.eq.s32.totalorder %v1142, 1
      %vm1159 = vcmp.eq.s32.totalorder %v1143, 1
      %vm1160 = vcmp.eq.s32.totalorder %v1144, 1
      %vm1161 = vcmp.eq.s32.totalorder %v1145, 1
      %vm1162 = vcmp.eq.s32.totalorder %v1146, 1
      %vm1163 = vcmp.eq.s32.totalorder %v1147, 1
      %vm1164 = vcmp.eq.s32.totalorder %v1148, 1
      %vm1165 = vcmp.eq.s32.totalorder %v1149, 1
      %vm1166 = vmpackc.low %vm1150, %vm1150
      %vm1167 = vmpackc.low %vm1151, %vm1151
      %vm1168 = vmpackc.low %vm1152, %vm1152
      %vm1169 = vmpackc.low %vm1153, %vm1153
      %vm1170 = vmpackc.low %vm1154, %vm1154
      %vm1171 = vmpackc.low %vm1155, %vm1155
      %vm1172 = vmpackc.low %vm1156, %vm1156
      %vm1173 = vmpackc.low %vm1157, %vm1157
      %vm1174 = vmpackc.low %vm1158, %vm1158
      %vm1175 = vmpackc.low %vm1159, %vm1159
      %vm1176 = vmpackc.low %vm1160, %vm1160
      %vm1177 = vmpackc.low %vm1161, %vm1161
      %vm1178 = vmpackc.low %vm1162, %vm1162
      %vm1179 = vmpackc.low %vm1163, %vm1163
      %vm1180 = vmpackc.low %vm1164, %vm1164
      %vm1181 = vmpackc.low %vm1165, %vm1165
      %v1182 = vsel %vm1166, 65537, 0
      %v1183 = vsel %vm1167, 65537, 0
      %v1184 = vsel %vm1168, 65537, 0
      %v1185 = vsel %vm1169, 65537, 0
      %v1186 = vsel %vm1170, 65537, 0
      %v1187 = vsel %vm1171, 65537, 0
      %v1188 = vsel %vm1172, 65537, 0
      %v1189 = vsel %vm1173, 65537, 0
      %v1190 = vsel %vm1174, 65537, 0
      %v1191 = vsel %vm1175, 65537, 0
      %v1192 = vsel %vm1176, 65537, 0
      %v1193 = vsel %vm1177, 65537, 0
      %v1194 = vsel %vm1178, 65537, 0
      %v1195 = vsel %vm1179, 65537, 0
      %v1196 = vsel %vm1180, 65537, 0
      %v1197 = vsel %vm1181, 65537, 0
      %vm1198 = vsmask.f32 3328
      %vm1199 = vsmask.f32 7440
      %vm1200 = vmor %vm1198, %vm1199
      %v1202 = vshll.u32 %v1182, 16
      %v1204 = vrot.slane %v1202, 5
      %v1205 = vshrl.u32 %v1182, 16
      %v1207 = vrot.slane %v1205, 4
      %v1208 = vor.u32 %v1207, %v1204
      %v1209 = vrot.slane %v1208, 4
      %v1211 = vshll.u32 %v1183, 16
      %v1213 = vrot.slane %v1211, 5
      %v1214 = vsel %vm1200, %v1209, %v1213
      %v1215 = vshrl.u32 %v1183, 16
      %v1217 = vrot.slane %v1215, 4
      %v1218 = vor.u32 %v1217, %v1213
      %v1219 = vrot.slane %v1218, 4
      %v1221 = vshll.u32 %v1184, 16
      %v1223 = vrot.slane %v1221, 5
      %v1224 = vsel %vm1200, %v1219, %v1223
      %v1225 = vshrl.u32 %v1184, 16
      %v1227 = vrot.slane %v1225, 4
      %v1228 = vor.u32 %v1227, %v1223
      %v1229 = vrot.slane %v1228, 4
      %v1231 = vshll.u32 %v1185, 16
      %v1233 = vrot.slane %v1231, 5
      %v1234 = vsel %vm1200, %v1229, %v1233
      %v1235 = vshrl.u32 %v1185, 16
      %v1237 = vrot.slane %v1235, 4
      %v1238 = vor.u32 %v1237, %v1233
      %v1239 = vrot.slane %v1238, 4
      %v1241 = vshll.u32 %v1186, 16
      %v1243 = vrot.slane %v1241, 5
      %v1244 = vsel %vm1200, %v1239, %v1243
      %v1245 = vshrl.u32 %v1186, 16
      %v1247 = vrot.slane %v1245, 4
      %v1248 = vor.u32 %v1247, %v1243
      %v1249 = vrot.slane %v1248, 4
      %v1251 = vshll.u32 %v1187, 16
      %v1253 = vrot.slane %v1251, 5
      %v1254 = vsel %vm1200, %v1249, %v1253
      %v1255 = vshrl.u32 %v1187, 16
      %v1257 = vrot.slane %v1255, 4
      %v1258 = vor.u32 %v1257, %v1253
      %v1259 = vrot.slane %v1258, 4
      %v1261 = vshll.u32 %v1188, 16
      %v1263 = vrot.slane %v1261, 5
      %v1264 = vsel %vm1200, %v1259, %v1263
      %v1265 = vshrl.u32 %v1188, 16
      %v1267 = vrot.slane %v1265, 4
      %v1268 = vor.u32 %v1267, %v1263
      %v1269 = vrot.slane %v1268, 4
      %v1271 = vshll.u32 %v1189, 16
      %v1273 = vrot.slane %v1271, 5
      %v1274 = vsel %vm1200, %v1269, %v1273
      %v1275 = vshrl.u32 %v1189, 16
      %v1277 = vrot.slane %v1275, 4
      %v1278 = vor.u32 %v1277, %v1273
      %v1279 = vrot.slane %v1278, 4
      %v1281 = vshll.u32 %v1190, 16
      %v1283 = vrot.slane %v1281, 5
      %v1284 = vsel %vm1200, %v1279, %v1283
      %v1285 = vshrl.u32 %v1190, 16
      %v1287 = vrot.slane %v1285, 4
      %v1288 = vor.u32 %v1287, %v1283
      %v1289 = vrot.slane %v1288, 4
      %v1291 = vshll.u32 %v1191, 16
      %v1293 = vrot.slane %v1291, 5
      %v1294 = vsel %vm1200, %v1289, %v1293
      %v1295 = vshrl.u32 %v1191, 16
      %v1297 = vrot.slane %v1295, 4
      %v1298 = vor.u32 %v1297, %v1293
      %v1299 = vrot.slane %v1298, 4
      %v1301 = vshll.u32 %v1192, 16
      %v1303 = vrot.slane %v1301, 5
      %v1304 = vsel %vm1200, %v1299, %v1303
      %v1305 = vshrl.u32 %v1192, 16
      %v1307 = vrot.slane %v1305, 4
      %v1308 = vor.u32 %v1307, %v1303
      %v1309 = vrot.slane %v1308, 4
      %v1311 = vshll.u32 %v1193, 16
      %v1313 = vrot.slane %v1311, 5
      %v1314 = vsel %vm1200, %v1309, %v1313
      %v1315 = vshrl.u32 %v1193, 16
      %v1317 = vrot.slane %v1315, 4
      %v1318 = vor.u32 %v1317, %v1313
      %v1319 = vrot.slane %v1318, 4
      %v1321 = vshll.u32 %v1194, 16
      %v1323 = vrot.slane %v1321, 5
      %v1324 = vsel %vm1200, %v1319, %v1323
      %v1325 = vshrl.u32 %v1194, 16
      %v1327 = vrot.slane %v1325, 4
      %v1328 = vor.u32 %v1327, %v1323
      %v1329 = vrot.slane %v1328, 4
      %v1331 = vshll.u32 %v1195, 16
      %v1333 = vrot.slane %v1331, 5
      %v1334 = vsel %vm1200, %v1329, %v1333
      %v1335 = vshrl.u32 %v1195, 16
      %v1337 = vrot.slane %v1335, 4
      %v1338 = vor.u32 %v1337, %v1333
      %v1339 = vrot.slane %v1338, 4
      %v1341 = vshll.u32 %v1196, 16
      %v1343 = vrot.slane %v1341, 5
      %v1344 = vsel %vm1200, %v1339, %v1343
      %v1345 = vshrl.u32 %v1196, 16
      %v1347 = vrot.slane %v1345, 4
      %v1348 = vor.u32 %v1347, %v1343
      %v1349 = vrot.slane %v1348, 4
      %v1351 = vshll.u32 %v1197, 16
      %v1353 = vrot.slane %v1351, 5
      %v1354 = vsel %vm1200, %v1349, %v1353
      %v1355 = vshrl.u32 %v1197, 16
      %v1357 = vrot.slane %v1355, 4
      %v1358 = vor.u32 %v1357, %v1353
      %v1359 = vrot.slane %v1358, 4
      %v1360 = vunpack.c.l.b16 %v1204
      %v1361 = vunpack.c.h.b16 %v1204
      %v1362 = vunpack.c.l.b16 0
      %v1363 = vunpack.c.h.b16 0
      %vm1364 = vcmp.ne.s32.totalorder %v1360, %v1362
      %vm1365 = vcmp.ne.s32.totalorder %v1361, %v1363
      %vm1366 = vmpackc.low %vm1365, %vm1364
      %v1367 = vunpack.c.l.b16 %v1214
      %v1368 = vunpack.c.h.b16 %v1214
      %v1369 = vunpack.c.l.b16 0
      %v1370 = vunpack.c.h.b16 0
      %vm1371 = vcmp.ne.s32.totalorder %v1367, %v1369
      %vm1372 = vcmp.ne.s32.totalorder %v1368, %v1370
      %vm1373 = vmpackc.low %vm1372, %vm1371
      %v1374 = vunpack.c.l.b16 %v1224
      %v1375 = vunpack.c.h.b16 %v1224
      %v1376 = vunpack.c.l.b16 0
      %v1377 = vunpack.c.h.b16 0
      %vm1378 = vcmp.ne.s32.totalorder %v1374, %v1376
      %vm1379 = vcmp.ne.s32.totalorder %v1375, %v1377
      %vm1380 = vmpackc.low %vm1379, %vm1378
      %v1381 = vunpack.c.l.b16 %v1234
      %v1382 = vunpack.c.h.b16 %v1234
      %v1383 = vunpack.c.l.b16 0
      %v1384 = vunpack.c.h.b16 0
      %vm1385 = vcmp.ne.s32.totalorder %v1381, %v1383
      %vm1386 = vcmp.ne.s32.totalorder %v1382, %v1384
      %vm1387 = vmpackc.low %vm1386, %vm1385
      %v1388 = vunpack.c.l.b16 %v1244
      %v1389 = vunpack.c.h.b16 %v1244
      %v1390 = vunpack.c.l.b16 0
      %v1391 = vunpack.c.h.b16 0
      %vm1392 = vcmp.ne.s32.totalorder %v1388, %v1390
      %vm1393 = vcmp.ne.s32.totalorder %v1389, %v1391
      %vm1394 = vmpackc.low %vm1393, %vm1392
      %v1395 = vunpack.c.l.b16 %v1254
      %v1396 = vunpack.c.h.b16 %v1254
      %v1397 = vunpack.c.l.b16 0
      %v1398 = vunpack.c.h.b16 0
      %vm1399 = vcmp.ne.s32.totalorder %v1395, %v1397
      %vm1400 = vcmp.ne.s32.totalorder %v1396, %v1398
      %vm1401 = vmpackc.low %vm1400, %vm1399
      %v1402 = vunpack.c.l.b16 %v1264
      %v1403 = vunpack.c.h.b16 %v1264
      %v1404 = vunpack.c.l.b16 0
      %v1405 = vunpack.c.h.b16 0
      %vm1406 = vcmp.ne.s32.totalorder %v1402, %v1404
      %vm1407 = vcmp.ne.s32.totalorder %v1403, %v1405
      %vm1408 = vmpackc.low %vm1407, %vm1406
      %v1409 = vunpack.c.l.b16 %v1274
      %v1410 = vunpack.c.h.b16 %v1274
      %v1411 = vunpack.c.l.b16 0
      %v1412 = vunpack.c.h.b16 0
      %vm1413 = vcmp.ne.s32.totalorder %v1409, %v1411
      %vm1414 = vcmp.ne.s32.totalorder %v1410, %v1412
      %vm1415 = vmpackc.low %vm1414, %vm1413
      %v1416 = vunpack.c.l.b16 %v1284
      %v1417 = vunpack.c.h.b16 %v1284
      %v1418 = vunpack.c.l.b16 0
      %v1419 = vunpack.c.h.b16 0
      %vm1420 = vcmp.ne.s32.totalorder %v1416, %v1418
      %vm1421 = vcmp.ne.s32.totalorder %v1417, %v1419
      %vm1422 = vmpackc.low %vm1421, %vm1420
      %v1423 = vunpack.c.l.b16 %v1294
      %v1424 = vunpack.c.h.b16 %v1294
      %v1425 = vunpack.c.l.b16 0
      %v1426 = vunpack.c.h.b16 0
      %vm1427 = vcmp.ne.s32.totalorder %v1423, %v1425
      %vm1428 = vcmp.ne.s32.totalorder %v1424, %v1426
      %vm1429 = vmpackc.low %vm1428, %vm1427
      %v1430 = vunpack.c.l.b16 %v1304
      %v1431 = vunpack.c.h.b16 %v1304
      %v1432 = vunpack.c.l.b16 0
      %v1433 = vunpack.c.h.b16 0
      %vm1434 = vcmp.ne.s32.totalorder %v1430, %v1432
      %vm1435 = vcmp.ne.s32.totalorder %v1431, %v1433
      %vm1436 = vmpackc.low %vm1435, %vm1434
      %v1437 = vunpack.c.l.b16 %v1314
      %v1438 = vunpack.c.h.b16 %v1314
      %v1439 = vunpack.c.l.b16 0
      %v1440 = vunpack.c.h.b16 0
      %vm1441 = vcmp.ne.s32.totalorder %v1437, %v1439
      %vm1442 = vcmp.ne.s32.totalorder %v1438, %v1440
      %vm1443 = vmpackc.low %vm1442, %vm1441
      %v1444 = vunpack.c.l.b16 %v1324
      %v1445 = vunpack.c.h.b16 %v1324
      %v1446 = vunpack.c.l.b16 0
      %v1447 = vunpack.c.h.b16 0
      %vm1448 = vcmp.ne.s32.totalorder %v1444, %v1446
      %vm1449 = vcmp.ne.s32.totalorder %v1445, %v1447
      %vm1450 = vmpackc.low %vm1449, %vm1448
      %v1451 = vunpack.c.l.b16 %v1334
      %v1452 = vunpack.c.h.b16 %v1334
      %v1453 = vunpack.c.l.b16 0
      %v1454 = vunpack.c.h.b16 0
      %vm1455 = vcmp.ne.s32.totalorder %v1451, %v1453
      %vm1456 = vcmp.ne.s32.totalorder %v1452, %v1454
      %vm1457 = vmpackc.low %vm1456, %vm1455
      %v1458 = vunpack.c.l.b16 %v1344
      %v1459 = vunpack.c.h.b16 %v1344
      %v1460 = vunpack.c.l.b16 0
      %v1461 = vunpack.c.h.b16 0
      %vm1462 = vcmp.ne.s32.totalorder %v1458, %v1460
      %vm1463 = vcmp.ne.s32.totalorder %v1459, %v1461
      %vm1464 = vmpackc.low %vm1463, %vm1462
      %v1465 = vunpack.c.l.b16 %v1354
      %v1466 = vunpack.c.h.b16 %v1354
      %v1467 = vunpack.c.l.b16 0
      %v1468 = vunpack.c.h.b16 0
      %vm1469 = vcmp.ne.s32.totalorder %v1465, %v1467
      %vm1470 = vcmp.ne.s32.totalorder %v1466, %v1468
      %vm1471 = vmpackc.low %vm1470, %vm1469
      %v1472 = vunpack.c.l.b16 %v1359
      %v1473 = vunpack.c.h.b16 %v1359
      %v1474 = vunpack.c.l.b16 0
      %v1475 = vunpack.c.h.b16 0
      %vm1476 = vcmp.ne.s32.totalorder %v1472, %v1474
      %vm1477 = vcmp.ne.s32.totalorder %v1473, %v1475
      %vm1478 = vmpackc.low %vm1477, %vm1476
      %v1479 = vsel %vm1366, %v1036, 0
      %v1480 = vsel %vm1366, %v1037, 0
      %v1481 = vsel %vm1373, %v1038, 0
      %v1482 = vsel %vm1373, %v1039, 0
      %v1483 = vsel %vm1380, %v1040, 0
      %v1484 = vsel %vm1380, %v1041, 0
      %v1485 = vsel %vm1387, %v1042, 0
      %v1486 = vsel %vm1387, %v1043, 0
      %v1487 = vsel %vm1394, %v1044, 0
      %v1488 = vsel %vm1394, %v1045, 0
      %v1489 = vsel %vm1401, %v1046, 0
      %v1490 = vsel %vm1401, %v1047, 0
      %v1491 = vsel %vm1408, %v1048, 0
      %v1492 = vsel %vm1408, %v1049, 0
      %v1493 = vsel %vm1415, %v1050, 0
      %v1494 = vsel %vm1415, %v1051, 0
      %v1495 = vsel %vm1422, %v1052, 0
      %v1496 = vsel %vm1422, %v1053, 0
      %v1497 = vsel %vm1429, %v1054, 0
      %v1498 = vsel %vm1429, %v1055, 0
      %v1499 = vsel %vm1436, %v1056, 0
      %v1500 = vsel %vm1436, %v1057, 0
      %v1501 = vsel %vm1443, %v1058, 0
      %v1502 = vsel %vm1443, %v1059, 0
      %v1503 = vsel %vm1450, %v1060, 0
      %v1504 = vsel %vm1450, %v1061, 0
      %v1505 = vsel %vm1457, %v1062, 0
      %v1506 = vsel %vm1457, %v1063, 0
      %v1507 = vsel %vm1464, %v1064, 0
      %v1508 = vsel %vm1464, %v1065, 0
      %v1509 = vsel %vm1471, %v1066, 0
      %v1510 = vsel %vm1471, %v1067, 0
      %v1511 = vsel %vm1478, %v1068, 0
      %v1512 = vsel %vm1478, %v1069, 0
      %v1513 = vld [vmem:[%s5] sm:$0xf]
      %v1514 = vld [vmem:[%s5 + $0x4] sm:$0xf]
      %v1515 = vld [vmem:[%s5 + $0x8] sm:$0xf]
      %v1516 = vld [vmem:[%s5 + $0xc] sm:$0xf]
      %v1517 = vld [vmem:[%s5 + $0x10] sm:$0xf]
      %v1518 = vld [vmem:[%s5 + $0x14] sm:$0xf]
      %v1519 = vld [vmem:[%s5 + $0x18] sm:$0xf]
      %v1520 = vld [vmem:[%s5 + $0x1c] sm:$0xf]
      %v1521 = vld [vmem:[%s5 + $0x20] sm:$0xf]
      %v1522 = vld [vmem:[%s5 + $0x24] sm:$0xf]
      %v1523 = vld [vmem:[%s5 + $0x28] sm:$0xf]
      %v1524 = vld [vmem:[%s5 + $0x2c] sm:$0xf]
      %v1525 = vld [vmem:[%s5 + $0x30] sm:$0xf]
      %v1526 = vld [vmem:[%s5 + $0x34] sm:$0xf]
      %v1527 = vld [vmem:[%s5 + $0x38] sm:$0xf]
      %v1528 = vld [vmem:[%s5 + $0x3c] sm:$0xf]
      %v1529 = vld [vmem:[%s5 + $0x40] sm:$0xf]
      %v1530 = vld [vmem:[%s5 + $0x44] sm:$0xf]
      %v1531 = vld [vmem:[%s5 + $0x48] sm:$0xf]
      %v1532 = vld [vmem:[%s5 + $0x4c] sm:$0xf]
      %v1533 = vld [vmem:[%s5 + $0x50] sm:$0xf]
      %v1534 = vld [vmem:[%s5 + $0x54] sm:$0xf]
      %v1535 = vld [vmem:[%s5 + $0x58] sm:$0xf]
      %v1536 = vld [vmem:[%s5 + $0x5c] sm:$0xf]
      %v1537 = vld [vmem:[%s5 + $0x60] sm:$0xf]
      %v1538 = vld [vmem:[%s5 + $0x64] sm:$0xf]
      %v1539 = vld [vmem:[%s5 + $0x68] sm:$0xf]
      %v1540 = vld [vmem:[%s5 + $0x6c] sm:$0xf]
      %v1541 = vld [vmem:[%s5 + $0x70] sm:$0xf]
      %v1542 = vld [vmem:[%s5 + $0x74] sm:$0xf]
      %v1543 = vld [vmem:[%s5 + $0x78] sm:$0xf]
      %v1544 = vld [vmem:[%s5 + $0x7c] sm:$0xf]
      %v1545 = vld [vmem:[%s5 + $0x80] sm:$0xf]
      %v1546 = vld [vmem:[%s5 + $0x84] sm:$0xf]
      %v1547 = vld [vmem:[%s5 + $0x88] sm:$0xf]
      %v1548 = vld [vmem:[%s5 + $0x8c] sm:$0xf]
      %v1549 = vld [vmem:[%s5 + $0x90] sm:$0xf]
      %v1550 = vld [vmem:[%s5 + $0x94] sm:$0xf]
      %v1551 = vld [vmem:[%s5 + $0x98] sm:$0xf]
      %v1552 = vld [vmem:[%s5 + $0x9c] sm:$0xf]
      %v1553 = vld [vmem:[%s5 + $0xa0] sm:$0xf]
      %v1554 = vld [vmem:[%s5 + $0xa4] sm:$0xf]
      %v1555 = vld [vmem:[%s5 + $0xa8] sm:$0xf]
      %v1556 = vld [vmem:[%s5 + $0xac] sm:$0xf]
      %v1557 = vld [vmem:[%s5 + $0xb0] sm:$0xf]
      %v1558 = vld [vmem:[%s5 + $0xb4] sm:$0xf]
      %v1559 = vld [vmem:[%s5 + $0xb8] sm:$0xf]
      %v1560 = vld [vmem:[%s5 + $0xbc] sm:$0xf]
      %s1561 = scalar_lea.vmem %s5, 192
      %v1562 = vld [vmem:[%s1561] sm:$0xf]
      %v1563 = vld [vmem:[%s1561 + $0x4] sm:$0xf]
      %v1564 = vld [vmem:[%s1561 + $0x8] sm:$0xf]
      %v1565 = vld [vmem:[%s1561 + $0xc] sm:$0xf]
      %v1566 = vld [vmem:[%s1561 + $0x10] sm:$0xf]
      %v1567 = vld [vmem:[%s1561 + $0x14] sm:$0xf]
      %v1568 = vld [vmem:[%s1561 + $0x18] sm:$0xf]
      %v1569 = vld [vmem:[%s1561 + $0x1c] sm:$0xf]
      %v1570 = vld [vmem:[%s1561 + $0x20] sm:$0xf]
      %v1571 = vld [vmem:[%s1561 + $0x24] sm:$0xf]
      %v1572 = vld [vmem:[%s1561 + $0x28] sm:$0xf]
      %v1573 = vld [vmem:[%s1561 + $0x2c] sm:$0xf]
      %v1574 = vld [vmem:[%s1561 + $0x30] sm:$0xf]
      %v1575 = vld [vmem:[%s1561 + $0x34] sm:$0xf]
      %v1576 = vld [vmem:[%s1561 + $0x38] sm:$0xf]
      %v1577 = vld [vmem:[%s1561 + $0x3c] sm:$0xf]
      %v1578 = vld [vmem:[%s1561 + $0x40] sm:$0xf]
      %v1579 = vld [vmem:[%s1561 + $0x44] sm:$0xf]
      %v1580 = vld [vmem:[%s1561 + $0x48] sm:$0xf]
      %v1581 = vld [vmem:[%s1561 + $0x4c] sm:$0xf]
      %v1582 = vld [vmem:[%s1561 + $0x50] sm:$0xf]
      %v1583 = vld [vmem:[%s1561 + $0x54] sm:$0xf]
      %v1584 = vld [vmem:[%s1561 + $0x58] sm:$0xf]
      %v1585 = vld [vmem:[%s1561 + $0x5c] sm:$0xf]
      %v1586 = vld [vmem:[%s1561 + $0x60] sm:$0xf]
      %v1587 = vld [vmem:[%s1561 + $0x64] sm:$0xf]
      %v1588 = vld [vmem:[%s1561 + $0x68] sm:$0xf]
      %v1589 = vld [vmem:[%s1561 + $0x6c] sm:$0xf]
      %v1590 = vld [vmem:[%s1561 + $0x70] sm:$0xf]
      %v1591 = vld [vmem:[%s1561 + $0x74] sm:$0xf]
      %v1592 = vld [vmem:[%s1561 + $0x78] sm:$0xf]
      %v1593 = vld [vmem:[%s1561 + $0x7c] sm:$0xf]
      %v1594 = vld [vmem:[%s1561 + $0x80] sm:$0xf]
      %v1595 = vld [vmem:[%s1561 + $0x84] sm:$0xf]
      %v1596 = vld [vmem:[%s1561 + $0x88] sm:$0xf]
      %v1597 = vld [vmem:[%s1561 + $0x8c] sm:$0xf]
      %v1598 = vld [vmem:[%s1561 + $0x90] sm:$0xf]
      %v1599 = vld [vmem:[%s1561 + $0x94] sm:$0xf]
      %v1600 = vld [vmem:[%s1561 + $0x98] sm:$0xf]
      %v1601 = vld [vmem:[%s1561 + $0x9c] sm:$0xf]
      %v1602 = vld [vmem:[%s1561 + $0xa0] sm:$0xf]
      %v1603 = vld [vmem:[%s1561 + $0xa4] sm:$0xf]
      %v1604 = vld [vmem:[%s1561 + $0xa8] sm:$0xf]
      %v1605 = vld [vmem:[%s1561 + $0xac] sm:$0xf]
      %v1606 = vld [vmem:[%s1561 + $0xb0] sm:$0xf]
      %v1607 = vld [vmem:[%s1561 + $0xb4] sm:$0xf]
      %v1608 = vld [vmem:[%s1561 + $0xb8] sm:$0xf]
      %v1609 = vld [vmem:[%s1561 + $0xbc] sm:$0xf]
      %v1642 = vunpack.c.l.b16 %v1038
      %v1643 = vunpack.c.h.b16 %v1038
      %v1644 = vunpack.c.l.b16 %v1039
      %v1645 = vunpack.c.l.b16 %v1040
      %v1646 = vunpack.c.h.b16 %v1040
      %v1647 = vunpack.c.l.b16 %v1041
      %v1648 = vunpack.c.l.b16 %v1042
      %v1649 = vunpack.c.h.b16 %v1042
      %v1650 = vunpack.c.l.b16 %v1043
      %v1651 = vunpack.c.l.b16 %v1044
      %v1652 = vunpack.c.h.b16 %v1044
      %v1653 = vunpack.c.l.b16 %v1045
      %v1654 = vunpack.c.l.b16 %v1046
      %v1655 = vunpack.c.h.b16 %v1046
      %v1656 = vunpack.c.l.b16 %v1047
      %v1657 = vunpack.c.l.b16 %v1048
      %v1658 = vunpack.c.h.b16 %v1048
      %v1659 = vunpack.c.l.b16 %v1049
      %v1660 = vunpack.c.l.b16 %v1050
      %v1661 = vunpack.c.h.b16 %v1050
      %v1662 = vunpack.c.l.b16 %v1051
      %v1663 = vunpack.c.l.b16 %v1052
      %v1664 = vunpack.c.h.b16 %v1052
      %v1665 = vunpack.c.l.b16 %v1053
      %v1666 = vunpack.c.l.b16 %v1054
      %v1667 = vunpack.c.h.b16 %v1054
      %v1668 = vunpack.c.l.b16 %v1055
      %v1669 = vunpack.c.l.b16 %v1056
      %v1670 = vunpack.c.h.b16 %v1056
      %v1671 = vunpack.c.l.b16 %v1057
      %v1672 = vunpack.c.l.b16 %v1058
      %v1673 = vunpack.c.h.b16 %v1058
      %v1674 = vunpack.c.l.b16 %v1059
      %v1675 = vunpack.c.l.b16 %v1060
      %v1676 = vunpack.c.h.b16 %v1060
      %v1677 = vunpack.c.l.b16 %v1061
      %v1678 = vunpack.c.l.b16 %v1062
      %v1679 = vunpack.c.h.b16 %v1062
      %v1680 = vunpack.c.l.b16 %v1063
      %v1681 = vunpack.c.l.b16 %v1064
      %v1682 = vunpack.c.h.b16 %v1064
      %v1683 = vunpack.c.l.b16 %v1065
      %v1684 = vunpack.c.l.b16 %v1066
      %v1685 = vunpack.c.h.b16 %v1066
      %v1686 = vunpack.c.l.b16 %v1067
      %v1687 = vunpack.c.l.b16 %v1068
      %v1688 = vunpack.c.h.b16 %v1068
      %v1689 = vunpack.c.l.b16 %v1069
      %v1690 = vpack.c.b16 %v1645, %v1642
      %v1691 = vpack.c.b16 %v1646, %v1643
      %v1692 = vpack.c.b16 %v1647, %v1644
      %v1693 = vpack.c.b16 %v1651, %v1648
      %v1694 = vpack.c.b16 %v1652, %v1649
      %v1695 = vpack.c.b16 %v1653, %v1650
      %v1696 = vpack.c.b16 %v1657, %v1654
      %v1697 = vpack.c.b16 %v1658, %v1655
      %v1698 = vpack.c.b16 %v1659, %v1656
      %v1699 = vpack.c.b16 %v1663, %v1660
      %v1700 = vpack.c.b16 %v1664, %v1661
      %v1701 = vpack.c.b16 %v1665, %v1662
      %v1702 = vpack.c.b16 %v1669, %v1666
      %v1703 = vpack.c.b16 %v1670, %v1667
      %v1704 = vpack.c.b16 %v1671, %v1668
      %v1705 = vpack.c.b16 %v1675, %v1672
      %v1706 = vpack.c.b16 %v1676, %v1673
      %v1707 = vpack.c.b16 %v1677, %v1674
      %v1708 = vpack.c.b16 %v1681, %v1678
      %v1709 = vpack.c.b16 %v1682, %v1679
      %v1710 = vpack.c.b16 %v1683, %v1680
      %v1711 = vpack.c.b16 %v1687, %v1684
      %v1712 = vpack.c.b16 %v1688, %v1685
      %v1713 = vpack.c.b16 %v1689, %v1686
      %v1786 = vunpack.c.l.b16 %v1562
      %v1787 = vunpack.c.l.b16 %v1563
      %v1788 = vunpack.c.l.b16 %v1564
      %v1789 = vunpack.c.l.b16 %v1565
      %v1790 = vunpack.c.l.b16 %v1566
      %v1791 = vunpack.c.l.b16 %v1567
      %v1792 = vunpack.c.l.b16 %v1568
      %v1793 = vunpack.c.l.b16 %v1569
      %v1794 = vunpack.c.l.b16 %v1570
      %v1795 = vunpack.c.l.b16 %v1571
      %v1796 = vunpack.c.l.b16 %v1572
      %v1797 = vunpack.c.l.b16 %v1573
      %v1798 = vunpack.c.l.b16 %v1574
      %v1799 = vunpack.c.l.b16 %v1575
      %v1800 = vunpack.c.l.b16 %v1576
      %v1801 = vunpack.c.l.b16 %v1577
      %v1802 = vunpack.c.l.b16 %v1578
      %v1803 = vunpack.c.l.b16 %v1579
      %v1804 = vunpack.c.l.b16 %v1580
      %v1805 = vunpack.c.l.b16 %v1581
      %v1806 = vunpack.c.l.b16 %v1582
      %v1807 = vunpack.c.l.b16 %v1583
      %v1808 = vunpack.c.l.b16 %v1584
      %v1809 = vunpack.c.l.b16 %v1585
      %v1810 = vunpack.c.l.b16 %v1586
      %v1811 = vunpack.c.l.b16 %v1587
      %v1812 = vunpack.c.l.b16 %v1588
      %v1813 = vunpack.c.l.b16 %v1589
      %v1814 = vunpack.c.l.b16 %v1590
      %v1815 = vunpack.c.l.b16 %v1591
      %v1816 = vunpack.c.l.b16 %v1592
      %v1817 = vunpack.c.l.b16 %v1593
      %v1818 = vunpack.c.l.b16 %v1594
      %v1819 = vunpack.c.l.b16 %v1595
      %v1820 = vunpack.c.l.b16 %v1596
      %v1821 = vunpack.c.l.b16 %v1597
      %v1822 = vunpack.c.l.b16 %v1598
      %v1823 = vunpack.c.l.b16 %v1599
      %v1824 = vunpack.c.l.b16 %v1600
      %v1825 = vunpack.c.l.b16 %v1601
      %v1826 = vunpack.c.l.b16 %v1602
      %v1827 = vunpack.c.l.b16 %v1603
      %v1828 = vunpack.c.l.b16 %v1604
      %v1829 = vunpack.c.l.b16 %v1605
      %v1830 = vunpack.c.l.b16 %v1606
      %v1831 = vunpack.c.l.b16 %v1607
      %v1832 = vunpack.c.l.b16 %v1608
      %v1833 = vunpack.c.l.b16 %v1609
      %v1834 = vpack.c.b16 %v1787, %v1786
      %v1835 = vpack.c.b16 %v1789, %v1788
      %v1836 = vpack.c.b16 %v1791, %v1790
      %v1837 = vpack.c.b16 %v1793, %v1792
      %v1838 = vpack.c.b16 %v1795, %v1794
      %v1839 = vpack.c.b16 %v1797, %v1796
      %v1840 = vpack.c.b16 %v1799, %v1798
      %v1841 = vpack.c.b16 %v1801, %v1800
      %v1842 = vpack.c.b16 %v1803, %v1802
      %v1843 = vpack.c.b16 %v1805, %v1804
      %v1844 = vpack.c.b16 %v1807, %v1806
      %v1845 = vpack.c.b16 %v1809, %v1808
      %v1846 = vpack.c.b16 %v1811, %v1810
      %v1847 = vpack.c.b16 %v1813, %v1812
      %v1848 = vpack.c.b16 %v1815, %v1814
      %v1849 = vpack.c.b16 %v1817, %v1816
      %v1850 = vpack.c.b16 %v1819, %v1818
      %v1851 = vpack.c.b16 %v1821, %v1820
      %v1852 = vpack.c.b16 %v1823, %v1822
      %v1853 = vpack.c.b16 %v1825, %v1824
      %v1854 = vpack.c.b16 %v1827, %v1826
      %v1855 = vpack.c.b16 %v1829, %v1828
      %v1856 = vpack.c.b16 %v1831, %v1830
      %v1857 = vpack.c.b16 %v1833, %v1832
      %1882 = vmatpush.bf16.msra.mxu0 %v1841
      %1883 = vmatpush.bf16.msra.mxu0 %v1840
      %1884 = vmatpush.bf16.msra.mxu0 %v1839
      %1885 = vmatpush.bf16.msra.mxu0 %v1838
      %1886 = vmatpush.bf16.msra.mxu0 %v1837
      %1887 = vmatpush.bf16.msra.mxu0 %v1836
      %1888 = vmatpush.bf16.msra.mxu0 %v1835
      %1889 = vmatpush.bf16.msra.mxu0 %v1834
      %1890 = vmatmul.bf16.gmra.mxu0 %v1690
      %v1891 = vpop.f32.mrf.mxu0
      %v1892 = vadd.f32 0.0, %v1891
      %v1893 = vpop.f32.mrf.mxu0
      %v1894 = vadd.f32 0.0, %v1893
      %1895 = vmatmul.bf16.gmra.mxu0 %v1693
      %v1896 = vpop.f32.mrf.mxu0
      %v1897 = vadd.f32 0.0, %v1896
      %v1898 = vpop.f32.mrf.mxu0
      %v1899 = vadd.f32 0.0, %v1898
      %1900 = vmatmul.bf16.gmra.mxu0 %v1696
      %v1901 = vpop.f32.mrf.mxu0
      %v1902 = vadd.f32 0.0, %v1901
      %v1903 = vpop.f32.mrf.mxu0
      %v1904 = vadd.f32 0.0, %v1903
      %1905 = vmatmul.bf16.gmra.mxu0 %v1699
      %v1906 = vpop.f32.mrf.mxu0
      %v1907 = vadd.f32 0.0, %v1906
      %v1908 = vpop.f32.mrf.mxu0
      %v1909 = vadd.f32 0.0, %v1908
      %1910 = vmatmul.bf16.gmra.mxu0 %v1702
      %v1911 = vpop.f32.mrf.mxu0
      %v1912 = vadd.f32 0.0, %v1911
      %v1913 = vpop.f32.mrf.mxu0
      %v1914 = vadd.f32 0.0, %v1913
      %1915 = vmatmul.bf16.gmra.mxu0 %v1705
      %v1916 = vpop.f32.mrf.mxu0
      %v1917 = vadd.f32 0.0, %v1916
      %v1918 = vpop.f32.mrf.mxu0
      %v1919 = vadd.f32 0.0, %v1918
      %1920 = vmatmul.bf16.gmra.mxu0 %v1708
      %v1921 = vpop.f32.mrf.mxu0
      %v1922 = vadd.f32 0.0, %v1921
      %v1923 = vpop.f32.mrf.mxu0
      %v1924 = vadd.f32 0.0, %v1923
      %1925 = vmatmul.bf16.gmra.mxu0 %v1711
      %v1926 = vpop.f32.mrf.mxu0
      %v1927 = vadd.f32 0.0, %v1926
      %v1928 = vpop.f32.mrf.mxu0
      %v1929 = vadd.f32 0.0, %v1928
      %1930 = vdwg.mxu0
      %1931 = vmatpush.bf16.msra.mxu0 %v1849
      %1932 = vmatpush.bf16.msra.mxu0 %v1848
      %1933 = vmatpush.bf16.msra.mxu0 %v1847
      %1934 = vmatpush.bf16.msra.mxu0 %v1846
      %1935 = vmatpush.bf16.msra.mxu0 %v1845
      %1936 = vmatpush.bf16.msra.mxu0 %v1844
      %1937 = vmatpush.bf16.msra.mxu0 %v1843
      %1938 = vmatpush.bf16.msra.mxu0 %v1842
      %1939 = vmatmul.bf16.gmra.mxu0 %v1691
      %v1940 = vpop.f32.mrf.mxu0
      %v1941 = vadd.f32 %v1892, %v1940
      %v1942 = vpop.f32.mrf.mxu0
      %v1943 = vadd.f32 %v1894, %v1942
      %1944 = vmatmul.bf16.gmra.mxu0 %v1694
      %v1945 = vpop.f32.mrf.mxu0
      %v1946 = vadd.f32 %v1897, %v1945
      %v1947 = vpop.f32.mrf.mxu0
      %v1948 = vadd.f32 %v1899, %v1947
      %1949 = vmatmul.bf16.gmra.mxu0 %v1697
      %v1950 = vpop.f32.mrf.mxu0
      %v1951 = vadd.f32 %v1902, %v1950
      %v1952 = vpop.f32.mrf.mxu0
      %v1953 = vadd.f32 %v1904, %v1952
      %1954 = vmatmul.bf16.gmra.mxu0 %v1700
      %v1955 = vpop.f32.mrf.mxu0
      %v1956 = vadd.f32 %v1907, %v1955
      %v1957 = vpop.f32.mrf.mxu0
      %v1958 = vadd.f32 %v1909, %v1957
      %1959 = vmatmul.bf16.gmra.mxu0 %v1703
      %v1960 = vpop.f32.mrf.mxu0
      %v1961 = vadd.f32 %v1912, %v1960
      %v1962 = vpop.f32.mrf.mxu0
      %v1963 = vadd.f32 %v1914, %v1962
      %1964 = vmatmul.bf16.gmra.mxu0 %v1706
      %v1965 = vpop.f32.mrf.mxu0
      %v1966 = vadd.f32 %v1917, %v1965
      %v1967 = vpop.f32.mrf.mxu0
      %v1968 = vadd.f32 %v1919, %v1967
      %1969 = vmatmul.bf16.gmra.mxu0 %v1709
      %v1970 = vpop.f32.mrf.mxu0
      %v1971 = vadd.f32 %v1922, %v1970
      %v1972 = vpop.f32.mrf.mxu0
      %v1973 = vadd.f32 %v1924, %v1972
      %1974 = vmatmul.bf16.gmra.mxu0 %v1712
      %v1975 = vpop.f32.mrf.mxu0
      %v1976 = vadd.f32 %v1927, %v1975
      %v1977 = vpop.f32.mrf.mxu0
      %v1978 = vadd.f32 %v1929, %v1977
      %1979 = vdwg.mxu0
      %1980 = vmatpush.bf16.msra.mxu0 %v1857
      %1981 = vmatpush.bf16.msra.mxu0 %v1856
      %1982 = vmatpush.bf16.msra.mxu0 %v1855
      %1983 = vmatpush.bf16.msra.mxu0 %v1854
      %1984 = vmatpush.bf16.msra.mxu0 %v1853
      %1985 = vmatpush.bf16.msra.mxu0 %v1852
      %1986 = vmatpush.bf16.msra.mxu0 %v1851
      %1987 = vmatpush.bf16.msra.mxu0 %v1850
      %1988 = vmatmul.bf16.gmra.mxu0 %v1692
      %v1989 = vpop.f32.mrf.mxu0
      %v1990 = vadd.f32 %v1941, %v1989
      %v1991 = vpop.f32.mrf.mxu0
      %v1992 = vadd.f32 %v1943, %v1991
      %1993 = vmatmul.bf16.gmra.mxu0 %v1695
      %v1994 = vpop.f32.mrf.mxu0
      %v1995 = vadd.f32 %v1946, %v1994
      %v1996 = vpop.f32.mrf.mxu0
      %v1997 = vadd.f32 %v1948, %v1996
      %1998 = vmatmul.bf16.gmra.mxu0 %v1698
      %v1999 = vpop.f32.mrf.mxu0
      %v2000 = vadd.f32 %v1951, %v1999
      %v2001 = vpop.f32.mrf.mxu0
      %v2002 = vadd.f32 %v1953, %v2001
      %2003 = vmatmul.bf16.gmra.mxu0 %v1701
      %v2004 = vpop.f32.mrf.mxu0
      %v2005 = vadd.f32 %v1956, %v2004
      %v2006 = vpop.f32.mrf.mxu0
      %v2007 = vadd.f32 %v1958, %v2006
      %2008 = vmatmul.bf16.gmra.mxu0 %v1704
      %v2009 = vpop.f32.mrf.mxu0
      %v2010 = vadd.f32 %v1961, %v2009
      %v2011 = vpop.f32.mrf.mxu0
      %v2012 = vadd.f32 %v1963, %v2011
      %2013 = vmatmul.bf16.gmra.mxu0 %v1707
      %v2014 = vpop.f32.mrf.mxu0
      %v2015 = vadd.f32 %v1966, %v2014
      %v2016 = vpop.f32.mrf.mxu0
      %v2017 = vadd.f32 %v1968, %v2016
      %2018 = vmatmul.bf16.gmra.mxu0 %v1710
      %v2019 = vpop.f32.mrf.mxu0
      %v2020 = vadd.f32 %v1971, %v2019
      %v2021 = vpop.f32.mrf.mxu0
      %v2022 = vadd.f32 %v1973, %v2021
      %2023 = vmatmul.bf16.gmra.mxu0 %v1713
      %v2024 = vpop.f32.mrf.mxu0
      %v2025 = vadd.f32 %v1976, %v2024
      %v2026 = vpop.f32.mrf.mxu0
      %v2027 = vadd.f32 %v1978, %v2026
      %2028 = vdwg.mxu0
      %v2063 = vunpack.c.l.b16 %v1479
      %v2064 = vunpack.c.h.b16 %v1479
      %v2065 = vunpack.c.l.b16 %v1480
      %v2066 = vunpack.c.l.b16 %v1481
      %v2067 = vunpack.c.h.b16 %v1481
      %v2068 = vunpack.c.l.b16 %v1482
      %v2069 = vunpack.c.l.b16 %v1483
      %v2070 = vunpack.c.h.b16 %v1483
      %v2071 = vunpack.c.l.b16 %v1484
      %v2072 = vunpack.c.l.b16 %v1485
      %v2073 = vunpack.c.h.b16 %v1485
      %v2074 = vunpack.c.l.b16 %v1486
      %v2075 = vunpack.c.l.b16 %v1487
      %v2076 = vunpack.c.h.b16 %v1487
      %v2077 = vunpack.c.l.b16 %v1488
      %v2078 = vunpack.c.l.b16 %v1489
      %v2079 = vunpack.c.h.b16 %v1489
      %v2080 = vunpack.c.l.b16 %v1490
      %v2081 = vunpack.c.l.b16 %v1491
      %v2082 = vunpack.c.h.b16 %v1491
      %v2083 = vunpack.c.l.b16 %v1492
      %v2084 = vunpack.c.l.b16 %v1493
      %v2085 = vunpack.c.h.b16 %v1493
      %v2086 = vunpack.c.l.b16 %v1494
      %v2087 = vunpack.c.l.b16 %v1495
      %v2088 = vunpack.c.h.b16 %v1495
      %v2089 = vunpack.c.l.b16 %v1496
      %v2090 = vunpack.c.l.b16 %v1497
      %v2091 = vunpack.c.h.b16 %v1497
      %v2092 = vunpack.c.l.b16 %v1498
      %v2093 = vunpack.c.l.b16 %v1499
      %v2094 = vunpack.c.h.b16 %v1499
      %v2095 = vunpack.c.l.b16 %v1500
      %v2096 = vunpack.c.l.b16 %v1501
      %v2097 = vunpack.c.h.b16 %v1501
      %v2098 = vunpack.c.l.b16 %v1502
      %v2099 = vunpack.c.l.b16 %v1503
      %v2100 = vunpack.c.h.b16 %v1503
      %v2101 = vunpack.c.l.b16 %v1504
      %v2102 = vunpack.c.l.b16 %v1505
      %v2103 = vunpack.c.h.b16 %v1505
      %v2104 = vunpack.c.l.b16 %v1506
      %v2105 = vunpack.c.l.b16 %v1507
      %v2106 = vunpack.c.h.b16 %v1507
      %v2107 = vunpack.c.l.b16 %v1508
      %v2108 = vunpack.c.l.b16 %v1509
      %v2109 = vunpack.c.h.b16 %v1509
      %v2110 = vunpack.c.l.b16 %v1510
      %v2111 = vunpack.c.l.b16 %v1511
      %v2112 = vunpack.c.h.b16 %v1511
      %v2113 = vunpack.c.l.b16 %v1512
      %v2114 = vpack.c.b16 %v2066, %v2063
      %v2115 = vpack.c.b16 %v2067, %v2064
      %v2116 = vpack.c.b16 %v2068, %v2065
      %v2117 = vpack.c.b16 %v2072, %v2069
      %v2118 = vpack.c.b16 %v2073, %v2070
      %v2119 = vpack.c.b16 %v2074, %v2071
      %v2120 = vpack.c.b16 %v2078, %v2075
      %v2121 = vpack.c.b16 %v2079, %v2076
      %v2122 = vpack.c.b16 %v2080, %v2077
      %v2123 = vpack.c.b16 %v2084, %v2081
      %v2124 = vpack.c.b16 %v2085, %v2082
      %v2125 = vpack.c.b16 %v2086, %v2083
      %v2126 = vpack.c.b16 %v2090, %v2087
      %v2127 = vpack.c.b16 %v2091, %v2088
      %v2128 = vpack.c.b16 %v2092, %v2089
      %v2129 = vpack.c.b16 %v2096, %v2093
      %v2130 = vpack.c.b16 %v2097, %v2094
      %v2131 = vpack.c.b16 %v2098, %v2095
      %v2132 = vpack.c.b16 %v2102, %v2099
      %v2133 = vpack.c.b16 %v2103, %v2100
      %v2134 = vpack.c.b16 %v2104, %v2101
      %v2135 = vpack.c.b16 %v2108, %v2105
      %v2136 = vpack.c.b16 %v2109, %v2106
      %v2137 = vpack.c.b16 %v2110, %v2107
      %v2138 = vpack.c.b16 %v2111, %v2111
      %v2139 = vpack.c.b16 %v2112, %v2112
      %v2140 = vpack.c.b16 %v2113, %v2113
      %vm2141 = vsmask.f32 4352
      %v2143 = vshrl.u32 %v2114, 16
      %v2145 = vrot.slane %v2143, 3
      %v2146 = vshll.u32 %v2114, 16
      %v2148 = vrot.slane %v2146, 4
      %v2149 = vor.u32 %v2145, %v2148
      %v2151 = vshrl.u32 %v2117, 16
      %v2153 = vrot.slane %v2151, 3
      %v2154 = vshll.u32 %v2117, 16
      %v2156 = vrot.slane %v2154, 4
      %v2157 = vor.u32 %v2153, %v2156
      %v2158 = vsel %vm2141, %v2149, %v2157
      %v2160 = vshrl.u32 %v2115, 16
      %v2162 = vrot.slane %v2160, 3
      %v2163 = vshll.u32 %v2115, 16
      %v2165 = vrot.slane %v2163, 4
      %v2166 = vor.u32 %v2162, %v2165
      %v2168 = vshrl.u32 %v2118, 16
      %v2170 = vrot.slane %v2168, 3
      %v2171 = vshll.u32 %v2118, 16
      %v2173 = vrot.slane %v2171, 4
      %v2174 = vor.u32 %v2170, %v2173
      %v2175 = vsel %vm2141, %v2166, %v2174
      %v2177 = vshrl.u32 %v2116, 16
      %v2179 = vrot.slane %v2177, 3
      %v2180 = vshll.u32 %v2116, 16
      %v2182 = vrot.slane %v2180, 4
      %v2183 = vor.u32 %v2179, %v2182
      %v2185 = vshrl.u32 %v2119, 16
      %v2187 = vrot.slane %v2185, 3
      %v2188 = vshll.u32 %v2119, 16
      %v2190 = vrot.slane %v2188, 4
      %v2191 = vor.u32 %v2187, %v2190
      %v2192 = vsel %vm2141, %v2183, %v2191
      %v2194 = vshrl.u32 %v2120, 16
      %v2196 = vrot.slane %v2194, 3
      %v2197 = vshll.u32 %v2120, 16
      %v2199 = vrot.slane %v2197, 4
      %v2200 = vor.u32 %v2196, %v2199
      %v2201 = vsel %vm2141, %v2157, %v2200
      %v2203 = vshrl.u32 %v2121, 16
      %v2205 = vrot.slane %v2203, 3
      %v2206 = vshll.u32 %v2121, 16
      %v2208 = vrot.slane %v2206, 4
      %v2209 = vor.u32 %v2205, %v2208
      %v2210 = vsel %vm2141, %v2174, %v2209
      %v2212 = vshrl.u32 %v2122, 16
      %v2214 = vrot.slane %v2212, 3
      %v2215 = vshll.u32 %v2122, 16
      %v2217 = vrot.slane %v2215, 4
      %v2218 = vor.u32 %v2214, %v2217
      %v2219 = vsel %vm2141, %v2191, %v2218
      %v2221 = vshrl.u32 %v2123, 16
      %v2223 = vrot.slane %v2221, 3
      %v2224 = vshll.u32 %v2123, 16
      %v2226 = vrot.slane %v2224, 4
      %v2227 = vor.u32 %v2223, %v2226
      %v2228 = vsel %vm2141, %v2200, %v2227
      %v2230 = vshrl.u32 %v2124, 16
      %v2232 = vrot.slane %v2230, 3
      %v2233 = vshll.u32 %v2124, 16
      %v2235 = vrot.slane %v2233, 4
      %v2236 = vor.u32 %v2232, %v2235
      %v2237 = vsel %vm2141, %v2209, %v2236
      %v2239 = vshrl.u32 %v2125, 16
      %v2241 = vrot.slane %v2239, 3
      %v2242 = vshll.u32 %v2125, 16
      %v2244 = vrot.slane %v2242, 4
      %v2245 = vor.u32 %v2241, %v2244
      %v2246 = vsel %vm2141, %v2218, %v2245
      %v2248 = vshrl.u32 %v2126, 16
      %v2250 = vrot.slane %v2248, 3
      %v2251 = vshll.u32 %v2126, 16
      %v2253 = vrot.slane %v2251, 4
      %v2254 = vor.u32 %v2250, %v2253
      %v2255 = vsel %vm2141, %v2227, %v2254
      %v2257 = vshrl.u32 %v2127, 16
      %v2259 = vrot.slane %v2257, 3
      %v2260 = vshll.u32 %v2127, 16
      %v2262 = vrot.slane %v2260, 4
      %v2263 = vor.u32 %v2259, %v2262
      %v2264 = vsel %vm2141, %v2236, %v2263
      %v2266 = vshrl.u32 %v2128, 16
      %v2268 = vrot.slane %v2266, 3
      %v2269 = vshll.u32 %v2128, 16
      %v2271 = vrot.slane %v2269, 4
      %v2272 = vor.u32 %v2268, %v2271
      %v2273 = vsel %vm2141, %v2245, %v2272
      %v2275 = vshrl.u32 %v2129, 16
      %v2277 = vrot.slane %v2275, 3
      %v2278 = vshll.u32 %v2129, 16
      %v2280 = vrot.slane %v2278, 4
      %v2281 = vor.u32 %v2277, %v2280
      %v2282 = vsel %vm2141, %v2254, %v2281
      %v2284 = vshrl.u32 %v2130, 16
      %v2286 = vrot.slane %v2284, 3
      %v2287 = vshll.u32 %v2130, 16
      %v2289 = vrot.slane %v2287, 4
      %v2290 = vor.u32 %v2286, %v2289
      %v2291 = vsel %vm2141, %v2263, %v2290
      %v2293 = vshrl.u32 %v2131, 16
      %v2295 = vrot.slane %v2293, 3
      %v2296 = vshll.u32 %v2131, 16
      %v2298 = vrot.slane %v2296, 4
      %v2299 = vor.u32 %v2295, %v2298
      %v2300 = vsel %vm2141, %v2272, %v2299
      %v2302 = vshrl.u32 %v2132, 16
      %v2304 = vrot.slane %v2302, 3
      %v2305 = vshll.u32 %v2132, 16
      %v2307 = vrot.slane %v2305, 4
      %v2308 = vor.u32 %v2304, %v2307
      %v2309 = vsel %vm2141, %v2281, %v2308
      %v2311 = vshrl.u32 %v2133, 16
      %v2313 = vrot.slane %v2311, 3
      %v2314 = vshll.u32 %v2133, 16
      %v2316 = vrot.slane %v2314, 4
      %v2317 = vor.u32 %v2313, %v2316
      %v2318 = vsel %vm2141, %v2290, %v2317
      %v2320 = vshrl.u32 %v2134, 16
      %v2322 = vrot.slane %v2320, 3
      %v2323 = vshll.u32 %v2134, 16
      %v2325 = vrot.slane %v2323, 4
      %v2326 = vor.u32 %v2322, %v2325
      %v2327 = vsel %vm2141, %v2299, %v2326
      %v2329 = vshrl.u32 %v2135, 16
      %v2331 = vrot.slane %v2329, 3
      %v2332 = vshll.u32 %v2135, 16
      %v2334 = vrot.slane %v2332, 4
      %v2335 = vor.u32 %v2331, %v2334
      %v2336 = vsel %vm2141, %v2308, %v2335
      %v2338 = vshrl.u32 %v2136, 16
      %v2340 = vrot.slane %v2338, 3
      %v2341 = vshll.u32 %v2136, 16
      %v2343 = vrot.slane %v2341, 4
      %v2344 = vor.u32 %v2340, %v2343
      %v2345 = vsel %vm2141, %v2317, %v2344
      %v2347 = vshrl.u32 %v2137, 16
      %v2349 = vrot.slane %v2347, 3
      %v2350 = vshll.u32 %v2137, 16
      %v2352 = vrot.slane %v2350, 4
      %v2353 = vor.u32 %v2349, %v2352
      %v2354 = vsel %vm2141, %v2326, %v2353
      %v2356 = vshrl.u32 %v2138, 16
      %v2358 = vrot.slane %v2356, 3
      %v2359 = vshll.u32 %v2138, 16
      %v2361 = vrot.slane %v2359, 4
      %v2362 = vor.u32 %v2358, %v2361
      %v2363 = vsel %vm2141, %v2335, %v2362
      %v2365 = vshrl.u32 %v2139, 16
      %v2367 = vrot.slane %v2365, 3
      %v2368 = vshll.u32 %v2139, 16
      %v2370 = vrot.slane %v2368, 4
      %v2371 = vor.u32 %v2367, %v2370
      %v2372 = vsel %vm2141, %v2344, %v2371
      %v2374 = vshrl.u32 %v2140, 16
      %v2376 = vrot.slane %v2374, 3
      %v2377 = vshll.u32 %v2140, 16
      %v2379 = vrot.slane %v2377, 4
      %v2380 = vor.u32 %v2376, %v2379
      %v2381 = vsel %vm2141, %v2353, %v2380
      %v2454 = vunpack.c.l.b16 %v1513
      %v2455 = vunpack.c.l.b16 %v1514
      %v2456 = vunpack.c.l.b16 %v1515
      %v2457 = vunpack.c.l.b16 %v1516
      %v2458 = vunpack.c.l.b16 %v1517
      %v2459 = vunpack.c.l.b16 %v1518
      %v2460 = vunpack.c.l.b16 %v1519
      %v2461 = vunpack.c.l.b16 %v1520
      %v2462 = vunpack.c.l.b16 %v1521
      %v2463 = vunpack.c.l.b16 %v1522
      %v2464 = vunpack.c.l.b16 %v1523
      %v2465 = vunpack.c.l.b16 %v1524
      %v2466 = vunpack.c.l.b16 %v1525
      %v2467 = vunpack.c.l.b16 %v1526
      %v2468 = vunpack.c.l.b16 %v1527
      %v2469 = vunpack.c.l.b16 %v1528
      %v2470 = vunpack.c.l.b16 %v1529
      %v2471 = vunpack.c.l.b16 %v1530
      %v2472 = vunpack.c.l.b16 %v1531
      %v2473 = vunpack.c.l.b16 %v1532
      %v2474 = vunpack.c.l.b16 %v1533
      %v2475 = vunpack.c.l.b16 %v1534
      %v2476 = vunpack.c.l.b16 %v1535
      %v2477 = vunpack.c.l.b16 %v1536
      %v2478 = vunpack.c.l.b16 %v1537
      %v2479 = vunpack.c.l.b16 %v1538
      %v2480 = vunpack.c.l.b16 %v1539
      %v2481 = vunpack.c.l.b16 %v1540
      %v2482 = vunpack.c.l.b16 %v1541
      %v2483 = vunpack.c.l.b16 %v1542
      %v2484 = vunpack.c.l.b16 %v1543
      %v2485 = vunpack.c.l.b16 %v1544
      %v2486 = vunpack.c.l.b16 %v1545
      %v2487 = vunpack.c.l.b16 %v1546
      %v2488 = vunpack.c.l.b16 %v1547
      %v2489 = vunpack.c.l.b16 %v1548
      %v2490 = vunpack.c.l.b16 %v1549
      %v2491 = vunpack.c.l.b16 %v1550
      %v2492 = vunpack.c.l.b16 %v1551
      %v2493 = vunpack.c.l.b16 %v1552
      %v2494 = vunpack.c.l.b16 %v1553
      %v2495 = vunpack.c.l.b16 %v1554
      %v2496 = vunpack.c.l.b16 %v1555
      %v2497 = vunpack.c.l.b16 %v1556
      %v2498 = vunpack.c.l.b16 %v1557
      %v2499 = vunpack.c.l.b16 %v1558
      %v2500 = vunpack.c.l.b16 %v1559
      %v2501 = vunpack.c.l.b16 %v1560
      %v2502 = vpack.c.b16 %v2455, %v2454
      %v2503 = vpack.c.b16 %v2457, %v2456
      %v2504 = vpack.c.b16 %v2459, %v2458
      %v2505 = vpack.c.b16 %v2461, %v2460
      %v2506 = vpack.c.b16 %v2463, %v2462
      %v2507 = vpack.c.b16 %v2465, %v2464
      %v2508 = vpack.c.b16 %v2467, %v2466
      %v2509 = vpack.c.b16 %v2469, %v2468
      %v2510 = vpack.c.b16 %v2471, %v2470
      %v2511 = vpack.c.b16 %v2473, %v2472
      %v2512 = vpack.c.b16 %v2475, %v2474
      %v2513 = vpack.c.b16 %v2477, %v2476
      %v2514 = vpack.c.b16 %v2479, %v2478
      %v2515 = vpack.c.b16 %v2481, %v2480
      %v2516 = vpack.c.b16 %v2483, %v2482
      %v2517 = vpack.c.b16 %v2485, %v2484
      %v2518 = vpack.c.b16 %v2487, %v2486
      %v2519 = vpack.c.b16 %v2489, %v2488
      %v2520 = vpack.c.b16 %v2491, %v2490
      %v2521 = vpack.c.b16 %v2493, %v2492
      %v2522 = vpack.c.b16 %v2495, %v2494
      %v2523 = vpack.c.b16 %v2497, %v2496
      %v2524 = vpack.c.b16 %v2499, %v2498
      %v2525 = vpack.c.b16 %v2501, %v2500
      %2550 = vmatpush.bf16.msra.mxu0 %v2509
      %2551 = vmatpush.bf16.msra.mxu0 %v2508
      %2552 = vmatpush.bf16.msra.mxu0 %v2507
      %2553 = vmatpush.bf16.msra.mxu0 %v2506
      %2554 = vmatpush.bf16.msra.mxu0 %v2505
      %2555 = vmatpush.bf16.msra.mxu0 %v2504
      %2556 = vmatpush.bf16.msra.mxu0 %v2503
      %2557 = vmatpush.bf16.msra.mxu0 %v2502
      %2558 = vmatmul.bf16.gmra.mxu0 %v2158
      %v2559 = vpop.f32.mrf.mxu0
      %v2560 = vadd.f32 %v1990, %v2559
      %v2561 = vpop.f32.mrf.mxu0
      %v2562 = vadd.f32 %v1992, %v2561
      %2563 = vmatmul.bf16.gmra.mxu0 %v2201
      %v2564 = vpop.f32.mrf.mxu0
      %v2565 = vadd.f32 %v1995, %v2564
      %v2566 = vpop.f32.mrf.mxu0
      %v2567 = vadd.f32 %v1997, %v2566
      %2568 = vmatmul.bf16.gmra.mxu0 %v2228
      %v2569 = vpop.f32.mrf.mxu0
      %v2570 = vadd.f32 %v2000, %v2569
      %v2571 = vpop.f32.mrf.mxu0
      %v2572 = vadd.f32 %v2002, %v2571
      %2573 = vmatmul.bf16.gmra.mxu0 %v2255
      %v2574 = vpop.f32.mrf.mxu0
      %v2575 = vadd.f32 %v2005, %v2574
      %v2576 = vpop.f32.mrf.mxu0
      %v2577 = vadd.f32 %v2007, %v2576
      %2578 = vmatmul.bf16.gmra.mxu0 %v2282
      %v2579 = vpop.f32.mrf.mxu0
      %v2580 = vadd.f32 %v2010, %v2579
      %v2581 = vpop.f32.mrf.mxu0
      %v2582 = vadd.f32 %v2012, %v2581
      %2583 = vmatmul.bf16.gmra.mxu0 %v2309
      %v2584 = vpop.f32.mrf.mxu0
      %v2585 = vadd.f32 %v2015, %v2584
      %v2586 = vpop.f32.mrf.mxu0
      %v2587 = vadd.f32 %v2017, %v2586
      %2588 = vmatmul.bf16.gmra.mxu0 %v2336
      %v2589 = vpop.f32.mrf.mxu0
      %v2590 = vadd.f32 %v2020, %v2589
      %v2591 = vpop.f32.mrf.mxu0
      %v2592 = vadd.f32 %v2022, %v2591
      %2593 = vmatmul.bf16.gmra.mxu0 %v2363
      %v2594 = vpop.f32.mrf.mxu0
      %v2595 = vadd.f32 %v2025, %v2594
      %v2596 = vpop.f32.mrf.mxu0
      %v2597 = vadd.f32 %v2027, %v2596
      %2598 = vdwg.mxu0
      %2599 = vmatpush.bf16.msra.mxu0 %v2517
      %2600 = vmatpush.bf16.msra.mxu0 %v2516
      %2601 = vmatpush.bf16.msra.mxu0 %v2515
      %2602 = vmatpush.bf16.msra.mxu0 %v2514
      %2603 = vmatpush.bf16.msra.mxu0 %v2513
      %2604 = vmatpush.bf16.msra.mxu0 %v2512
      %2605 = vmatpush.bf16.msra.mxu0 %v2511
      %2606 = vmatpush.bf16.msra.mxu0 %v2510
      %2607 = vmatmul.bf16.gmra.mxu0 %v2175
      %v2608 = vpop.f32.mrf.mxu0
      %v2609 = vadd.f32 %v2560, %v2608
      %v2610 = vpop.f32.mrf.mxu0
      %v2611 = vadd.f32 %v2562, %v2610
      %2612 = vmatmul.bf16.gmra.mxu0 %v2210
      %v2613 = vpop.f32.mrf.mxu0
      %v2614 = vadd.f32 %v2565, %v2613
      %v2615 = vpop.f32.mrf.mxu0
      %v2616 = vadd.f32 %v2567, %v2615
      %2617 = vmatmul.bf16.gmra.mxu0 %v2237
      %v2618 = vpop.f32.mrf.mxu0
      %v2619 = vadd.f32 %v2570, %v2618
      %v2620 = vpop.f32.mrf.mxu0
      %v2621 = vadd.f32 %v2572, %v2620
      %2622 = vmatmul.bf16.gmra.mxu0 %v2264
      %v2623 = vpop.f32.mrf.mxu0
      %v2624 = vadd.f32 %v2575, %v2623
      %v2625 = vpop.f32.mrf.mxu0
      %v2626 = vadd.f32 %v2577, %v2625
      %2627 = vmatmul.bf16.gmra.mxu0 %v2291
      %v2628 = vpop.f32.mrf.mxu0
      %v2629 = vadd.f32 %v2580, %v2628
      %v2630 = vpop.f32.mrf.mxu0
      %v2631 = vadd.f32 %v2582, %v2630
      %2632 = vmatmul.bf16.gmra.mxu0 %v2318
      %v2633 = vpop.f32.mrf.mxu0
      %v2634 = vadd.f32 %v2585, %v2633
      %v2635 = vpop.f32.mrf.mxu0
      %v2636 = vadd.f32 %v2587, %v2635
      %2637 = vmatmul.bf16.gmra.mxu0 %v2345
      %v2638 = vpop.f32.mrf.mxu0
      %v2639 = vadd.f32 %v2590, %v2638
      %v2640 = vpop.f32.mrf.mxu0
      %v2641 = vadd.f32 %v2592, %v2640
      %2642 = vmatmul.bf16.gmra.mxu0 %v2372
      %v2643 = vpop.f32.mrf.mxu0
      %v2644 = vadd.f32 %v2595, %v2643
      %v2645 = vpop.f32.mrf.mxu0
      %v2646 = vadd.f32 %v2597, %v2645
      %2647 = vdwg.mxu0
      %2648 = vmatpush.bf16.msra.mxu0 %v2525
      %2649 = vmatpush.bf16.msra.mxu0 %v2524
      %2650 = vmatpush.bf16.msra.mxu0 %v2523
      %2651 = vmatpush.bf16.msra.mxu0 %v2522
      %2652 = vmatpush.bf16.msra.mxu0 %v2521
      %2653 = vmatpush.bf16.msra.mxu0 %v2520
      %2654 = vmatpush.bf16.msra.mxu0 %v2519
      %2655 = vmatpush.bf16.msra.mxu0 %v2518
      %2656 = vmatmul.bf16.gmra.mxu0 %v2192
      %v2657 = vpop.f32.mrf.mxu0
      %v2658 = vadd.f32 %v2609, %v2657
      %v2659 = vpop.f32.mrf.mxu0
      %v2660 = vadd.f32 %v2611, %v2659
      %2661 = vmatmul.bf16.gmra.mxu0 %v2219
      %v2662 = vpop.f32.mrf.mxu0
      %v2663 = vadd.f32 %v2614, %v2662
      %v2664 = vpop.f32.mrf.mxu0
      %v2665 = vadd.f32 %v2616, %v2664
      %2666 = vmatmul.bf16.gmra.mxu0 %v2246
      %v2667 = vpop.f32.mrf.mxu0
      %v2668 = vadd.f32 %v2619, %v2667
      %v2669 = vpop.f32.mrf.mxu0
      %v2670 = vadd.f32 %v2621, %v2669
      %2671 = vmatmul.bf16.gmra.mxu0 %v2273
      %v2672 = vpop.f32.mrf.mxu0
      %v2673 = vadd.f32 %v2624, %v2672
      %v2674 = vpop.f32.mrf.mxu0
      %v2675 = vadd.f32 %v2626, %v2674
      %2676 = vmatmul.bf16.gmra.mxu0 %v2300
      %v2677 = vpop.f32.mrf.mxu0
      %v2678 = vadd.f32 %v2629, %v2677
      %v2679 = vpop.f32.mrf.mxu0
      %v2680 = vadd.f32 %v2631, %v2679
      %2681 = vmatmul.bf16.gmra.mxu0 %v2327
      %v2682 = vpop.f32.mrf.mxu0
      %v2683 = vadd.f32 %v2634, %v2682
      %v2684 = vpop.f32.mrf.mxu0
      %v2685 = vadd.f32 %v2636, %v2684
      %2686 = vmatmul.bf16.gmra.mxu0 %v2354
      %v2687 = vpop.f32.mrf.mxu0
      %v2688 = vadd.f32 %v2639, %v2687
      %v2689 = vpop.f32.mrf.mxu0
      %v2690 = vadd.f32 %v2641, %v2689
      %2691 = vmatmul.bf16.gmra.mxu0 %v2381
      %v2692 = vpop.f32.mrf.mxu0
      %v2693 = vadd.f32 %v2644, %v2692
      %v2694 = vpop.f32.mrf.mxu0
      %v2695 = vadd.f32 %v2646, %v2694
      %2696 = vdwg.mxu0
      %v2697 = vld [vmem:[#allocation2 + $0x18] sm:$0xff]
      %v2698 = vld [vmem:[#allocation2 + $0x20] sm:$0xf]
      %v2699 = vld [vmem:[#allocation2 + $0x24] sm:$0xff]
      %v2700 = vld [vmem:[#allocation2 + $0x2c] sm:$0xf]
      %v2701 = vld [vmem:[#allocation2 + $0x30] sm:$0xff]
      %v2702 = vld [vmem:[#allocation2 + $0x38] sm:$0xf]
      %v2703 = vld [vmem:[#allocation2 + $0x3c] sm:$0xff]
      %v2704 = vld [vmem:[#allocation2 + $0x44] sm:$0xf]
      %v2705 = vld [vmem:[#allocation2 + $0x48] sm:$0xff]
      %v2706 = vld [vmem:[#allocation2 + $0x50] sm:$0xf]
      %v2707 = vld [vmem:[#allocation2 + $0x54] sm:$0xff]
      %v2708 = vld [vmem:[#allocation2 + $0x5c] sm:$0xf]
      %v2709 = vld [vmem:[#allocation2 + $0x60] sm:$0xff]
      %v2710 = vld [vmem:[#allocation2 + $0x68] sm:$0xf]
      %v2711 = vld [vmem:[#allocation2 + $0x6c] sm:$0xff]
      %v2712 = vld [vmem:[#allocation2 + $0x74] sm:$0xf]
      %v2713 = vld [vmem:[#allocation2 + $0x78] sm:$0xff]
      %v2714 = vld [vmem:[#allocation2 + $0x80] sm:$0xf]
      %v2715 = vld [vmem:[#allocation2 + $0x84] sm:$0xff]
      %v2716 = vld [vmem:[#allocation2 + $0x8c] sm:$0xf]
      %v2717 = vld [vmem:[#allocation2 + $0x90] sm:$0xff]
      %v2718 = vld [vmem:[#allocation2 + $0x98] sm:$0xf]
      %v2719 = vld [vmem:[#allocation2 + $0x9c] sm:$0xff]
      %v2720 = vld [vmem:[#allocation2 + $0xa4] sm:$0xf]
      %v2721 = vld [vmem:[#allocation2 + $0xa8] sm:$0xff]
      %v2722 = vld [vmem:[#allocation2 + $0xb0] sm:$0xf]
      %v2723 = vld [vmem:[#allocation2 + $0xb4] sm:$0xff]
      %v2724 = vld [vmem:[#allocation2 + $0xbc] sm:$0xf]
      %v2725 = vld [vmem:[#allocation2 + $0xc0] sm:$0xff]
      %v2726 = vld [vmem:[#allocation2 + $0xc8] sm:$0xf]
      %v2727 = vld [vmem:[#allocation2 + $0xcc] sm:$0xff]
      %v2728 = vld [vmem:[#allocation2 + $0xd4] sm:$0xf]
      %v2729 = vld [vmem:[#allocation2 + $0xd8] sm:$0x11]
      %v2730 = vld [vmem:[#allocation2 + $0xe0] sm:$0x1]
      %v2731 = vadd.s32 %v1020, 1
      %v2732 = vadd.s32 %v1021, 1
      %v2733 = vadd.s32 %v1022, 1
      %v2734 = vadd.s32 %v1023, 1
      %v2735 = vadd.s32 %v1024, 1
      %v2736 = vadd.s32 %v1025, 1
      %v2737 = vadd.s32 %v1026, 1
      %v2738 = vadd.s32 %v1027, 1
      %v2739 = vadd.s32 %v1028, 1
      %v2740 = vadd.s32 %v1029, 1
      %v2741 = vadd.s32 %v1030, 1
      %v2742 = vadd.s32 %v1031, 1
      %v2743 = vadd.s32 %v1032, 1
      %v2744 = vadd.s32 %v1033, 1
      %v2745 = vadd.s32 %v1034, 1
      %v2746 = vadd.s32 %v1035, 1
      %vm2747 = vcmp.ge.s32.totalorder %v2731, 0
      %vm2748 = vcmp.ge.s32.totalorder %v2732, 0
      %vm2749 = vcmp.ge.s32.totalorder %v2733, 0
      %vm2750 = vcmp.ge.s32.totalorder %v2734, 0
      %vm2751 = vcmp.ge.s32.totalorder %v2735, 0
      %vm2752 = vcmp.ge.s32.totalorder %v2736, 0
      %vm2753 = vcmp.ge.s32.totalorder %v2737, 0
      %vm2754 = vcmp.ge.s32.totalorder %v2738, 0
      %vm2755 = vcmp.ge.s32.totalorder %v2739, 0
      %vm2756 = vcmp.ge.s32.totalorder %v2740, 0
      %vm2757 = vcmp.ge.s32.totalorder %v2741, 0
      %vm2758 = vcmp.ge.s32.totalorder %v2742, 0
      %vm2759 = vcmp.ge.s32.totalorder %v2743, 0
      %vm2760 = vcmp.ge.s32.totalorder %v2744, 0
      %vm2761 = vcmp.ge.s32.totalorder %v2745, 0
      %vm2762 = vcmp.ge.s32.totalorder %v2746, 0
      %vm2763 = vcmp.lt.s32.totalorder %v2731, 16
      %vm2764 = vcmp.lt.s32.totalorder %v2732, 16
      %vm2765 = vcmp.lt.s32.totalorder %v2733, 16
      %vm2766 = vcmp.lt.s32.totalorder %v2734, 16
      %vm2767 = vcmp.lt.s32.totalorder %v2735, 16
      %vm2768 = vcmp.lt.s32.totalorder %v2736, 16
      %vm2769 = vcmp.lt.s32.totalorder %v2737, 16
      %vm2770 = vcmp.lt.s32.totalorder %v2738, 16
      %vm2771 = vcmp.lt.s32.totalorder %v2739, 16
      %vm2772 = vcmp.lt.s32.totalorder %v2740, 16
      %vm2773 = vcmp.lt.s32.totalorder %v2741, 16
      %vm2774 = vcmp.lt.s32.totalorder %v2742, 16
      %vm2775 = vcmp.lt.s32.totalorder %v2743, 16
      %vm2776 = vcmp.lt.s32.totalorder %v2744, 16
      %vm2777 = vcmp.lt.s32.totalorder %v2745, 16
      %vm2778 = vcmp.lt.s32.totalorder %v2746, 16
      %vm2779 = vmand %vm2747, %vm2763
      %vm2780 = vmand %vm2748, %vm2764
      %vm2781 = vmand %vm2749, %vm2765
      %vm2782 = vmand %vm2750, %vm2766
      %vm2783 = vmand %vm2751, %vm2767
      %vm2784 = vmand %vm2752, %vm2768
      %vm2785 = vmand %vm2753, %vm2769
      %vm2786 = vmand %vm2754, %vm2770
      %vm2787 = vmand %vm2755, %vm2771
      %vm2788 = vmand %vm2756, %vm2772
      %vm2789 = vmand %vm2757, %vm2773
      %vm2790 = vmand %vm2758, %vm2774
      %vm2791 = vmand %vm2759, %vm2775
      %vm2792 = vmand %vm2760, %vm2776
      %vm2793 = vmand %vm2761, %vm2777
      %vm2794 = vmand %vm2762, %vm2778
      %v2795 = vsel %vm2779, 1, 0
      %v2796 = vsel %vm2780, 1, 0
      %v2797 = vsel %vm2781, 1, 0
      %v2798 = vsel %vm2782, 1, 0
      %v2799 = vsel %vm2783, 1, 0
      %v2800 = vsel %vm2784, 1, 0
      %v2801 = vsel %vm2785, 1, 0
      %v2802 = vsel %vm2786, 1, 0
      %v2803 = vsel %vm2787, 1, 0
      %v2804 = vsel %vm2788, 1, 0
      %v2805 = vsel %vm2789, 1, 0
      %v2806 = vsel %vm2790, 1, 0
      %v2807 = vsel %vm2791, 1, 0
      %v2808 = vsel %vm2792, 1, 0
      %v2809 = vsel %vm2793, 1, 0
      %v2810 = vsel %vm2794, 1, 0
      %vm2811 = vcmp.eq.s32.totalorder %v2795, 1
      %vm2812 = vcmp.eq.s32.totalorder %v2796, 1
      %vm2813 = vcmp.eq.s32.totalorder %v2797, 1
      %vm2814 = vcmp.eq.s32.totalorder %v2798, 1
      %vm2815 = vcmp.eq.s32.totalorder %v2799, 1
      %vm2816 = vcmp.eq.s32.totalorder %v2800, 1
      %vm2817 = vcmp.eq.s32.totalorder %v2801, 1
      %vm2818 = vcmp.eq.s32.totalorder %v2802, 1
      %vm2819 = vcmp.eq.s32.totalorder %v2803, 1
      %vm2820 = vcmp.eq.s32.totalorder %v2804, 1
      %vm2821 = vcmp.eq.s32.totalorder %v2805, 1
      %vm2822 = vcmp.eq.s32.totalorder %v2806, 1
      %vm2823 = vcmp.eq.s32.totalorder %v2807, 1
      %vm2824 = vcmp.eq.s32.totalorder %v2808, 1
      %vm2825 = vcmp.eq.s32.totalorder %v2809, 1
      %vm2826 = vcmp.eq.s32.totalorder %v2810, 1
      %vm2827 = vmpackc.low %vm2811, %vm2811
      %vm2828 = vmpackc.low %vm2812, %vm2812
      %vm2829 = vmpackc.low %vm2813, %vm2813
      %vm2830 = vmpackc.low %vm2814, %vm2814
      %vm2831 = vmpackc.low %vm2815, %vm2815
      %vm2832 = vmpackc.low %vm2816, %vm2816
      %vm2833 = vmpackc.low %vm2817, %vm2817
      %vm2834 = vmpackc.low %vm2818, %vm2818
      %vm2835 = vmpackc.low %vm2819, %vm2819
      %vm2836 = vmpackc.low %vm2820, %vm2820
      %vm2837 = vmpackc.low %vm2821, %vm2821
      %vm2838 = vmpackc.low %vm2822, %vm2822
      %vm2839 = vmpackc.low %vm2823, %vm2823
      %vm2840 = vmpackc.low %vm2824, %vm2824
      %vm2841 = vmpackc.low %vm2825, %vm2825
      %vm2842 = vmpackc.low %vm2826, %vm2826
      %v2843 = vsel %vm2827, 65537, 0
      %v2844 = vsel %vm2828, 65537, 0
      %v2845 = vsel %vm2829, 65537, 0
      %v2846 = vsel %vm2830, 65537, 0
      %v2847 = vsel %vm2831, 65537, 0
      %v2848 = vsel %vm2832, 65537, 0
      %v2849 = vsel %vm2833, 65537, 0
      %v2850 = vsel %vm2834, 65537, 0
      %v2851 = vsel %vm2835, 65537, 0
      %v2852 = vsel %vm2836, 65537, 0
      %v2853 = vsel %vm2837, 65537, 0
      %v2854 = vsel %vm2838, 65537, 0
      %v2855 = vsel %vm2839, 65537, 0
      %v2856 = vsel %vm2840, 65537, 0
      %v2857 = vsel %vm2841, 65537, 0
      %v2858 = vsel %vm2842, 65537, 0
      %vm2859 = vsmask.f32 256
      %vm2860 = vsmask.f32 4368
      %vm2861 = vmor %vm2859, %vm2860
      %v2863 = vshrl.u32 %v2843, 16
      %v2865 = vrot.slane %v2863, 7
      %v2866 = vshll.u32 %v2843, 16
      %v2868 = vor.u32 %v2865, %v2866
      %v2869 = vrot.slane %v2865, 4
      %v2871 = vshrl.u32 %v2844, 16
      %v2873 = vrot.slane %v2871, 7
      %v2874 = vshll.u32 %v2844, 16
      %v2876 = vor.u32 %v2873, %v2874
      %v2877 = vsel %vm2861, %v2869, %v2876
      %v2878 = vrot.slane %v2873, 4
      %v2880 = vshrl.u32 %v2845, 16
      %v2882 = vrot.slane %v2880, 7
      %v2883 = vshll.u32 %v2845, 16
      %v2885 = vor.u32 %v2882, %v2883
      %v2886 = vsel %vm2861, %v2878, %v2885
      %v2887 = vrot.slane %v2882, 4
      %v2889 = vshrl.u32 %v2846, 16
      %v2891 = vrot.slane %v2889, 7
      %v2892 = vshll.u32 %v2846, 16
      %v2894 = vor.u32 %v2891, %v2892
      %v2895 = vsel %vm2861, %v2887, %v2894
      %v2896 = vrot.slane %v2891, 4
      %v2898 = vshrl.u32 %v2847, 16
      %v2900 = vrot.slane %v2898, 7
      %v2901 = vshll.u32 %v2847, 16
      %v2903 = vor.u32 %v2900, %v2901
      %v2904 = vsel %vm2861, %v2896, %v2903
      %v2905 = vrot.slane %v2900, 4
      %v2907 = vshrl.u32 %v2848, 16
      %v2909 = vrot.slane %v2907, 7
      %v2910 = vshll.u32 %v2848, 16
      %v2912 = vor.u32 %v2909, %v2910
      %v2913 = vsel %vm2861, %v2905, %v2912
      %v2914 = vrot.slane %v2909, 4
      %v2916 = vshrl.u32 %v2849, 16
      %v2918 = vrot.slane %v2916, 7
      %v2919 = vshll.u32 %v2849, 16
      %v2921 = vor.u32 %v2918, %v2919
      %v2922 = vsel %vm2861, %v2914, %v2921
      %v2923 = vrot.slane %v2918, 4
      %v2925 = vshrl.u32 %v2850, 16
      %v2927 = vrot.slane %v2925, 7
      %v2928 = vshll.u32 %v2850, 16
      %v2930 = vor.u32 %v2927, %v2928
      %v2931 = vsel %vm2861, %v2923, %v2930
      %v2932 = vrot.slane %v2927, 4
      %v2934 = vshrl.u32 %v2851, 16
      %v2936 = vrot.slane %v2934, 7
      %v2937 = vshll.u32 %v2851, 16
      %v2939 = vor.u32 %v2936, %v2937
      %v2940 = vsel %vm2861, %v2932, %v2939
      %v2941 = vrot.slane %v2936, 4
      %v2943 = vshrl.u32 %v2852, 16
      %v2945 = vrot.slane %v2943, 7
      %v2946 = vshll.u32 %v2852, 16
      %v2948 = vor.u32 %v2945, %v2946
      %v2949 = vsel %vm2861, %v2941, %v2948
      %v2950 = vrot.slane %v2945, 4
      %v2952 = vshrl.u32 %v2853, 16
      %v2954 = vrot.slane %v2952, 7
      %v2955 = vshll.u32 %v2853, 16
      %v2957 = vor.u32 %v2954, %v2955
      %v2958 = vsel %vm2861, %v2950, %v2957
      %v2959 = vrot.slane %v2954, 4
      %v2961 = vshrl.u32 %v2854, 16
      %v2963 = vrot.slane %v2961, 7
      %v2964 = vshll.u32 %v2854, 16
      %v2966 = vor.u32 %v2963, %v2964
      %v2967 = vsel %vm2861, %v2959, %v2966
      %v2968 = vrot.slane %v2963, 4
      %v2970 = vshrl.u32 %v2855, 16
      %v2972 = vrot.slane %v2970, 7
      %v2973 = vshll.u32 %v2855, 16
      %v2975 = vor.u32 %v2972, %v2973
      %v2976 = vsel %vm2861, %v2968, %v2975
      %v2977 = vrot.slane %v2972, 4
      %v2979 = vshrl.u32 %v2856, 16
      %v2981 = vrot.slane %v2979, 7
      %v2982 = vshll.u32 %v2856, 16
      %v2984 = vor.u32 %v2981, %v2982
      %v2985 = vsel %vm2861, %v2977, %v2984
      %v2986 = vrot.slane %v2981, 4
      %v2988 = vshrl.u32 %v2857, 16
      %v2990 = vrot.slane %v2988, 7
      %v2991 = vshll.u32 %v2857, 16
      %v2993 = vor.u32 %v2990, %v2991
      %v2994 = vsel %vm2861, %v2986, %v2993
      %v2995 = vrot.slane %v2990, 4
      %v2997 = vshrl.u32 %v2858, 16
      %v2999 = vrot.slane %v2997, 7
      %v3000 = vshll.u32 %v2858, 16
      %v3002 = vor.u32 %v2999, %v3000
      %v3003 = vsel %vm2861, %v2995, %v3002
      %v3004 = vrot.slane %v2999, 4
      %v3005 = vunpack.c.l.b16 %v2868
      %v3006 = vunpack.c.h.b16 %v2868
      %v3007 = vunpack.c.l.b16 0
      %v3008 = vunpack.c.h.b16 0
      %vm3009 = vcmp.ne.s32.totalorder %v3005, %v3007
      %vm3010 = vcmp.ne.s32.totalorder %v3006, %v3008
      %vm3011 = vmpackc.low %vm3010, %vm3009
      %v3012 = vunpack.c.l.b16 %v2877
      %v3013 = vunpack.c.h.b16 %v2877
      %v3014 = vunpack.c.l.b16 0
      %v3015 = vunpack.c.h.b16 0
      %vm3016 = vcmp.ne.s32.totalorder %v3012, %v3014
      %vm3017 = vcmp.ne.s32.totalorder %v3013, %v3015
      %vm3018 = vmpackc.low %vm3017, %vm3016
      %v3019 = vunpack.c.l.b16 %v2886
      %v3020 = vunpack.c.h.b16 %v2886
      %v3021 = vunpack.c.l.b16 0
      %v3022 = vunpack.c.h.b16 0
      %vm3023 = vcmp.ne.s32.totalorder %v3019, %v3021
      %vm3024 = vcmp.ne.s32.totalorder %v3020, %v3022
      %vm3025 = vmpackc.low %vm3024, %vm3023
      %v3026 = vunpack.c.l.b16 %v2895
      %v3027 = vunpack.c.h.b16 %v2895
      %v3028 = vunpack.c.l.b16 0
      %v3029 = vunpack.c.h.b16 0
      %vm3030 = vcmp.ne.s32.totalorder %v3026, %v3028
      %vm3031 = vcmp.ne.s32.totalorder %v3027, %v3029
      %vm3032 = vmpackc.low %vm3031, %vm3030
      %v3033 = vunpack.c.l.b16 %v2904
      %v3034 = vunpack.c.h.b16 %v2904
      %v3035 = vunpack.c.l.b16 0
      %v3036 = vunpack.c.h.b16 0
      %vm3037 = vcmp.ne.s32.totalorder %v3033, %v3035
      %vm3038 = vcmp.ne.s32.totalorder %v3034, %v3036
      %vm3039 = vmpackc.low %vm3038, %vm3037
      %v3040 = vunpack.c.l.b16 %v2913
      %v3041 = vunpack.c.h.b16 %v2913
      %v3042 = vunpack.c.l.b16 0
      %v3043 = vunpack.c.h.b16 0
      %vm3044 = vcmp.ne.s32.totalorder %v3040, %v3042
      %vm3045 = vcmp.ne.s32.totalorder %v3041, %v3043
      %vm3046 = vmpackc.low %vm3045, %vm3044
      %v3047 = vunpack.c.l.b16 %v2922
      %v3048 = vunpack.c.h.b16 %v2922
      %v3049 = vunpack.c.l.b16 0
      %v3050 = vunpack.c.h.b16 0
      %vm3051 = vcmp.ne.s32.totalorder %v3047, %v3049
      %vm3052 = vcmp.ne.s32.totalorder %v3048, %v3050
      %vm3053 = vmpackc.low %vm3052, %vm3051
      %v3054 = vunpack.c.l.b16 %v2931
      %v3055 = vunpack.c.h.b16 %v2931
      %v3056 = vunpack.c.l.b16 0
      %v3057 = vunpack.c.h.b16 0
      %vm3058 = vcmp.ne.s32.totalorder %v3054, %v3056
      %vm3059 = vcmp.ne.s32.totalorder %v3055, %v3057
      %vm3060 = vmpackc.low %vm3059, %vm3058
      %v3061 = vunpack.c.l.b16 %v2940
      %v3062 = vunpack.c.h.b16 %v2940
      %v3063 = vunpack.c.l.b16 0
      %v3064 = vunpack.c.h.b16 0
      %vm3065 = vcmp.ne.s32.totalorder %v3061, %v3063
      %vm3066 = vcmp.ne.s32.totalorder %v3062, %v3064
      %vm3067 = vmpackc.low %vm3066, %vm3065
      %v3068 = vunpack.c.l.b16 %v2949
      %v3069 = vunpack.c.h.b16 %v2949
      %v3070 = vunpack.c.l.b16 0
      %v3071 = vunpack.c.h.b16 0
      %vm3072 = vcmp.ne.s32.totalorder %v3068, %v3070
      %vm3073 = vcmp.ne.s32.totalorder %v3069, %v3071
      %vm3074 = vmpackc.low %vm3073, %vm3072
      %v3075 = vunpack.c.l.b16 %v2958
      %v3076 = vunpack.c.h.b16 %v2958
      %v3077 = vunpack.c.l.b16 0
      %v3078 = vunpack.c.h.b16 0
      %vm3079 = vcmp.ne.s32.totalorder %v3075, %v3077
      %vm3080 = vcmp.ne.s32.totalorder %v3076, %v3078
      %vm3081 = vmpackc.low %vm3080, %vm3079
      %v3082 = vunpack.c.l.b16 %v2967
      %v3083 = vunpack.c.h.b16 %v2967
      %v3084 = vunpack.c.l.b16 0
      %v3085 = vunpack.c.h.b16 0
      %vm3086 = vcmp.ne.s32.totalorder %v3082, %v3084
      %vm3087 = vcmp.ne.s32.totalorder %v3083, %v3085
      %vm3088 = vmpackc.low %vm3087, %vm3086
      %v3089 = vunpack.c.l.b16 %v2976
      %v3090 = vunpack.c.h.b16 %v2976
      %v3091 = vunpack.c.l.b16 0
      %v3092 = vunpack.c.h.b16 0
      %vm3093 = vcmp.ne.s32.totalorder %v3089, %v3091
      %vm3094 = vcmp.ne.s32.totalorder %v3090, %v3092
      %vm3095 = vmpackc.low %vm3094, %vm3093
      %v3096 = vunpack.c.l.b16 %v2985
      %v3097 = vunpack.c.h.b16 %v2985
      %v3098 = vunpack.c.l.b16 0
      %v3099 = vunpack.c.h.b16 0
      %vm3100 = vcmp.ne.s32.totalorder %v3096, %v3098
      %vm3101 = vcmp.ne.s32.totalorder %v3097, %v3099
      %vm3102 = vmpackc.low %vm3101, %vm3100
      %v3103 = vunpack.c.l.b16 %v2994
      %v3104 = vunpack.c.h.b16 %v2994
      %v3105 = vunpack.c.l.b16 0
      %v3106 = vunpack.c.h.b16 0
      %vm3107 = vcmp.ne.s32.totalorder %v3103, %v3105
      %vm3108 = vcmp.ne.s32.totalorder %v3104, %v3106
      %vm3109 = vmpackc.low %vm3108, %vm3107
      %v3110 = vunpack.c.l.b16 %v3003
      %v3111 = vunpack.c.h.b16 %v3003
      %v3112 = vunpack.c.l.b16 0
      %v3113 = vunpack.c.h.b16 0
      %vm3114 = vcmp.ne.s32.totalorder %v3110, %v3112
      %vm3115 = vcmp.ne.s32.totalorder %v3111, %v3113
      %vm3116 = vmpackc.low %vm3115, %vm3114
      %v3117 = vunpack.c.l.b16 %v3004
      %v3118 = vunpack.c.h.b16 %v3004
      %v3119 = vunpack.c.l.b16 0
      %v3120 = vunpack.c.h.b16 0
      %vm3121 = vcmp.ne.s32.totalorder %v3117, %v3119
      %vm3122 = vcmp.ne.s32.totalorder %v3118, %v3120
      %vm3123 = vmpackc.low %vm3122, %vm3121
      %v3124 = vsel %vm3011, %v2697, 0
      %v3125 = vsel %vm3011, %v2698, 0
      %v3126 = vsel %vm3018, %v2699, 0
      %v3127 = vsel %vm3018, %v2700, 0
      %v3128 = vsel %vm3025, %v2701, 0
      %v3129 = vsel %vm3025, %v2702, 0
      %v3130 = vsel %vm3032, %v2703, 0
      %v3131 = vsel %vm3032, %v2704, 0
      %v3132 = vsel %vm3039, %v2705, 0
      %v3133 = vsel %vm3039, %v2706, 0
      %v3134 = vsel %vm3046, %v2707, 0
      %v3135 = vsel %vm3046, %v2708, 0
      %v3136 = vsel %vm3053, %v2709, 0
      %v3137 = vsel %vm3053, %v2710, 0
      %v3138 = vsel %vm3060, %v2711, 0
      %v3139 = vsel %vm3060, %v2712, 0
      %v3140 = vsel %vm3067, %v2713, 0
      %v3141 = vsel %vm3067, %v2714, 0
      %v3142 = vsel %vm3074, %v2715, 0
      %v3143 = vsel %vm3074, %v2716, 0
      %v3144 = vsel %vm3081, %v2717, 0
      %v3145 = vsel %vm3081, %v2718, 0
      %v3146 = vsel %vm3088, %v2719, 0
      %v3147 = vsel %vm3088, %v2720, 0
      %v3148 = vsel %vm3095, %v2721, 0
      %v3149 = vsel %vm3095, %v2722, 0
      %v3150 = vsel %vm3102, %v2723, 0
      %v3151 = vsel %vm3102, %v2724, 0
      %v3152 = vsel %vm3109, %v2725, 0
      %v3153 = vsel %vm3109, %v2726, 0
      %v3154 = vsel %vm3116, %v2727, 0
      %v3155 = vsel %vm3116, %v2728, 0
      %v3156 = vsel %vm3123, %v2729, 0
      %v3157 = vsel %vm3123, %v2730, 0
      %s3158 = scalar_lea.vmem %s5, 384
      %v3159 = vld [vmem:[%s3158] sm:$0xf]
      %v3160 = vld [vmem:[%s3158 + $0x4] sm:$0xf]
      %v3161 = vld [vmem:[%s3158 + $0x8] sm:$0xf]
      %v3162 = vld [vmem:[%s3158 + $0xc] sm:$0xf]
      %v3163 = vld [vmem:[%s3158 + $0x10] sm:$0xf]
      %v3164 = vld [vmem:[%s3158 + $0x14] sm:$0xf]
      %v3165 = vld [vmem:[%s3158 + $0x18] sm:$0xf]
      %v3166 = vld [vmem:[%s3158 + $0x1c] sm:$0xf]
      %v3167 = vld [vmem:[%s3158 + $0x20] sm:$0xf]
      %v3168 = vld [vmem:[%s3158 + $0x24] sm:$0xf]
      %v3169 = vld [vmem:[%s3158 + $0x28] sm:$0xf]
      %v3170 = vld [vmem:[%s3158 + $0x2c] sm:$0xf]
      %v3171 = vld [vmem:[%s3158 + $0x30] sm:$0xf]
      %v3172 = vld [vmem:[%s3158 + $0x34] sm:$0xf]
      %v3173 = vld [vmem:[%s3158 + $0x38] sm:$0xf]
      %v3174 = vld [vmem:[%s3158 + $0x3c] sm:$0xf]
      %v3175 = vld [vmem:[%s3158 + $0x40] sm:$0xf]
      %v3176 = vld [vmem:[%s3158 + $0x44] sm:$0xf]
      %v3177 = vld [vmem:[%s3158 + $0x48] sm:$0xf]
      %v3178 = vld [vmem:[%s3158 + $0x4c] sm:$0xf]
      %v3179 = vld [vmem:[%s3158 + $0x50] sm:$0xf]
      %v3180 = vld [vmem:[%s3158 + $0x54] sm:$0xf]
      %v3181 = vld [vmem:[%s3158 + $0x58] sm:$0xf]
      %v3182 = vld [vmem:[%s3158 + $0x5c] sm:$0xf]
      %v3183 = vld [vmem:[%s3158 + $0x60] sm:$0xf]
      %v3184 = vld [vmem:[%s3158 + $0x64] sm:$0xf]
      %v3185 = vld [vmem:[%s3158 + $0x68] sm:$0xf]
      %v3186 = vld [vmem:[%s3158 + $0x6c] sm:$0xf]
      %v3187 = vld [vmem:[%s3158 + $0x70] sm:$0xf]
      %v3188 = vld [vmem:[%s3158 + $0x74] sm:$0xf]
      %v3189 = vld [vmem:[%s3158 + $0x78] sm:$0xf]
      %v3190 = vld [vmem:[%s3158 + $0x7c] sm:$0xf]
      %v3191 = vld [vmem:[%s3158 + $0x80] sm:$0xf]
      %v3192 = vld [vmem:[%s3158 + $0x84] sm:$0xf]
      %v3193 = vld [vmem:[%s3158 + $0x88] sm:$0xf]
      %v3194 = vld [vmem:[%s3158 + $0x8c] sm:$0xf]
      %v3195 = vld [vmem:[%s3158 + $0x90] sm:$0xf]
      %v3196 = vld [vmem:[%s3158 + $0x94] sm:$0xf]
      %v3197 = vld [vmem:[%s3158 + $0x98] sm:$0xf]
      %v3198 = vld [vmem:[%s3158 + $0x9c] sm:$0xf]
      %v3199 = vld [vmem:[%s3158 + $0xa0] sm:$0xf]
      %v3200 = vld [vmem:[%s3158 + $0xa4] sm:$0xf]
      %v3201 = vld [vmem:[%s3158 + $0xa8] sm:$0xf]
      %v3202 = vld [vmem:[%s3158 + $0xac] sm:$0xf]
      %v3203 = vld [vmem:[%s3158 + $0xb0] sm:$0xf]
      %v3204 = vld [vmem:[%s3158 + $0xb4] sm:$0xf]
      %v3205 = vld [vmem:[%s3158 + $0xb8] sm:$0xf]
      %v3206 = vld [vmem:[%s3158 + $0xbc] sm:$0xf]
      %v3241 = vunpack.c.l.b16 %v3124
      %v3242 = vunpack.c.h.b16 %v3124
      %v3243 = vunpack.c.l.b16 %v3125
      %v3244 = vunpack.c.l.b16 %v3126
      %v3245 = vunpack.c.h.b16 %v3126
      %v3246 = vunpack.c.l.b16 %v3127
      %v3247 = vunpack.c.l.b16 %v3128
      %v3248 = vunpack.c.h.b16 %v3128
      %v3249 = vunpack.c.l.b16 %v3129
      %v3250 = vunpack.c.l.b16 %v3130
      %v3251 = vunpack.c.h.b16 %v3130
      %v3252 = vunpack.c.l.b16 %v3131
      %v3253 = vunpack.c.l.b16 %v3132
      %v3254 = vunpack.c.h.b16 %v3132
      %v3255 = vunpack.c.l.b16 %v3133
      %v3256 = vunpack.c.l.b16 %v3134
      %v3257 = vunpack.c.h.b16 %v3134
      %v3258 = vunpack.c.l.b16 %v3135
      %v3259 = vunpack.c.l.b16 %v3136
      %v3260 = vunpack.c.h.b16 %v3136
      %v3261 = vunpack.c.l.b16 %v3137
      %v3262 = vunpack.c.l.b16 %v3138
      %v3263 = vunpack.c.h.b16 %v3138
      %v3264 = vunpack.c.l.b16 %v3139
      %v3265 = vunpack.c.l.b16 %v3140
      %v3266 = vunpack.c.h.b16 %v3140
      %v3267 = vunpack.c.l.b16 %v3141
      %v3268 = vunpack.c.l.b16 %v3142
      %v3269 = vunpack.c.h.b16 %v3142
      %v3270 = vunpack.c.l.b16 %v3143
      %v3271 = vunpack.c.l.b16 %v3144
      %v3272 = vunpack.c.h.b16 %v3144
      %v3273 = vunpack.c.l.b16 %v3145
      %v3274 = vunpack.c.l.b16 %v3146
      %v3275 = vunpack.c.h.b16 %v3146
      %v3276 = vunpack.c.l.b16 %v3147
      %v3277 = vunpack.c.l.b16 %v3148
      %v3278 = vunpack.c.h.b16 %v3148
      %v3279 = vunpack.c.l.b16 %v3149
      %v3280 = vunpack.c.l.b16 %v3150
      %v3281 = vunpack.c.h.b16 %v3150
      %v3282 = vunpack.c.l.b16 %v3151
      %v3283 = vunpack.c.l.b16 %v3152
      %v3284 = vunpack.c.h.b16 %v3152
      %v3285 = vunpack.c.l.b16 %v3153
      %v3286 = vunpack.c.l.b16 %v3154
      %v3287 = vunpack.c.h.b16 %v3154
      %v3288 = vunpack.c.l.b16 %v3155
      %v3289 = vunpack.c.l.b16 %v3156
      %v3290 = vunpack.c.h.b16 %v3156
      %v3291 = vunpack.c.l.b16 %v3157
      %v3292 = vpack.c.b16 %v3244, %v3241
      %v3293 = vpack.c.b16 %v3245, %v3242
      %v3294 = vpack.c.b16 %v3246, %v3243
      %v3295 = vpack.c.b16 %v3250, %v3247
      %v3296 = vpack.c.b16 %v3251, %v3248
      %v3297 = vpack.c.b16 %v3252, %v3249
      %v3298 = vpack.c.b16 %v3256, %v3253
      %v3299 = vpack.c.b16 %v3257, %v3254
      %v3300 = vpack.c.b16 %v3258, %v3255
      %v3301 = vpack.c.b16 %v3262, %v3259
      %v3302 = vpack.c.b16 %v3263, %v3260
      %v3303 = vpack.c.b16 %v3264, %v3261
      %v3304 = vpack.c.b16 %v3268, %v3265
      %v3305 = vpack.c.b16 %v3269, %v3266
      %v3306 = vpack.c.b16 %v3270, %v3267
      %v3307 = vpack.c.b16 %v3274, %v3271
      %v3308 = vpack.c.b16 %v3275, %v3272
      %v3309 = vpack.c.b16 %v3276, %v3273
      %v3310 = vpack.c.b16 %v3280, %v3277
      %v3311 = vpack.c.b16 %v3281, %v3278
      %v3312 = vpack.c.b16 %v3282, %v3279
      %v3313 = vpack.c.b16 %v3286, %v3283
      %v3314 = vpack.c.b16 %v3287, %v3284
      %v3315 = vpack.c.b16 %v3288, %v3285
      %v3316 = vpack.c.b16 %v3289, %v3289
      %v3317 = vpack.c.b16 %v3290, %v3290
      %v3318 = vpack.c.b16 %v3291, %v3291
      %vm3319 = vsmask.f32 7424
      %v3321 = vshrl.u32 %v3292, 16
      %v3323 = vshll.u32 %v3292, 16
      %v3325 = vrot.slane %v3323, 1
      %v3326 = vor.u32 %v3321, %v3325
      %v3328 = vshll.u32 %v3295, 16
      %v3330 = vrot.slane %v3328, 1
      %v3331 = vsel %vm3319, %v3326, %v3330
      %v3333 = vshrl.u32 %v3293, 16
      %v3335 = vshll.u32 %v3293, 16
      %v3337 = vrot.slane %v3335, 1
      %v3338 = vor.u32 %v3333, %v3337
      %v3340 = vshll.u32 %v3296, 16
      %v3342 = vrot.slane %v3340, 1
      %v3343 = vsel %vm3319, %v3338, %v3342
      %v3345 = vshrl.u32 %v3294, 16
      %v3347 = vshll.u32 %v3294, 16
      %v3349 = vrot.slane %v3347, 1
      %v3350 = vor.u32 %v3345, %v3349
      %v3352 = vshll.u32 %v3297, 16
      %v3354 = vrot.slane %v3352, 1
      %v3355 = vsel %vm3319, %v3350, %v3354
      %v3356 = vshrl.u32 %v3295, 16
      %v3358 = vor.u32 %v3356, %v3330
      %v3360 = vshll.u32 %v3298, 16
      %v3362 = vrot.slane %v3360, 1
      %v3363 = vsel %vm3319, %v3358, %v3362
      %v3364 = vshrl.u32 %v3296, 16
      %v3366 = vor.u32 %v3364, %v3342
      %v3368 = vshll.u32 %v3299, 16
      %v3370 = vrot.slane %v3368, 1
      %v3371 = vsel %vm3319, %v3366, %v3370
      %v3372 = vshrl.u32 %v3297, 16
      %v3374 = vor.u32 %v3372, %v3354
      %v3376 = vshll.u32 %v3300, 16
      %v3378 = vrot.slane %v3376, 1
      %v3379 = vsel %vm3319, %v3374, %v3378
      %v3380 = vshrl.u32 %v3298, 16
      %v3382 = vor.u32 %v3380, %v3362
      %v3384 = vshll.u32 %v3301, 16
      %v3386 = vrot.slane %v3384, 1
      %v3387 = vsel %vm3319, %v3382, %v3386
      %v3388 = vshrl.u32 %v3299, 16
      %v3390 = vor.u32 %v3388, %v3370
      %v3392 = vshll.u32 %v3302, 16
      %v3394 = vrot.slane %v3392, 1
      %v3395 = vsel %vm3319, %v3390, %v3394
      %v3396 = vshrl.u32 %v3300, 16
      %v3398 = vor.u32 %v3396, %v3378
      %v3400 = vshll.u32 %v3303, 16
      %v3402 = vrot.slane %v3400, 1
      %v3403 = vsel %vm3319, %v3398, %v3402
      %v3404 = vshrl.u32 %v3301, 16
      %v3406 = vor.u32 %v3404, %v3386
      %v3408 = vshll.u32 %v3304, 16
      %v3410 = vrot.slane %v3408, 1
      %v3411 = vsel %vm3319, %v3406, %v3410
      %v3412 = vshrl.u32 %v3302, 16
      %v3414 = vor.u32 %v3412, %v3394
      %v3416 = vshll.u32 %v3305, 16
      %v3418 = vrot.slane %v3416, 1
      %v3419 = vsel %vm3319, %v3414, %v3418
      %v3420 = vshrl.u32 %v3303, 16
      %v3422 = vor.u32 %v3420, %v3402
      %v3424 = vshll.u32 %v3306, 16
      %v3426 = vrot.slane %v3424, 1
      %v3427 = vsel %vm3319, %v3422, %v3426
      %v3428 = vshrl.u32 %v3304, 16
      %v3430 = vor.u32 %v3428, %v3410
      %v3432 = vshll.u32 %v3307, 16
      %v3434 = vrot.slane %v3432, 1
      %v3435 = vsel %vm3319, %v3430, %v3434
      %v3436 = vshrl.u32 %v3305, 16
      %v3438 = vor.u32 %v3436, %v3418
      %v3440 = vshll.u32 %v3308, 16
      %v3442 = vrot.slane %v3440, 1
      %v3443 = vsel %vm3319, %v3438, %v3442
      %v3444 = vshrl.u32 %v3306, 16
      %v3446 = vor.u32 %v3444, %v3426
      %v3448 = vshll.u32 %v3309, 16
      %v3450 = vrot.slane %v3448, 1
      %v3451 = vsel %vm3319, %v3446, %v3450
      %v3452 = vshrl.u32 %v3307, 16
      %v3454 = vor.u32 %v3452, %v3434
      %v3456 = vshll.u32 %v3310, 16
      %v3458 = vrot.slane %v3456, 1
      %v3459 = vsel %vm3319, %v3454, %v3458
      %v3460 = vshrl.u32 %v3308, 16
      %v3462 = vor.u32 %v3460, %v3442
      %v3464 = vshll.u32 %v3311, 16
      %v3466 = vrot.slane %v3464, 1
      %v3467 = vsel %vm3319, %v3462, %v3466
      %v3468 = vshrl.u32 %v3309, 16
      %v3470 = vor.u32 %v3468, %v3450
      %v3472 = vshll.u32 %v3312, 16
      %v3474 = vrot.slane %v3472, 1
      %v3475 = vsel %vm3319, %v3470, %v3474
      %v3476 = vshrl.u32 %v3310, 16
      %v3478 = vor.u32 %v3476, %v3458
      %v3480 = vshll.u32 %v3313, 16
      %v3482 = vrot.slane %v3480, 1
      %v3483 = vsel %vm3319, %v3478, %v3482
      %v3484 = vshrl.u32 %v3311, 16
      %v3486 = vor.u32 %v3484, %v3466
      %v3488 = vshll.u32 %v3314, 16
      %v3490 = vrot.slane %v3488, 1
      %v3491 = vsel %vm3319, %v3486, %v3490
      %v3492 = vshrl.u32 %v3312, 16
      %v3494 = vor.u32 %v3492, %v3474
      %v3496 = vshll.u32 %v3315, 16
      %v3498 = vrot.slane %v3496, 1
      %v3499 = vsel %vm3319, %v3494, %v3498
      %v3500 = vshrl.u32 %v3313, 16
      %v3502 = vor.u32 %v3500, %v3482
      %v3504 = vshll.u32 %v3316, 16
      %v3506 = vrot.slane %v3504, 1
      %v3507 = vsel %vm3319, %v3502, %v3506
      %v3508 = vshrl.u32 %v3314, 16
      %v3510 = vor.u32 %v3508, %v3490
      %v3512 = vshll.u32 %v3317, 16
      %v3514 = vrot.slane %v3512, 1
      %v3515 = vsel %vm3319, %v3510, %v3514
      %v3516 = vshrl.u32 %v3315, 16
      %v3518 = vor.u32 %v3516, %v3498
      %v3520 = vshll.u32 %v3318, 16
      %v3522 = vrot.slane %v3520, 1
      %v3523 = vsel %vm3319, %v3518, %v3522
      %v3596 = vunpack.c.l.b16 %v3159
      %v3597 = vunpack.c.l.b16 %v3160
      %v3598 = vunpack.c.l.b16 %v3161
      %v3599 = vunpack.c.l.b16 %v3162
      %v3600 = vunpack.c.l.b16 %v3163
      %v3601 = vunpack.c.l.b16 %v3164
      %v3602 = vunpack.c.l.b16 %v3165
      %v3603 = vunpack.c.l.b16 %v3166
      %v3604 = vunpack.c.l.b16 %v3167
      %v3605 = vunpack.c.l.b16 %v3168
      %v3606 = vunpack.c.l.b16 %v3169
      %v3607 = vunpack.c.l.b16 %v3170
      %v3608 = vunpack.c.l.b16 %v3171
      %v3609 = vunpack.c.l.b16 %v3172
      %v3610 = vunpack.c.l.b16 %v3173
      %v3611 = vunpack.c.l.b16 %v3174
      %v3612 = vunpack.c.l.b16 %v3175
      %v3613 = vunpack.c.l.b16 %v3176
      %v3614 = vunpack.c.l.b16 %v3177
      %v3615 = vunpack.c.l.b16 %v3178
      %v3616 = vunpack.c.l.b16 %v3179
      %v3617 = vunpack.c.l.b16 %v3180
      %v3618 = vunpack.c.l.b16 %v3181
      %v3619 = vunpack.c.l.b16 %v3182
      %v3620 = vunpack.c.l.b16 %v3183
      %v3621 = vunpack.c.l.b16 %v3184
      %v3622 = vunpack.c.l.b16 %v3185
      %v3623 = vunpack.c.l.b16 %v3186
      %v3624 = vunpack.c.l.b16 %v3187
      %v3625 = vunpack.c.l.b16 %v3188
      %v3626 = vunpack.c.l.b16 %v3189
      %v3627 = vunpack.c.l.b16 %v3190
      %v3628 = vunpack.c.l.b16 %v3191
      %v3629 = vunpack.c.l.b16 %v3192
      %v3630 = vunpack.c.l.b16 %v3193
      %v3631 = vunpack.c.l.b16 %v3194
      %v3632 = vunpack.c.l.b16 %v3195
      %v3633 = vunpack.c.l.b16 %v3196
      %v3634 = vunpack.c.l.b16 %v3197
      %v3635 = vunpack.c.l.b16 %v3198
      %v3636 = vunpack.c.l.b16 %v3199
      %v3637 = vunpack.c.l.b16 %v3200
      %v3638 = vunpack.c.l.b16 %v3201
      %v3639 = vunpack.c.l.b16 %v3202
      %v3640 = vunpack.c.l.b16 %v3203
      %v3641 = vunpack.c.l.b16 %v3204
      %v3642 = vunpack.c.l.b16 %v3205
      %v3643 = vunpack.c.l.b16 %v3206
      %v3644 = vpack.c.b16 %v3597, %v3596
      %v3645 = vpack.c.b16 %v3599, %v3598
      %v3646 = vpack.c.b16 %v3601, %v3600
      %v3647 = vpack.c.b16 %v3603, %v3602
      %v3648 = vpack.c.b16 %v3605, %v3604
      %v3649 = vpack.c.b16 %v3607, %v3606
      %v3650 = vpack.c.b16 %v3609, %v3608
      %v3651 = vpack.c.b16 %v3611, %v3610
      %v3652 = vpack.c.b16 %v3613, %v3612
      %v3653 = vpack.c.b16 %v3615, %v3614
      %v3654 = vpack.c.b16 %v3617, %v3616
      %v3655 = vpack.c.b16 %v3619, %v3618
      %v3656 = vpack.c.b16 %v3621, %v3620
      %v3657 = vpack.c.b16 %v3623, %v3622
      %v3658 = vpack.c.b16 %v3625, %v3624
      %v3659 = vpack.c.b16 %v3627, %v3626
      %v3660 = vpack.c.b16 %v3629, %v3628
      %v3661 = vpack.c.b16 %v3631, %v3630
      %v3662 = vpack.c.b16 %v3633, %v3632
      %v3663 = vpack.c.b16 %v3635, %v3634
      %v3664 = vpack.c.b16 %v3637, %v3636
      %v3665 = vpack.c.b16 %v3639, %v3638
      %v3666 = vpack.c.b16 %v3641, %v3640
      %v3667 = vpack.c.b16 %v3643, %v3642
      %3692 = vmatpush.bf16.msra.mxu0 %v3651
      %3693 = vmatpush.bf16.msra.mxu0 %v3650
      %3694 = vmatpush.bf16.msra.mxu0 %v3649
      %3695 = vmatpush.bf16.msra.mxu0 %v3648
      %3696 = vmatpush.bf16.msra.mxu0 %v3647
      %3697 = vmatpush.bf16.msra.mxu0 %v3646
      %3698 = vmatpush.bf16.msra.mxu0 %v3645
      %3699 = vmatpush.bf16.msra.mxu0 %v3644
      %3700 = vmatmul.bf16.gmra.mxu0 %v3331
      %v3701 = vpop.f32.mrf.mxu0
      %v3702 = vadd.f32 0.0, %v3701
      %v3703 = vpop.f32.mrf.mxu0
      %v3704 = vadd.f32 0.0, %v3703
      %3705 = vmatmul.bf16.gmra.mxu0 %v3363
      %v3706 = vpop.f32.mrf.mxu0
      %v3707 = vadd.f32 0.0, %v3706
      %v3708 = vpop.f32.mrf.mxu0
      %v3709 = vadd.f32 0.0, %v3708
      %3710 = vmatmul.bf16.gmra.mxu0 %v3387
      %v3711 = vpop.f32.mrf.mxu0
      %v3712 = vadd.f32 0.0, %v3711
      %v3713 = vpop.f32.mrf.mxu0
      %v3714 = vadd.f32 0.0, %v3713
      %3715 = vmatmul.bf16.gmra.mxu0 %v3411
      %v3716 = vpop.f32.mrf.mxu0
      %v3717 = vadd.f32 0.0, %v3716
      %v3718 = vpop.f32.mrf.mxu0
      %v3719 = vadd.f32 0.0, %v3718
      %3720 = vmatmul.bf16.gmra.mxu0 %v3435
      %v3721 = vpop.f32.mrf.mxu0
      %v3722 = vadd.f32 0.0, %v3721
      %v3723 = vpop.f32.mrf.mxu0
      %v3724 = vadd.f32 0.0, %v3723
      %3725 = vmatmul.bf16.gmra.mxu0 %v3459
      %v3726 = vpop.f32.mrf.mxu0
      %v3727 = vadd.f32 0.0, %v3726
      %v3728 = vpop.f32.mrf.mxu0
      %v3729 = vadd.f32 0.0, %v3728
      %3730 = vmatmul.bf16.gmra.mxu0 %v3483
      %v3731 = vpop.f32.mrf.mxu0
      %v3732 = vadd.f32 0.0, %v3731
      %v3733 = vpop.f32.mrf.mxu0
      %v3734 = vadd.f32 0.0, %v3733
      %3735 = vmatmul.bf16.gmra.mxu0 %v3507
      %v3736 = vpop.f32.mrf.mxu0
      %v3737 = vadd.f32 0.0, %v3736
      %v3738 = vpop.f32.mrf.mxu0
      %v3739 = vadd.f32 0.0, %v3738
      %3740 = vdwg.mxu0
      %3741 = vmatpush.bf16.msra.mxu0 %v3659
      %3742 = vmatpush.bf16.msra.mxu0 %v3658
      %3743 = vmatpush.bf16.msra.mxu0 %v3657
      %3744 = vmatpush.bf16.msra.mxu0 %v3656
      %3745 = vmatpush.bf16.msra.mxu0 %v3655
      %3746 = vmatpush.bf16.msra.mxu0 %v3654
      %3747 = vmatpush.bf16.msra.mxu0 %v3653
      %3748 = vmatpush.bf16.msra.mxu0 %v3652
      %3749 = vmatmul.bf16.gmra.mxu0 %v3343
      %v3750 = vpop.f32.mrf.mxu0
      %v3751 = vadd.f32 %v3702, %v3750
      %v3752 = vpop.f32.mrf.mxu0
      %v3753 = vadd.f32 %v3704, %v3752
      %3754 = vmatmul.bf16.gmra.mxu0 %v3371
      %v3755 = vpop.f32.mrf.mxu0
      %v3756 = vadd.f32 %v3707, %v3755
      %v3757 = vpop.f32.mrf.mxu0
      %v3758 = vadd.f32 %v3709, %v3757
      %3759 = vmatmul.bf16.gmra.mxu0 %v3395
      %v3760 = vpop.f32.mrf.mxu0
      %v3761 = vadd.f32 %v3712, %v3760
      %v3762 = vpop.f32.mrf.mxu0
      %v3763 = vadd.f32 %v3714, %v3762
      %3764 = vmatmul.bf16.gmra.mxu0 %v3419
      %v3765 = vpop.f32.mrf.mxu0
      %v3766 = vadd.f32 %v3717, %v3765
      %v3767 = vpop.f32.mrf.mxu0
      %v3768 = vadd.f32 %v3719, %v3767
      %3769 = vmatmul.bf16.gmra.mxu0 %v3443
      %v3770 = vpop.f32.mrf.mxu0
      %v3771 = vadd.f32 %v3722, %v3770
      %v3772 = vpop.f32.mrf.mxu0
      %v3773 = vadd.f32 %v3724, %v3772
      %3774 = vmatmul.bf16.gmra.mxu0 %v3467
      %v3775 = vpop.f32.mrf.mxu0
      %v3776 = vadd.f32 %v3727, %v3775
      %v3777 = vpop.f32.mrf.mxu0
      %v3778 = vadd.f32 %v3729, %v3777
      %3779 = vmatmul.bf16.gmra.mxu0 %v3491
      %v3780 = vpop.f32.mrf.mxu0
      %v3781 = vadd.f32 %v3732, %v3780
      %v3782 = vpop.f32.mrf.mxu0
      %v3783 = vadd.f32 %v3734, %v3782
      %3784 = vmatmul.bf16.gmra.mxu0 %v3515
      %v3785 = vpop.f32.mrf.mxu0
      %v3786 = vadd.f32 %v3737, %v3785
      %v3787 = vpop.f32.mrf.mxu0
      %v3788 = vadd.f32 %v3739, %v3787
      %3789 = vdwg.mxu0
      %3790 = vmatpush.bf16.msra.mxu0 %v3667
      %3791 = vmatpush.bf16.msra.mxu0 %v3666
      %3792 = vmatpush.bf16.msra.mxu0 %v3665
      %3793 = vmatpush.bf16.msra.mxu0 %v3664
      %3794 = vmatpush.bf16.msra.mxu0 %v3663
      %3795 = vmatpush.bf16.msra.mxu0 %v3662
      %3796 = vmatpush.bf16.msra.mxu0 %v3661
      %3797 = vmatpush.bf16.msra.mxu0 %v3660
      %3798 = vmatmul.bf16.gmra.mxu0 %v3355
      %v3799 = vpop.f32.mrf.mxu0
      %v3800 = vadd.f32 %v3751, %v3799
      %v3801 = vpop.f32.mrf.mxu0
      %v3802 = vadd.f32 %v3753, %v3801
      %3803 = vmatmul.bf16.gmra.mxu0 %v3379
      %v3804 = vpop.f32.mrf.mxu0
      %v3805 = vadd.f32 %v3756, %v3804
      %v3806 = vpop.f32.mrf.mxu0
      %v3807 = vadd.f32 %v3758, %v3806
      %3808 = vmatmul.bf16.gmra.mxu0 %v3403
      %v3809 = vpop.f32.mrf.mxu0
      %v3810 = vadd.f32 %v3761, %v3809
      %v3811 = vpop.f32.mrf.mxu0
      %v3812 = vadd.f32 %v3763, %v3811
      %3813 = vmatmul.bf16.gmra.mxu0 %v3427
      %v3814 = vpop.f32.mrf.mxu0
      %v3815 = vadd.f32 %v3766, %v3814
      %v3816 = vpop.f32.mrf.mxu0
      %v3817 = vadd.f32 %v3768, %v3816
      %3818 = vmatmul.bf16.gmra.mxu0 %v3451
      %v3819 = vpop.f32.mrf.mxu0
      %v3820 = vadd.f32 %v3771, %v3819
      %v3821 = vpop.f32.mrf.mxu0
      %v3822 = vadd.f32 %v3773, %v3821
      %3823 = vmatmul.bf16.gmra.mxu0 %v3475
      %v3824 = vpop.f32.mrf.mxu0
      %v3825 = vadd.f32 %v3776, %v3824
      %v3826 = vpop.f32.mrf.mxu0
      %v3827 = vadd.f32 %v3778, %v3826
      %3828 = vmatmul.bf16.gmra.mxu0 %v3499
      %v3829 = vpop.f32.mrf.mxu0
      %v3830 = vadd.f32 %v3781, %v3829
      %v3831 = vpop.f32.mrf.mxu0
      %v3832 = vadd.f32 %v3783, %v3831
      %3833 = vmatmul.bf16.gmra.mxu0 %v3523
      %v3834 = vpop.f32.mrf.mxu0
      %v3835 = vadd.f32 %v3786, %v3834
      %v3836 = vpop.f32.mrf.mxu0
      %v3837 = vadd.f32 %v3788, %v3836
      %3838 = vdwg.mxu0
      %v3839 = vadd.f32 %v2658, %v3800
      %v3840 = vadd.f32 %v2660, %v3802
      %v3841 = vadd.f32 %v2663, %v3805
      %v3842 = vadd.f32 %v2665, %v3807
      %v3843 = vadd.f32 %v2668, %v3810
      %v3844 = vadd.f32 %v2670, %v3812
      %v3845 = vadd.f32 %v2673, %v3815
      %v3846 = vadd.f32 %v2675, %v3817
      %v3847 = vadd.f32 %v2678, %v3820
      %v3848 = vadd.f32 %v2680, %v3822
      %v3849 = vadd.f32 %v2683, %v3825
      %v3850 = vadd.f32 %v2685, %v3827
      %v3851 = vadd.f32 %v2688, %v3830
      %v3852 = vadd.f32 %v2690, %v3832
      %v3853 = vadd.f32 %v2693, %v3835
      %v3854 = vadd.f32 %v2695, %v3837
      %v3856 = vperm.slane %v508, 0
      %v3858 = vadd.f32 %v3839, %v3856
      %v3859 = vadd.f32 %v3840, %v3856
      %v3860 = vadd.f32 %v3841, %v3856
      %v3861 = vadd.f32 %v3842, %v3856
      %v3862 = vadd.f32 %v3843, %v3856
      %v3863 = vadd.f32 %v3844, %v3856
      %v3864 = vadd.f32 %v3845, %v3856
      %v3865 = vadd.f32 %v3846, %v3856
      %v3866 = vadd.f32 %v3847, %v3856
      %v3867 = vadd.f32 %v3848, %v3856
      %v3868 = vadd.f32 %v3849, %v3856
      %v3869 = vadd.f32 %v3850, %v3856
      %v3870 = vadd.f32 %v3851, %v3856
      %v3871 = vadd.f32 %v3852, %v3856
      %v3872 = vadd.f32 %v3853, %v3856
      %v3873 = vadd.f32 %v3854, %v3856
      %v3874 = vmax.f32 %v3858, 0.0
      %v3875 = vmax.f32 %v3859, 0.0
      %v3876 = vmax.f32 %v3860, 0.0
      %v3877 = vmax.f32 %v3861, 0.0
      %v3878 = vmax.f32 %v3862, 0.0
      %v3879 = vmax.f32 %v3863, 0.0
      %v3880 = vmax.f32 %v3864, 0.0
      %v3881 = vmax.f32 %v3865, 0.0
      %v3882 = vmax.f32 %v3866, 0.0
      %v3883 = vmax.f32 %v3867, 0.0
      %v3884 = vmax.f32 %v3868, 0.0
      %v3885 = vmax.f32 %v3869, 0.0
      %v3886 = vmax.f32 %v3870, 0.0
      %v3887 = vmax.f32 %v3871, 0.0
      %v3888 = vmax.f32 %v3872, 0.0
      %v3889 = vmax.f32 %v3873, 0.0
      %v3890 = vpack.c.bf16 %v3875, %v3874
      %v3891 = vpack.c.bf16 %v3877, %v3876
      %v3892 = vpack.c.bf16 %v3879, %v3878
      %v3893 = vpack.c.bf16 %v3881, %v3880
      %v3894 = vpack.c.bf16 %v3883, %v3882
      %v3895 = vpack.c.bf16 %v3885, %v3884
      %v3896 = vpack.c.bf16 %v3887, %v3886
      %v3897 = vpack.c.bf16 %v3889, %v3888
      %v3899 = vperm.slane %v525, 0
      %v3917 = vunpack.c.l.b16 %v509
      %v3918 = vunpack.c.l.b16 %v510
      %v3919 = vunpack.c.l.b16 %v511
      %v3920 = vunpack.c.l.b16 %v512
      %v3921 = vunpack.c.l.b16 %v513
      %v3922 = vunpack.c.l.b16 %v514
      %v3923 = vunpack.c.l.b16 %v515
      %v3924 = vunpack.c.l.b16 %v516
      %v3925 = vunpack.c.l.b16 %v517
      %v3926 = vunpack.c.l.b16 %v518
      %v3927 = vunpack.c.l.b16 %v519
      %v3928 = vunpack.c.l.b16 %v520
      %v3929 = vunpack.c.l.b16 %v521
      %v3930 = vunpack.c.l.b16 %v522
      %v3931 = vunpack.c.l.b16 %v523
      %v3932 = vunpack.c.l.b16 %v524
      %v3933 = vpack.c.b16 %v3918, %v3917
      %v3934 = vpack.c.b16 %v3920, %v3919
      %v3935 = vpack.c.b16 %v3922, %v3921
      %v3936 = vpack.c.b16 %v3924, %v3923
      %v3937 = vpack.c.b16 %v3926, %v3925
      %v3938 = vpack.c.b16 %v3928, %v3927
      %v3939 = vpack.c.b16 %v3930, %v3929
      %v3940 = vpack.c.b16 %v3932, %v3931
      %3949 = vmatpush.bf16.msra.mxu0 %v3940
      %3950 = vmatpush.bf16.msra.mxu0 %v3939
      %3951 = vmatpush.bf16.msra.mxu0 %v3938
      %3952 = vmatpush.bf16.msra.mxu0 %v3937
      %3953 = vmatpush.bf16.msra.mxu0 %v3936
      %3954 = vmatpush.bf16.msra.mxu0 %v3935
      %3955 = vmatpush.bf16.msra.mxu0 %v3934
      %3956 = vmatpush.bf16.msra.mxu0 %v3933
      %3957 = vmatmul.bf16.gmra.mxu0 %v3890
      %v3958 = vpop.f32.mrf.mxu0
      %v3959 = vadd.f32 %v3899, %v3958
      %v3960 = vpop.f32.mrf.mxu0
      %v3961 = vadd.f32 %v3899, %v3960
      %3962 = vmatmul.bf16.gmra.mxu0 %v3891
      %v3963 = vpop.f32.mrf.mxu0
      %v3964 = vadd.f32 %v3899, %v3963
      %v3965 = vpop.f32.mrf.mxu0
      %v3966 = vadd.f32 %v3899, %v3965
      %3967 = vmatmul.bf16.gmra.mxu0 %v3892
      %v3968 = vpop.f32.mrf.mxu0
      %v3969 = vadd.f32 %v3899, %v3968
      %v3970 = vpop.f32.mrf.mxu0
      %v3971 = vadd.f32 %v3899, %v3970
      %3972 = vmatmul.bf16.gmra.mxu0 %v3893
      %v3973 = vpop.f32.mrf.mxu0
      %v3974 = vadd.f32 %v3899, %v3973
      %v3975 = vpop.f32.mrf.mxu0
      %v3976 = vadd.f32 %v3899, %v3975
      %3977 = vmatmul.bf16.gmra.mxu0 %v3894
      %v3978 = vpop.f32.mrf.mxu0
      %v3979 = vadd.f32 %v3899, %v3978
      %v3980 = vpop.f32.mrf.mxu0
      %v3981 = vadd.f32 %v3899, %v3980
      %3982 = vmatmul.bf16.gmra.mxu0 %v3895
      %v3983 = vpop.f32.mrf.mxu0
      %v3984 = vadd.f32 %v3899, %v3983
      %v3985 = vpop.f32.mrf.mxu0
      %v3986 = vadd.f32 %v3899, %v3985
      %3987 = vmatmul.bf16.gmra.mxu0 %v3896
      %v3988 = vpop.f32.mrf.mxu0
      %v3989 = vadd.f32 %v3899, %v3988
      %v3990 = vpop.f32.mrf.mxu0
      %v3991 = vadd.f32 %v3899, %v3990
      %3992 = vmatmul.bf16.gmra.mxu0 %v3897
      %v3993 = vpop.f32.mrf.mxu0
      %v3994 = vadd.f32 %v3899, %v3993
      %v3995 = vpop.f32.mrf.mxu0
      %v3996 = vadd.f32 %v3899, %v3995
      %3997 = vdwg.mxu0
      %v3998 = vmax.f32 %v3959, 0.0
      %v3999 = vmax.f32 %v3961, 0.0
      %v4000 = vmax.f32 %v3964, 0.0
      %v4001 = vmax.f32 %v3966, 0.0
      %v4002 = vmax.f32 %v3969, 0.0
      %v4003 = vmax.f32 %v3971, 0.0
      %v4004 = vmax.f32 %v3974, 0.0
      %v4005 = vmax.f32 %v3976, 0.0
      %v4006 = vmax.f32 %v3979, 0.0
      %v4007 = vmax.f32 %v3981, 0.0
      %v4008 = vmax.f32 %v3984, 0.0
      %v4009 = vmax.f32 %v3986, 0.0
      %v4010 = vmax.f32 %v3989, 0.0
      %v4011 = vmax.f32 %v3991, 0.0
      %v4012 = vmax.f32 %v3994, 0.0
      %v4013 = vmax.f32 %v3996, 0.0
      %v4014 = vunpack.c.l.bf16 %v530
      %v4015 = vunpack.c.l.bf16 %v531
      %v4016 = vunpack.c.l.bf16 %v532
      %v4017 = vunpack.c.l.bf16 %v533
      %v4018 = vunpack.c.l.bf16 %v534
      %v4019 = vunpack.c.l.bf16 %v535
      %v4020 = vunpack.c.l.bf16 %v536
      %v4021 = vunpack.c.l.bf16 %v537
      %v4022 = vunpack.c.l.bf16 %v538
      %v4023 = vunpack.c.l.bf16 %v539
      %v4024 = vunpack.c.l.bf16 %v540
      %v4025 = vunpack.c.l.bf16 %v541
      %v4026 = vunpack.c.l.bf16 %v542
      %v4027 = vunpack.c.l.bf16 %v543
      %v4028 = vunpack.c.l.bf16 %v544
      %v4029 = vunpack.c.l.bf16 %v545
      %v4030 = vadd.f32 %v3998, %v4014
      %v4031 = vadd.f32 %v3999, %v4015
      %v4032 = vadd.f32 %v4000, %v4016
      %v4033 = vadd.f32 %v4001, %v4017
      %v4034 = vadd.f32 %v4002, %v4018
      %v4035 = vadd.f32 %v4003, %v4019
      %v4036 = vadd.f32 %v4004, %v4020
      %v4037 = vadd.f32 %v4005, %v4021
      %v4038 = vadd.f32 %v4006, %v4022
      %v4039 = vadd.f32 %v4007, %v4023
      %v4040 = vadd.f32 %v4008, %v4024
      %v4041 = vadd.f32 %v4009, %v4025
      %v4042 = vadd.f32 %v4010, %v4026
      %v4043 = vadd.f32 %v4011, %v4027
      %v4044 = vadd.f32 %v4012, %v4028
      %v4045 = vadd.f32 %v4013, %v4029
      %4046 = vst.msk [vmem:[%s498] sm:$0xff] %vm601, %v4030
      %4047 = vst.msk [vmem:[%s498 + $0x8] sm:$0xff] %vm601, %v4031
      %4048 = vst.msk [vmem:[%s498 + $0x10] sm:$0xff] %vm601, %v4032
      %4049 = vst.msk [vmem:[%s498 + $0x18] sm:$0xff] %vm601, %v4033
      %4050 = vst.msk [vmem:[%s498 + $0x20] sm:$0xff] %vm601, %v4034
      %4051 = vst.msk [vmem:[%s498 + $0x28] sm:$0xff] %vm601, %v4035
      %4052 = vst.msk [vmem:[%s498 + $0x30] sm:$0xff] %vm601, %v4036
      %4053 = vst.msk [vmem:[%s498 + $0x38] sm:$0xff] %vm601, %v4037
      %4054 = vst.msk [vmem:[%s498 + $0x40] sm:$0xff] %vm601, %v4038
      %4055 = vst.msk [vmem:[%s498 + $0x48] sm:$0xff] %vm601, %v4039
      %4056 = vst.msk [vmem:[%s498 + $0x50] sm:$0xff] %vm601, %v4040
      %4057 = vst.msk [vmem:[%s498 + $0x58] sm:$0xff] %vm601, %v4041
      %4058 = vst.msk [vmem:[%s498 + $0x60] sm:$0xff] %vm601, %v4042
      %4059 = vst.msk [vmem:[%s498 + $0x68] sm:$0xff] %vm601, %v4043
      %4060 = vst.msk [vmem:[%s498 + $0x70] sm:$0xff] %vm601, %v4044
      %4061 = vst.msk [vmem:[%s498 + $0x78] sm:$0xff] %vm601, %v4045
      %s4062 = smul.u32 16, %s25
      %p4063 = scmp.lt.s32.totalorder %s24, 1
      %s4064 = scalar_select %p4063, %s24, 1
      %p4065 = scmp.lt.s32.totalorder %s4062, 31
      %s4066 = scalar_select %p4065, %s4062, 31
      %s4067 = smul.addr %s4064, 32
      %s4068 = sadd.s32 %s4066, %s4067
      %s4069 = smul.addr %s4068, 8
      %s4070 = scalar_lea.vmem %s9, %s4069
      // Predicated region
      $region57: #{tpu_custom_call.1} parent=55 // pred_check
        %p4071 = pneg %p278
      $region58: #{tpu_custom_call.1} parent=55 // pred_check_branch
        %4073 = sbr.rel (%p4071) target = $region60
      $region59: #{tpu_custom_call.1} parent=55 // pred_region
        %s4074 = smul.u32 16, %s25
      $region60: #{tpu_custom_call.1} parent=55 // pred_fallthru
        _
    $region56: #{tpu_custom_call.1} parent=5 // pred_fallthru
      _
    %p4075 = scmp.le.s32.totalorder 2, %s15
    // Predicated region
    $region61: #{tpu_custom_call.1} parent=5 // pred_check
      %p4076 = pneg %p4075
    $region62: #{tpu_custom_call.1} parent=5 // pred_check_branch
      %4078 = sbr.rel (%p4076) target = $region64
    $region63: #{tpu_custom_call.1} parent=5 // pred_region
      %s4079 = ssub.s32 %s15, 2
      // Predicated region
      $region65: #{tpu_custom_call.1} parent=63 // pred_check
        %p4080 = pneg %p284
      $region66: #{tpu_custom_call.1} parent=63 // pred_check_branch
        %4082 = sbr.rel (%p4080) target = $region68
      $region67: #{tpu_custom_call.1} parent=63 // pred_region
        %s4083 = smul.u32 16, %s27
        %p4084 = scmp.lt.s32.totalorder %s26, 1
        %s4085 = scalar_select %p4084, %s26, 1
        %p4086 = scmp.lt.s32.totalorder %s4083, 31
        %s4087 = scalar_select %p4086, %s4083, 31
        %s4088 = smul.addr %s4085, 32
        %s4089 = sadd.s32 %s4087, %s4088
        %s4090 = smul.addr %s4089, 8
        %s4091 = scalar_lea.vmem %s9, %s4090
      $region68: #{tpu_custom_call.1} parent=63 // pred_fallthru
        _
    $region64: #{tpu_custom_call.1} parent=5 // pred_fallthru
      _
  $region6: #{tpu_custom_call.1} parent=0 // loop_footer
    %s19 = sadd.s32 1, %s15
  $region7: #{tpu_custom_call.1} parent=0 // loop_footer_branch
    %14 = sbr.rel target = $region3
  $region8: #{tpu_custom_call.1} parent=0 // loop_exit
    _

</llo_original>
